<compile_context>
chip_gen: v7x
topology: tpu7x:2x2x1
jax: 0.10.0
libtpu: 0.0.40
codegen_flags: <defaults>
</compile_context>

<pallas_src>
import jax
import jax.numpy as jnp
from jax.experimental import pallas as pl
from jax.experimental.pallas import tpu as pltpu
import numpy as np

H = 64          # hidden size (fixed by the module)
E = 64          # embedding dim padded from 50 -> 64 (zero pad, exact semantics)
EMB_REAL = 50   # real embedding width
SUB = 8         # f32 sublane tile height


def attention_two_way_kernel(
    emb1_ref, emb2_ref,                 # (s*bp, E) time-major-flat padded embeddings
    wih1_ref, whh1_ref, b1_ref,         # LSTMCell params: (E,4H), (H,4H), (1,4H)
    wih2_ref, whh2_ref, b2_ref,         # LSTM   params: (E,4H), (H,4H), (1,4H)
    wyh_ref,                            # (2H, H)  fused [wy; wh]
    w_ref,                              # (1, H)
    wpx_ref,                            # (2H, H)  fused [wp; wx]
    sel1_ref, sel2_ref,                 # (bp, s*bp) gather-selection matrices
    valid_ref,                          # (bp, s*bp) softmax validity mask
    out_ref,                            # (bp, H) output
    hc_seq_ref,                         # scratch (s*bp, 2H): sentence1 [h | c]
    hc2_seq_ref,                        # scratch (s*bp, 2H): sentence2 [h | c]
):
    sb = emb1_ref.shape[0]
    bp = out_ref.shape[0]
    s = sb // bp

    whh1 = whh1_ref[...]
    whh2 = whh2_ref[...]

    # ---- Hoisted input projections (one well-shaped MXU matmul per sentence;
    #      bias broadcast happens exactly once, not per step) ----
    x1 = jnp.dot(emb1_ref[...], wih1_ref[...],
                 preferred_element_type=jnp.float32) + b1_ref[...]      # (s*bp, 4H)
    x2 = jnp.dot(emb2_ref[...], wih2_ref[...],
                 preferred_element_type=jnp.float32) + b2_ref[...]      # (s*bp, 4H)

    def gates(pre):                     # gate order i, f, g, o (PyTorch)
        i = jax.nn.sigmoid(pre[:, 0 * H:1 * H])
        f = jax.nn.sigmoid(pre[:, 1 * H:2 * H])
        g = jnp.tanh(pre[:, 2 * H:3 * H])
        o = jax.nn.sigmoid(pre[:, 3 * H:4 * H])
        return i, f, g, o

    # ---- Phase A: LSTMCell over sentence1 (fully unrolled; only h@whh on the
    #      serial path).  [h|c] stashed per step as one 128-lane store. ----
    h = jnp.zeros((bp, H), jnp.float32)
    c = jnp.zeros((bp, H), jnp.float32)
    for t in range(s):                                  # static s -> full unroll
        pre = x1[t * bp:(t + 1) * bp, :] + jnp.dot(
            h, whh1, preferred_element_type=jnp.float32)
        i, f, g, o = gates(pre)
        c = f * c + i * g
        h = o * jnp.tanh(c)
        hc_seq_ref[t * bp:(t + 1) * bp, :] = jnp.concatenate([h, c], axis=-1)

    hc_seq = hc_seq_ref[...]                            # (s*bp, 2H)
    h_seq = hc_seq[:, :H]                               # (s*bp, H)
    gather_hc = jnp.dot(sel1_ref[...], hc_seq,
                        preferred_element_type=jnp.float32)              # (bp, 2H)
    h2 = gather_hc[:, :H]
    c2 = gather_hc[:, H:]

    # ---- Phase B: LSTM over sentence2, init = gathered (h, c) ----
    for t in range(s):
        pre = x2[t * bp:(t + 1) * bp, :] + jnp.dot(
            h2, whh2, preferred_element_type=jnp.float32)
        i, f, g, o = gates(pre)
        c2 = f * c2 + i * g
        h2 = o * jnp.tanh(c2)
        hc2_seq_ref[t * bp:(t + 1) * bp, :] = jnp.concatenate([h2, c2], axis=-1)

    out_n = jnp.dot(sel2_ref[...], hc2_seq_ref[...],
                    preferred_element_type=jnp.float32)[:, :H]           # (bp, H)

    # ---- Phase C: vectorized attention with fused K=128 epilogue matmuls ----
    out_n_rep = jnp.tile(out_n, (s, 1))                                  # (s*bp, H)
    m_in = jnp.concatenate([h_seq, out_n_rep], axis=-1)                  # (s*bp, 2H)
    M = jnp.tanh(jnp.dot(m_in, wyh_ref[...],
                         preferred_element_type=jnp.float32))            # (s*bp, H)
    # wtm as a lane-dense row: (1,H) . (s*bp,H)^T -> (1, s*bp)
    wtm_row = jax.lax.dot_general(
        w_ref[...], M, (((1,), (1,)), ((), ())),
        preferred_element_type=jnp.float32)                              # (1, s*bp)

    valid = valid_ref[...]                                               # (bp, s*bp)
    scores = valid * wtm_row - (1.0 - valid) * 1e12                      # (bp, s*bp)
    mx = jnp.max(scores, axis=-1, keepdims=True)
    ex = jnp.exp(scores - mx)
    soft = ex * pl.reciprocal(jnp.sum(ex, axis=-1, keepdims=True), approx=True)
    r = jnp.dot(soft, h_seq, preferred_element_type=jnp.float32)         # (bp, H)

    fused_in = jnp.concatenate([r, out_n], axis=-1)                      # (bp, 2H)
    out_ref[...] = jnp.tanh(
        jnp.dot(fused_in, wpx_ref[...], preferred_element_type=jnp.float32))


def attention_two_way_pallas(sentence1, sentence2, s1_idx, s2_idx, s1_mask, P):
    """sentence1/2: (b, s) int token ids; s1_idx/s2_idx: (b,) gather step indices
    (PyTorch's s1_len/s2_len gather tensors collapsed to one index per batch);
    s1_mask: (b, s) float validity mask (PyTorch's s1_s)."""
    b, s = sentence1.shape
    bp = max(SUB, ((b + SUB - 1) // SUB) * SUB)     # pad batch to sublane tile
    pad = bp - b

    def embed_flat(tok):
        e = P["emb"][tok].astype(jnp.float32)                       # (b, s, 50)
        e = jnp.pad(e, ((0, pad), (0, 0), (0, E - EMB_REAL)))       # (bp, s, 64)
        return jnp.transpose(e, (1, 0, 2)).reshape(s * bp, E)       # row = t*bp + j

    emb1 = embed_flat(sentence1)
    emb2 = embed_flat(sentence2)

    def prep_lstm(wih, whh, bih, bhh):
        wih_t = jnp.zeros((E, 4 * H), jnp.float32).at[:wih.shape[1], :].set(
            wih.T.astype(jnp.float32))
        return (wih_t, whh.T.astype(jnp.float32),
                (bih + bhh).astype(jnp.float32).reshape(1, 4 * H))

    wih1, whh1, b1 = prep_lstm(P["wih1"], P["whh1"], P["bih1"], P["bhh1"])
    wih2, whh2, b2 = prep_lstm(P["wih2"], P["whh2"], P["bih2"], P["bhh2"])

    # Padded scalar indices / masks (padded rows: index 0, mask only step 0 ->
    # finite softmax; their outputs are discarded below).
    s1_idx_p = jnp.concatenate([s1_idx.astype(jnp.int32),
                                jnp.zeros((pad,), jnp.int32)])
    s2_idx_p = jnp.concatenate([s2_idx.astype(jnp.int32),
                                jnp.zeros((pad,), jnp.int32)])
    mask_pad = jnp.zeros((pad, s), jnp.float32).at[:, 0].set(1.0)
    s1_mask_p = jnp.concatenate([s1_mask.astype(jnp.float32), mask_pad], axis=0)

    # Selection / mask matrices in time-major-flat column order col = t*bp + j.
    eye_bp = jnp.eye(bp, dtype=jnp.float32)
    oh1 = jax.nn.one_hot(s1_idx_p, s, dtype=jnp.float32)            # (bp, s)
    oh2 = jax.nn.one_hot(s2_idx_p, s, dtype=jnp.float32)
    sel1 = (oh1[:, :, None] * eye_bp[:, None, :]).reshape(bp, s * bp)
    sel2 = (oh2[:, :, None] * eye_bp[:, None, :]).reshape(bp, s * bp)
    valid = (s1_mask_p[:, :, None] * eye_bp[:, None, :]).reshape(bp, s * bp)

    # Fused epilogue weights (K = 128 lane-dense contractions in-kernel).
    wyh = jnp.concatenate([P["wy"], P["wh"]], axis=0).astype(jnp.float32)  # (2H, H)
    wpx = jnp.concatenate([P["wp"], P["wx"]], axis=0).astype(jnp.float32)  # (2H, H)

    inputs = [
        emb1, emb2,
        wih1, whh1, b1,
        wih2, whh2, b2,
        wyh, P["w"].reshape(1, H).astype(jnp.float32), wpx,
        sel1, sel2, valid,
    ]
    vmem_specs = [pl.BlockSpec(memory_space=pltpu.MemorySpace.VMEM) for _ in inputs]

    out_p = pl.pallas_call(
        attention_two_way_kernel,
        out_shape=jax.ShapeDtypeStruct((bp, H), jnp.float32),
        in_specs=vmem_specs,
        out_specs=pl.BlockSpec(memory_space=pltpu.MemorySpace.VMEM),
        scratch_shapes=[
            pltpu.VMEM((s * bp, 2 * H), jnp.float32),   # sentence1 [h | c]
            pltpu.VMEM((s * bp, 2 * H), jnp.float32),   # sentence2 [h | c]
        ],
    )(*inputs)
    return out_p[:b]


def reference_forward(sentence1, sentence2, s1_idx, s2_idx, s1_mask, P):
    """Pure-JAX replica of the PyTorch forward (for correctness check)."""
    emb1 = P["emb"][sentence1]
    emb2 = P["emb"][sentence2]
    b, s, _ = emb1.shape

    def cell(x, h, c, wih, whh, bih, bhh):
        g = x @ wih.T + bih + h @ whh.T + bhh
        i, f, gg, o = jnp.split(g, 4, axis=-1)
        c = jax.nn.sigmoid(f) * c + jax.nn.sigmoid(i) * jnp.tanh(gg)
        h = jax.nn.sigmoid(o) * jnp.tanh(c)
        return h, c

    h = jnp.zeros((b, H)); c = jnp.zeros((b, H))
    hs, cs = [], []
    for t in range(s):
        h, c = cell(emb1[:, t], h, c, P["wih1"], P["whh1"], P["bih1"], P["bhh1"])
        hs.append(h); cs.append(c)
    hs = jnp.stack(hs, axis=1)          # (b, s, H)
    cs = jnp.stack(cs, axis=1)
    gh = hs[jnp.arange(b), s1_idx]
    gc = cs[jnp.arange(b), s1_idx]

    h2, c2 = gh, gc
    outs = []
    for t in range(s):
        h2, c2 = cell(emb2[:, t], h2, c2, P["wih2"], P["whh2"], P["bih2"], P["bhh2"])
        outs.append(h2)
    outs = jnp.stack(outs, axis=1)
    out = outs[jnp.arange(b), s2_idx]   # (b, H)

    wyy = hs @ P["wy"]
    whhn = out @ P["wh"]
    M = jnp.tanh(wyy + whhn[:, None, :])
    wtm = M @ P["w"]                                    # (b, s)
    masked = s1_mask * wtm - (1.0 - s1_mask) * 1e12
    soft = jax.nn.softmax(masked, axis=1)
    r = jnp.sum(soft[:, :, None] * hs, axis=1)
    return jnp.tanh(r @ P["wp"] + out @ P["wx"])


if __name__ == "__main__":
    b, s = 2, 8
    vect_len = 20
    vocab = vect_len + 4

    key = jax.random.PRNGKey(0)
    ks = jax.random.split(key, 18)

    def rn(k, shape, scale=0.1):
        return (scale * jax.random.normal(k, shape)).astype(jnp.float32)

    P = {
        "emb":  rn(ks[0], (vocab, EMB_REAL), 1.0),
        "wih1": rn(ks[1], (4 * H, EMB_REAL)), "whh1": rn(ks[2], (4 * H, H)),
        "bih1": rn(ks[3], (4 * H,)),          "bhh1": rn(ks[4], (4 * H,)),
        "wih2": rn(ks[5], (4 * H, EMB_REAL)), "whh2": rn(ks[6], (4 * H, H)),
        "bih2": rn(ks[7], (4 * H,)),          "bhh2": rn(ks[8], (4 * H,)),
        "wy":   rn(ks[9],  (H, H)), "wh": rn(ks[10], (H, H)),
        "w":    rn(ks[11], (H,)),
        "wp":   rn(ks[12], (H, H)), "wx": rn(ks[13], (H, H)),
    }

    sentence1 = jax.random.randint(ks[14], (b, s), 0, vocab, dtype=jnp.int32)
    sentence2 = jax.random.randint(ks[15], (b, s), 0, vocab, dtype=jnp.int32)
    s1_idx = jnp.array([7, 5], dtype=jnp.int32)   # gather index per batch (== s1_len)
    s2_idx = jnp.array([6, 7], dtype=jnp.int32)   # gather index per batch (== s2_len)
    s1_mask = (jnp.arange(s)[None, :] <= s1_idx[:, None]).astype(jnp.float32)  # s1_s

    out = attention_two_way_pallas(sentence1, sentence2, s1_idx, s2_idx, s1_mask, P)
    out = jax.block_until_ready(out)

    ref = reference_forward(sentence1, sentence2, s1_idx, s2_idx, s1_mask, P)

    assert out.shape == (b, H)
    assert bool(jnp.all(jnp.isfinite(out)))
    np.testing.assert_allclose(np.asarray(out), np.asarray(ref), rtol=5e-2, atol=5e-2)
    print("KERNEL_OK")
</pallas_src>

<mosaic_0001>
module attributes {stable_mosaic.version = 11 : i64} {
  func.func @attention_two_way_kernel(%arg0: memref<64x64xf32, #tpu.memory_space<vmem>>, %arg1: memref<64x64xf32, #tpu.memory_space<vmem>>, %arg2: memref<64x256xf32, #tpu.memory_space<vmem>>, %arg3: memref<64x256xf32, #tpu.memory_space<vmem>>, %arg4: memref<1x256xf32, #tpu.memory_space<vmem>>, %arg5: memref<64x256xf32, #tpu.memory_space<vmem>>, %arg6: memref<64x256xf32, #tpu.memory_space<vmem>>, %arg7: memref<1x256xf32, #tpu.memory_space<vmem>>, %arg8: memref<128x64xf32, #tpu.memory_space<vmem>>, %arg9: memref<1x64xf32, #tpu.memory_space<vmem>>, %arg10: memref<128x64xf32, #tpu.memory_space<vmem>>, %arg11: memref<8x64xf32, #tpu.memory_space<vmem>>, %arg12: memref<8x64xf32, #tpu.memory_space<vmem>>, %arg13: memref<8x64xf32, #tpu.memory_space<vmem>>, %arg14: memref<8x64xf32, #tpu.memory_space<vmem>>, %arg15: memref<64x128xf32, #tpu.memory_space<vmem>>, %arg16: memref<64x128xf32, #tpu.memory_space<vmem>>) attributes {dimension_semantics = [], scalar_prefetch = 0 : i64, scratch_operands = 2 : i64, tpu.core_type = #tpu.core_type<tc>} {
    %c0 = arith.constant 0 : index
    %c0_0 = arith.constant 0 : index
    %0 = vector.load %arg3[%c0, %c0_0] : memref<64x256xf32, #tpu.memory_space<vmem>>, vector<64x256xf32>
    %c0_1 = arith.constant 0 : index
    %c0_2 = arith.constant 0 : index
    %1 = vector.load %arg6[%c0_1, %c0_2] : memref<64x256xf32, #tpu.memory_space<vmem>>, vector<64x256xf32>
    %c0_3 = arith.constant 0 : index
    %c0_4 = arith.constant 0 : index
    %2 = vector.load %arg0[%c0_3, %c0_4] : memref<64x64xf32, #tpu.memory_space<vmem>>, vector<64x64xf32>
    %c0_5 = arith.constant 0 : index
    %c0_6 = arith.constant 0 : index
    %3 = vector.load %arg2[%c0_5, %c0_6] : memref<64x256xf32, #tpu.memory_space<vmem>>, vector<64x256xf32>
    %cst = arith.constant dense<0.000000e+00> : vector<64x256xf32>
    %4 = tpu.matmul %2, %3, %cst {dimension_numbers = #tpu.dot_dimension_numbers<[1], [0], [0], [1], [0, 0, 1, 1], [], []>} : vector<64x64xf32>, vector<64x256xf32>, vector<64x256xf32> -> vector<64x256xf32>
    %c0_7 = arith.constant 0 : index
    %c0_8 = arith.constant 0 : index
    %5 = vector.load %arg4[%c0_7, %c0_8] : memref<1x256xf32, #tpu.memory_space<vmem>>, vector<1x256xf32>
    %6 = vector.broadcast %5 : vector<1x256xf32> to vector<64x256xf32>
    %7 = arith.addf %4, %6 : vector<64x256xf32>
    %c0_9 = arith.constant 0 : index
    %c0_10 = arith.constant 0 : index
    %8 = vector.load %arg1[%c0_9, %c0_10] : memref<64x64xf32, #tpu.memory_space<vmem>>, vector<64x64xf32>
    %c0_11 = arith.constant 0 : index
    %c0_12 = arith.constant 0 : index
    %9 = vector.load %arg5[%c0_11, %c0_12] : memref<64x256xf32, #tpu.memory_space<vmem>>, vector<64x256xf32>
    %cst_13 = arith.constant dense<0.000000e+00> : vector<64x256xf32>
    %10 = tpu.matmul %8, %9, %cst_13 {dimension_numbers = #tpu.dot_dimension_numbers<[1], [0], [0], [1], [0, 0, 1, 1], [], []>} : vector<64x64xf32>, vector<64x256xf32>, vector<64x256xf32> -> vector<64x256xf32>
    %c0_14 = arith.constant 0 : index
    %c0_15 = arith.constant 0 : index
    %11 = vector.load %arg7[%c0_14, %c0_15] : memref<1x256xf32, #tpu.memory_space<vmem>>, vector<1x256xf32>
    %12 = vector.broadcast %11 : vector<1x256xf32> to vector<64x256xf32>
    %13 = arith.addf %10, %12 : vector<64x256xf32>
    %cst_16 = arith.constant 0.000000e+00 : f32
    %14 = vector.broadcast %cst_16 : f32 to vector<8x64xf32>
    %cst_17 = arith.constant 0.000000e+00 : f32
    %15 = vector.broadcast %cst_17 : f32 to vector<8x64xf32>
    %16 = vector.extract_strided_slice %7 {offsets = [0, 0], sizes = [8, 256], strides = [1, 1]} : vector<64x256xf32> to vector<8x256xf32>
    %cst_18 = arith.constant dense<0.000000e+00> : vector<8x256xf32>
    %17 = tpu.matmul %14, %0, %cst_18 {dimension_numbers = #tpu.dot_dimension_numbers<[1], [0], [0], [1], [0, 0, 1, 1], [], []>} : vector<8x64xf32>, vector<64x256xf32>, vector<8x256xf32> -> vector<8x256xf32>
    %18 = arith.addf %16, %17 : vector<8x256xf32>
    %19 = vector.extract_strided_slice %18 {offsets = [0, 0], sizes = [8, 64], strides = [1, 1]} : vector<8x256xf32> to vector<8x64xf32>
    %20 = arith.negf %19 : vector<8x64xf32>
    %21 = math.exp %20 : vector<8x64xf32>
    %cst_19 = arith.constant 1.000000e+00 : f32
    %22 = vector.broadcast %cst_19 : f32 to vector<8x64xf32>
    %23 = arith.addf %22, %21 : vector<8x64xf32>
    %24 = arith.divf %22, %23 : vector<8x64xf32>
    %25 = vector.extract_strided_slice %18 {offsets = [0, 64], sizes = [8, 64], strides = [1, 1]} : vector<8x256xf32> to vector<8x64xf32>
    %26 = arith.negf %25 : vector<8x64xf32>
    %27 = math.exp %26 : vector<8x64xf32>
    %cst_20 = arith.constant 1.000000e+00 : f32
    %28 = vector.broadcast %cst_20 : f32 to vector<8x64xf32>
    %29 = arith.addf %28, %27 : vector<8x64xf32>
    %30 = arith.divf %28, %29 : vector<8x64xf32>
    %31 = vector.extract_strided_slice %18 {offsets = [0, 128], sizes = [8, 64], strides = [1, 1]} : vector<8x256xf32> to vector<8x64xf32>
    %32 = math.tanh %31 : vector<8x64xf32>
    %33 = vector.extract_strided_slice %18 {offsets = [0, 192], sizes = [8, 64], strides = [1, 1]} : vector<8x256xf32> to vector<8x64xf32>
    %34 = arith.negf %33 : vector<8x64xf32>
    %35 = math.exp %34 : vector<8x64xf32>
    %cst_21 = arith.constant 1.000000e+00 : f32
    %36 = vector.broadcast %cst_21 : f32 to vector<8x64xf32>
    %37 = arith.addf %36, %35 : vector<8x64xf32>
    %38 = arith.divf %36, %37 : vector<8x64xf32>
    %39 = arith.mulf %30, %15 : vector<8x64xf32>
    %40 = arith.mulf %24, %32 : vector<8x64xf32>
    %41 = arith.addf %39, %40 : vector<8x64xf32>
    %42 = math.tanh %41 : vector<8x64xf32>
    %43 = arith.mulf %38, %42 : vector<8x64xf32>
    %44 = tpu.concatenate %43, %41 in 1 : vector<8x64xf32>, vector<8x64xf32> -> vector<8x128xf32>
    %c0_22 = arith.constant 0 : index
    %c0_23 = arith.constant 0 : index
    %45 = vector.load %arg15[%c0_22, %c0_23] : memref<64x128xf32, #tpu.memory_space<vmem>>, vector<8x128xf32>
    tpu.vector_store %arg15[%c0_22, %c0_23], %44 {strides = array<i32>} : memref<64x128xf32, #tpu.memory_space<vmem>>, vector<8x128xf32>,
    %46 = vector.extract_strided_slice %7 {offsets = [8, 0], sizes = [8, 256], strides = [1, 1]} : vector<64x256xf32> to vector<8x256xf32>
    %cst_24 = arith.constant dense<0.000000e+00> : vector<8x256xf32>
    %47 = tpu.matmul %43, %0, %cst_24 {dimension_numbers = #tpu.dot_dimension_numbers<[1], [0], [0], [1], [0, 0, 1, 1], [], []>} : vector<8x64xf32>, vector<64x256xf32>, vector<8x256xf32> -> vector<8x256xf32>
    %48 = arith.addf %46, %47 : vector<8x256xf32>
    %49 = vector.extract_strided_slice %48 {offsets = [0, 0], sizes = [8, 64], strides = [1, 1]} : vector<8x256xf32> to vector<8x64xf32>
    %50 = arith.negf %49 : vector<8x64xf32>
    %51 = math.exp %50 : vector<8x64xf32>
    %cst_25 = arith.constant 1.000000e+00 : f32
    %52 = vector.broadcast %cst_25 : f32 to vector<8x64xf32>
    %53 = arith.addf %52, %51 : vector<8x64xf32>
    %54 = arith.divf %52, %53 : vector<8x64xf32>
    %55 = vector.extract_strided_slice %48 {offsets = [0, 64], sizes = [8, 64], strides = [1, 1]} : vector<8x256xf32> to vector<8x64xf32>
    %56 = arith.negf %55 : vector<8x64xf32>
    %57 = math.exp %56 : vector<8x64xf32>
    %cst_26 = arith.constant 1.000000e+00 : f32
    %58 = vector.broadcast %cst_26 : f32 to vector<8x64xf32>
    %59 = arith.addf %58, %57 : vector<8x64xf32>
    %60 = arith.divf %58, %59 : vector<8x64xf32>
    %61 = vector.extract_strided_slice %48 {offsets = [0, 128], sizes = [8, 64], strides = [1, 1]} : vector<8x256xf32> to vector<8x64xf32>
    %62 = math.tanh %61 : vector<8x64xf32>
    %63 = vector.extract_strided_slice %48 {offsets = [0, 192], sizes = [8, 64], strides = [1, 1]} : vector<8x256xf32> to vector<8x64xf32>
    %64 = arith.negf %63 : vector<8x64xf32>
    %65 = math.exp %64 : vector<8x64xf32>
    %cst_27 = arith.constant 1.000000e+00 : f32
    %66 = vector.broadcast %cst_27 : f32 to vector<8x64xf32>
    %67 = arith.addf %66, %65 : vector<8x64xf32>
    %68 = arith.divf %66, %67 : vector<8x64xf32>
    %69 = arith.mulf %60, %41 : vector<8x64xf32>
    %70 = arith.mulf %54, %62 : vector<8x64xf32>
    %71 = arith.addf %69, %70 : vector<8x64xf32>
    %72 = math.tanh %71 : vector<8x64xf32>
    %73 = arith.mulf %68, %72 : vector<8x64xf32>
    %74 = tpu.concatenate %73, %71 in 1 : vector<8x64xf32>, vector<8x64xf32> -> vector<8x128xf32>
    %c8 = arith.constant 8 : index
    %c0_28 = arith.constant 0 : index
    %75 = vector.load %arg15[%c8, %c0_28] : memref<64x128xf32, #tpu.memory_space<vmem>>, vector<8x128xf32>
    tpu.vector_store %arg15[%c8, %c0_28], %74 {strides = array<i32>} : memref<64x128xf32, #tpu.memory_space<vmem>>, vector<8x128xf32>,
    %76 = vector.extract_strided_slice %7 {offsets = [16, 0], sizes = [8, 256], strides = [1, 1]} : vector<64x256xf32> to vector<8x256xf32>
    %cst_29 = arith.constant dense<0.000000e+00> : vector<8x256xf32>
    %77 = tpu.matmul %73, %0, %cst_29 {dimension_numbers = #tpu.dot_dimension_numbers<[1], [0], [0], [1], [0, 0, 1, 1], [], []>} : vector<8x64xf32>, vector<64x256xf32>, vector<8x256xf32> -> vector<8x256xf32>
    %78 = arith.addf %76, %77 : vector<8x256xf32>
    %79 = vector.extract_strided_slice %78 {offsets = [0, 0], sizes = [8, 64], strides = [1, 1]} : vector<8x256xf32> to vector<8x64xf32>
    %80 = arith.negf %79 : vector<8x64xf32>
    %81 = math.exp %80 : vector<8x64xf32>
    %cst_30 = arith.constant 1.000000e+00 : f32
    %82 = vector.broadcast %cst_30 : f32 to vector<8x64xf32>
    %83 = arith.addf %82, %81 : vector<8x64xf32>
    %84 = arith.divf %82, %83 : vector<8x64xf32>
    %85 = vector.extract_strided_slice %78 {offsets = [0, 64], sizes = [8, 64], strides = [1, 1]} : vector<8x256xf32> to vector<8x64xf32>
    %86 = arith.negf %85 : vector<8x64xf32>
    %87 = math.exp %86 : vector<8x64xf32>
    %cst_31 = arith.constant 1.000000e+00 : f32
    %88 = vector.broadcast %cst_31 : f32 to vector<8x64xf32>
    %89 = arith.addf %88, %87 : vector<8x64xf32>
    %90 = arith.divf %88, %89 : vector<8x64xf32>
    %91 = vector.extract_strided_slice %78 {offsets = [0, 128], sizes = [8, 64], strides = [1, 1]} : vector<8x256xf32> to vector<8x64xf32>
    %92 = math.tanh %91 : vector<8x64xf32>
    %93 = vector.extract_strided_slice %78 {offsets = [0, 192], sizes = [8, 64], strides = [1, 1]} : vector<8x256xf32> to vector<8x64xf32>
    %94 = arith.negf %93 : vector<8x64xf32>
    %95 = math.exp %94 : vector<8x64xf32>
    %cst_32 = arith.constant 1.000000e+00 : f32
    %96 = vector.broadcast %cst_32 : f32 to vector<8x64xf32>
    %97 = arith.addf %96, %95 : vector<8x64xf32>
    %98 = arith.divf %96, %97 : vector<8x64xf32>
    %99 = arith.mulf %90, %71 : vector<8x64xf32>
    %100 = arith.mulf %84, %92 : vector<8x64xf32>
    %101 = arith.addf %99, %100 : vector<8x64xf32>
    %102 = math.tanh %101 : vector<8x64xf32>
    %103 = arith.mulf %98, %102 : vector<8x64xf32>
    %104 = tpu.concatenate %103, %101 in 1 : vector<8x64xf32>, vector<8x64xf32> -> vector<8x128xf32>
    %c16 = arith.constant 16 : index
    %c0_33 = arith.constant 0 : index
    %105 = vector.load %arg15[%c16, %c0_33] : memref<64x128xf32, #tpu.memory_space<vmem>>, vector<8x128xf32>
    tpu.vector_store %arg15[%c16, %c0_33], %104 {strides = array<i32>} : memref<64x128xf32, #tpu.memory_space<vmem>>, vector<8x128xf32>,
    %106 = vector.extract_strided_slice %7 {offsets = [24, 0], sizes = [8, 256], strides = [1, 1]} : vector<64x256xf32> to vector<8x256xf32>
    %cst_34 = arith.constant dense<0.000000e+00> : vector<8x256xf32>
    %107 = tpu.matmul %103, %0, %cst_34 {dimension_numbers = #tpu.dot_dimension_numbers<[1], [0], [0], [1], [0, 0, 1, 1], [], []>} : vector<8x64xf32>, vector<64x256xf32>, vector<8x256xf32> -> vector<8x256xf32>
    %108 = arith.addf %106, %107 : vector<8x256xf32>
    %109 = vector.extract_strided_slice %108 {offsets = [0, 0], sizes = [8, 64], strides = [1, 1]} : vector<8x256xf32> to vector<8x64xf32>
    %110 = arith.negf %109 : vector<8x64xf32>
    %111 = math.exp %110 : vector<8x64xf32>
    %cst_35 = arith.constant 1.000000e+00 : f32
    %112 = vector.broadcast %cst_35 : f32 to vector<8x64xf32>
    %113 = arith.addf %112, %111 : vector<8x64xf32>
    %114 = arith.divf %112, %113 : vector<8x64xf32>
    %115 = vector.extract_strided_slice %108 {offsets = [0, 64], sizes = [8, 64], strides = [1, 1]} : vector<8x256xf32> to vector<8x64xf32>
    %116 = arith.negf %115 : vector<8x64xf32>
    %117 = math.exp %116 : vector<8x64xf32>
    %cst_36 = arith.constant 1.000000e+00 : f32
    %118 = vector.broadcast %cst_36 : f32 to vector<8x64xf32>
    %119 = arith.addf %118, %117 : vector<8x64xf32>
    %120 = arith.divf %118, %119 : vector<8x64xf32>
    %121 = vector.extract_strided_slice %108 {offsets = [0, 128], sizes = [8, 64], strides = [1, 1]} : vector<8x256xf32> to vector<8x64xf32>
    %122 = math.tanh %121 : vector<8x64xf32>
    %123 = vector.extract_strided_slice %108 {offsets = [0, 192], sizes = [8, 64], strides = [1, 1]} : vector<8x256xf32> to vector<8x64xf32>
    %124 = arith.negf %123 : vector<8x64xf32>
    %125 = math.exp %124 : vector<8x64xf32>
    %cst_37 = arith.constant 1.000000e+00 : f32
    %126 = vector.broadcast %cst_37 : f32 to vector<8x64xf32>
    %127 = arith.addf %126, %125 : vector<8x64xf32>
    %128 = arith.divf %126, %127 : vector<8x64xf32>
    %129 = arith.mulf %120, %101 : vector<8x64xf32>
    %130 = arith.mulf %114, %122 : vector<8x64xf32>
    %131 = arith.addf %129, %130 : vector<8x64xf32>
    %132 = math.tanh %131 : vector<8x64xf32>
    %133 = arith.mulf %128, %132 : vector<8x64xf32>
    %134 = tpu.concatenate %133, %131 in 1 : vector<8x64xf32>, vector<8x64xf32> -> vector<8x128xf32>
    %c24 = arith.constant 24 : index
    %c0_38 = arith.constant 0 : index
    %135 = vector.load %arg15[%c24, %c0_38] : memref<64x128xf32, #tpu.memory_space<vmem>>, vector<8x128xf32>
    tpu.vector_store %arg15[%c24, %c0_38], %134 {strides = array<i32>} : memref<64x128xf32, #tpu.memory_space<vmem>>, vector<8x128xf32>,
    %136 = vector.extract_strided_slice %7 {offsets = [32, 0], sizes = [8, 256], strides = [1, 1]} : vector<64x256xf32> to vector<8x256xf32>
    %cst_39 = arith.constant dense<0.000000e+00> : vector<8x256xf32>
    %137 = tpu.matmul %133, %0, %cst_39 {dimension_numbers = #tpu.dot_dimension_numbers<[1], [0], [0], [1], [0, 0, 1, 1], [], []>} : vector<8x64xf32>, vector<64x256xf32>, vector<8x256xf32> -> vector<8x256xf32>
    %138 = arith.addf %136, %137 : vector<8x256xf32>
    %139 = vector.extract_strided_slice %138 {offsets = [0, 0], sizes = [8, 64], strides = [1, 1]} : vector<8x256xf32> to vector<8x64xf32>
    %140 = arith.negf %139 : vector<8x64xf32>
    %141 = math.exp %140 : vector<8x64xf32>
    %cst_40 = arith.constant 1.000000e+00 : f32
    %142 = vector.broadcast %cst_40 : f32 to vector<8x64xf32>
    %143 = arith.addf %142, %141 : vector<8x64xf32>
    %144 = arith.divf %142, %143 : vector<8x64xf32>
    %145 = vector.extract_strided_slice %138 {offsets = [0, 64], sizes = [8, 64], strides = [1, 1]} : vector<8x256xf32> to vector<8x64xf32>
    %146 = arith.negf %145 : vector<8x64xf32>
    %147 = math.exp %146 : vector<8x64xf32>
    %cst_41 = arith.constant 1.000000e+00 : f32
    %148 = vector.broadcast %cst_41 : f32 to vector<8x64xf32>
    %149 = arith.addf %148, %147 : vector<8x64xf32>
    %150 = arith.divf %148, %149 : vector<8x64xf32>
    %151 = vector.extract_strided_slice %138 {offsets = [0, 128], sizes = [8, 64], strides = [1, 1]} : vector<8x256xf32> to vector<8x64xf32>
    %152 = math.tanh %151 : vector<8x64xf32>
    %153 = vector.extract_strided_slice %138 {offsets = [0, 192], sizes = [8, 64], strides = [1, 1]} : vector<8x256xf32> to vector<8x64xf32>
    %154 = arith.negf %153 : vector<8x64xf32>
    %155 = math.exp %154 : vector<8x64xf32>
    %cst_42 = arith.constant 1.000000e+00 : f32
    %156 = vector.broadcast %cst_42 : f32 to vector<8x64xf32>
    %157 = arith.addf %156, %155 : vector<8x64xf32>
    %158 = arith.divf %156, %157 : vector<8x64xf32>
    %159 = arith.mulf %150, %131 : vector<8x64xf32>
    %160 = arith.mulf %144, %152 : vector<8x64xf32>
    %161 = arith.addf %159, %160 : vector<8x64xf32>
    %162 = math.tanh %161 : vector<8x64xf32>
    %163 = arith.mulf %158, %162 : vector<8x64xf32>
    %164 = tpu.concatenate %163, %161 in 1 : vector<8x64xf32>, vector<8x64xf32> -> vector<8x128xf32>
    %c32 = arith.constant 32 : index
    %c0_43 = arith.constant 0 : index
    %165 = vector.load %arg15[%c32, %c0_43] : memref<64x128xf32, #tpu.memory_space<vmem>>, vector<8x128xf32>
    tpu.vector_store %arg15[%c32, %c0_43], %164 {strides = array<i32>} : memref<64x128xf32, #tpu.memory_space<vmem>>, vector<8x128xf32>,
    %166 = vector.extract_strided_slice %7 {offsets = [40, 0], sizes = [8, 256], strides = [1, 1]} : vector<64x256xf32> to vector<8x256xf32>
    %cst_44 = arith.constant dense<0.000000e+00> : vector<8x256xf32>
    %167 = tpu.matmul %163, %0, %cst_44 {dimension_numbers = #tpu.dot_dimension_numbers<[1], [0], [0], [1], [0, 0, 1, 1], [], []>} : vector<8x64xf32>, vector<64x256xf32>, vector<8x256xf32> -> vector<8x256xf32>
    %168 = arith.addf %166, %167 : vector<8x256xf32>
    %169 = vector.extract_strided_slice %168 {offsets = [0, 0], sizes = [8, 64], strides = [1, 1]} : vector<8x256xf32> to vector<8x64xf32>
    %170 = arith.negf %169 : vector<8x64xf32>
    %171 = math.exp %170 : vector<8x64xf32>
    %cst_45 = arith.constant 1.000000e+00 : f32
    %172 = vector.broadcast %cst_45 : f32 to vector<8x64xf32>
    %173 = arith.addf %172, %171 : vector<8x64xf32>
    %174 = arith.divf %172, %173 : vector<8x64xf32>
    %175 = vector.extract_strided_slice %168 {offsets = [0, 64], sizes = [8, 64], strides = [1, 1]} : vector<8x256xf32> to vector<8x64xf32>
    %176 = arith.negf %175 : vector<8x64xf32>
    %177 = math.exp %176 : vector<8x64xf32>
    %cst_46 = arith.constant 1.000000e+00 : f32
    %178 = vector.broadcast %cst_46 : f32 to vector<8x64xf32>
    %179 = arith.addf %178, %177 : vector<8x64xf32>
    %180 = arith.divf %178, %179 : vector<8x64xf32>
    %181 = vector.extract_strided_slice %168 {offsets = [0, 128], sizes = [8, 64], strides = [1, 1]} : vector<8x256xf32> to vector<8x64xf32>
    %182 = math.tanh %181 : vector<8x64xf32>
    %183 = vector.extract_strided_slice %168 {offsets = [0, 192], sizes = [8, 64], strides = [1, 1]} : vector<8x256xf32> to vector<8x64xf32>
    %184 = arith.negf %183 : vector<8x64xf32>
    %185 = math.exp %184 : vector<8x64xf32>
    %cst_47 = arith.constant 1.000000e+00 : f32
    %186 = vector.broadcast %cst_47 : f32 to vector<8x64xf32>
    %187 = arith.addf %186, %185 : vector<8x64xf32>
    %188 = arith.divf %186, %187 : vector<8x64xf32>
    %189 = arith.mulf %180, %161 : vector<8x64xf32>
    %190 = arith.mulf %174, %182 : vector<8x64xf32>
    %191 = arith.addf %189, %190 : vector<8x64xf32>
    %192 = math.tanh %191 : vector<8x64xf32>
    %193 = arith.mulf %188, %192 : vector<8x64xf32>
    %194 = tpu.concatenate %193, %191 in 1 : vector<8x64xf32>, vector<8x64xf32> -> vector<8x128xf32>
    %c40 = arith.constant 40 : index
    %c0_48 = arith.constant 0 : index
    %195 = vector.load %arg15[%c40, %c0_48] : memref<64x128xf32, #tpu.memory_space<vmem>>, vector<8x128xf32>
    tpu.vector_store %arg15[%c40, %c0_48], %194 {strides = array<i32>} : memref<64x128xf32, #tpu.memory_space<vmem>>, vector<8x128xf32>,
    %196 = vector.extract_strided_slice %7 {offsets = [48, 0], sizes = [8, 256], strides = [1, 1]} : vector<64x256xf32> to vector<8x256xf32>
    %cst_49 = arith.constant dense<0.000000e+00> : vector<8x256xf32>
    %197 = tpu.matmul %193, %0, %cst_49 {dimension_numbers = #tpu.dot_dimension_numbers<[1], [0], [0], [1], [0, 0, 1, 1], [], []>} : vector<8x64xf32>, vector<64x256xf32>, vector<8x256xf32> -> vector<8x256xf32>
    %198 = arith.addf %196, %197 : vector<8x256xf32>
    %199 = vector.extract_strided_slice %198 {offsets = [0, 0], sizes = [8, 64], strides = [1, 1]} : vector<8x256xf32> to vector<8x64xf32>
    %200 = arith.negf %199 : vector<8x64xf32>
    %201 = math.exp %200 : vector<8x64xf32>
    %cst_50 = arith.constant 1.000000e+00 : f32
    %202 = vector.broadcast %cst_50 : f32 to vector<8x64xf32>
    %203 = arith.addf %202, %201 : vector<8x64xf32>
    %204 = arith.divf %202, %203 : vector<8x64xf32>
    %205 = vector.extract_strided_slice %198 {offsets = [0, 64], sizes = [8, 64], strides = [1, 1]} : vector<8x256xf32> to vector<8x64xf32>
    %206 = arith.negf %205 : vector<8x64xf32>
    %207 = math.exp %206 : vector<8x64xf32>
    %cst_51 = arith.constant 1.000000e+00 : f32
    %208 = vector.broadcast %cst_51 : f32 to vector<8x64xf32>
    %209 = arith.addf %208, %207 : vector<8x64xf32>
    %210 = arith.divf %208, %209 : vector<8x64xf32>
    %211 = vector.extract_strided_slice %198 {offsets = [0, 128], sizes = [8, 64], strides = [1, 1]} : vector<8x256xf32> to vector<8x64xf32>
    %212 = math.tanh %211 : vector<8x64xf32>
    %213 = vector.extract_strided_slice %198 {offsets = [0, 192], sizes = [8, 64], strides = [1, 1]} : vector<8x256xf32> to vector<8x64xf32>
    %214 = arith.negf %213 : vector<8x64xf32>
    %215 = math.exp %214 : vector<8x64xf32>
    %cst_52 = arith.constant 1.000000e+00 : f32
    %216 = vector.broadcast %cst_52 : f32 to vector<8x64xf32>
    %217 = arith.addf %216, %215 : vector<8x64xf32>
    %218 = arith.divf %216, %217 : vector<8x64xf32>
    %219 = arith.mulf %210, %191 : vector<8x64xf32>
    %220 = arith.mulf %204, %212 : vector<8x64xf32>
    %221 = arith.addf %219, %220 : vector<8x64xf32>
    %222 = math.tanh %221 : vector<8x64xf32>
    %223 = arith.mulf %218, %222 : vector<8x64xf32>
    %224 = tpu.concatenate %223, %221 in 1 : vector<8x64xf32>, vector<8x64xf32> -> vector<8x128xf32>
    %c48 = arith.constant 48 : index
    %c0_53 = arith.constant 0 : index
    %225 = vector.load %arg15[%c48, %c0_53] : memref<64x128xf32, #tpu.memory_space<vmem>>, vector<8x128xf32>
    tpu.vector_store %arg15[%c48, %c0_53], %224 {strides = array<i32>} : memref<64x128xf32, #tpu.memory_space<vmem>>, vector<8x128xf32>,
    %226 = vector.extract_strided_slice %7 {offsets = [56, 0], sizes = [8, 256], strides = [1, 1]} : vector<64x256xf32> to vector<8x256xf32>
    %cst_54 = arith.constant dense<0.000000e+00> : vector<8x256xf32>
    %227 = tpu.matmul %223, %0, %cst_54 {dimension_numbers = #tpu.dot_dimension_numbers<[1], [0], [0], [1], [0, 0, 1, 1], [], []>} : vector<8x64xf32>, vector<64x256xf32>, vector<8x256xf32> -> vector<8x256xf32>
    %228 = arith.addf %226, %227 : vector<8x256xf32>
    %229 = vector.extract_strided_slice %228 {offsets = [0, 0], sizes = [8, 64], strides = [1, 1]} : vector<8x256xf32> to vector<8x64xf32>
    %230 = arith.negf %229 : vector<8x64xf32>
    %231 = math.exp %230 : vector<8x64xf32>
    %cst_55 = arith.constant 1.000000e+00 : f32
    %232 = vector.broadcast %cst_55 : f32 to vector<8x64xf32>
    %233 = arith.addf %232, %231 : vector<8x64xf32>
    %234 = arith.divf %232, %233 : vector<8x64xf32>
    %235 = vector.extract_strided_slice %228 {offsets = [0, 64], sizes = [8, 64], strides = [1, 1]} : vector<8x256xf32> to vector<8x64xf32>
    %236 = arith.negf %235 : vector<8x64xf32>
    %237 = math.exp %236 : vector<8x64xf32>
    %cst_56 = arith.constant 1.000000e+00 : f32
    %238 = vector.broadcast %cst_56 : f32 to vector<8x64xf32>
    %239 = arith.addf %238, %237 : vector<8x64xf32>
    %240 = arith.divf %238, %239 : vector<8x64xf32>
    %241 = vector.extract_strided_slice %228 {offsets = [0, 128], sizes = [8, 64], strides = [1, 1]} : vector<8x256xf32> to vector<8x64xf32>
    %242 = math.tanh %241 : vector<8x64xf32>
    %243 = vector.extract_strided_slice %228 {offsets = [0, 192], sizes = [8, 64], strides = [1, 1]} : vector<8x256xf32> to vector<8x64xf32>
    %244 = arith.negf %243 : vector<8x64xf32>
    %245 = math.exp %244 : vector<8x64xf32>
    %cst_57 = arith.constant 1.000000e+00 : f32
    %246 = vector.broadcast %cst_57 : f32 to vector<8x64xf32>
    %247 = arith.addf %246, %245 : vector<8x64xf32>
    %248 = arith.divf %246, %247 : vector<8x64xf32>
    %249 = arith.mulf %240, %221 : vector<8x64xf32>
    %250 = arith.mulf %234, %242 : vector<8x64xf32>
    %251 = arith.addf %249, %250 : vector<8x64xf32>
    %252 = math.tanh %251 : vector<8x64xf32>
    %253 = arith.mulf %248, %252 : vector<8x64xf32>
    %254 = tpu.concatenate %253, %251 in 1 : vector<8x64xf32>, vector<8x64xf32> -> vector<8x128xf32>
    %c56 = arith.constant 56 : index
    %c0_58 = arith.constant 0 : index
    %255 = vector.load %arg15[%c56, %c0_58] : memref<64x128xf32, #tpu.memory_space<vmem>>, vector<8x128xf32>
    tpu.vector_store %arg15[%c56, %c0_58], %254 {strides = array<i32>} : memref<64x128xf32, #tpu.memory_space<vmem>>, vector<8x128xf32>,
    %c0_59 = arith.constant 0 : index
    %c0_60 = arith.constant 0 : index
    %256 = vector.load %arg15[%c0_59, %c0_60] : memref<64x128xf32, #tpu.memory_space<vmem>>, vector<64x128xf32>
    %257 = vector.extract_strided_slice %256 {offsets = [0, 0], sizes = [64, 64], strides = [1, 1]} : vector<64x128xf32> to vector<64x64xf32>
    %c0_61 = arith.constant 0 : index
    %c0_62 = arith.constant 0 : index
    %258 = vector.load %arg11[%c0_61, %c0_62] : memref<8x64xf32, #tpu.memory_space<vmem>>, vector<8x64xf32>
    %cst_63 = arith.constant dense<0.000000e+00> : vector<8x128xf32>
    %259 = tpu.matmul %258, %256, %cst_63 {dimension_numbers = #tpu.dot_dimension_numbers<[1], [0], [0], [1], [0, 0, 1, 1], [], []>} : vector<8x64xf32>, vector<64x128xf32>, vector<8x128xf32> -> vector<8x128xf32>
    %260 = vector.extract_strided_slice %259 {offsets = [0, 0], sizes = [8, 64], strides = [1, 1]} : vector<8x128xf32> to vector<8x64xf32>
    %261 = vector.extract_strided_slice %259 {offsets = [0, 64], sizes = [8, 64], strides = [1, 1]} : vector<8x128xf32> to vector<8x64xf32>
    %262 = vector.extract_strided_slice %13 {offsets = [0, 0], sizes = [8, 256], strides = [1, 1]} : vector<64x256xf32> to vector<8x256xf32>
    %cst_64 = arith.constant dense<0.000000e+00> : vector<8x256xf32>
    %263 = tpu.matmul %260, %1, %cst_64 {dimension_numbers = #tpu.dot_dimension_numbers<[1], [0], [0], [1], [0, 0, 1, 1], [], []>} : vector<8x64xf32>, vector<64x256xf32>, vector<8x256xf32> -> vector<8x256xf32>
    %264 = arith.addf %262, %263 : vector<8x256xf32>
    %265 = vector.extract_strided_slice %264 {offsets = [0, 0], sizes = [8, 64], strides = [1, 1]} : vector<8x256xf32> to vector<8x64xf32>
    %266 = arith.negf %265 : vector<8x64xf32>
    %267 = math.exp %266 : vector<8x64xf32>
    %cst_65 = arith.constant 1.000000e+00 : f32
    %268 = vector.broadcast %cst_65 : f32 to vector<8x64xf32>
    %269 = arith.addf %268, %267 : vector<8x64xf32>
    %270 = arith.divf %268, %269 : vector<8x64xf32>
    %271 = vector.extract_strided_slice %264 {offsets = [0, 64], sizes = [8, 64], strides = [1, 1]} : vector<8x256xf32> to vector<8x64xf32>
    %272 = arith.negf %271 : vector<8x64xf32>
    %273 = math.exp %272 : vector<8x64xf32>
    %cst_66 = arith.constant 1.000000e+00 : f32
    %274 = vector.broadcast %cst_66 : f32 to vector<8x64xf32>
    %275 = arith.addf %274, %273 : vector<8x64xf32>
    %276 = arith.divf %274, %275 : vector<8x64xf32>
    %277 = vector.extract_strided_slice %264 {offsets = [0, 128], sizes = [8, 64], strides = [1, 1]} : vector<8x256xf32> to vector<8x64xf32>
    %278 = math.tanh %277 : vector<8x64xf32>
    %279 = vector.extract_strided_slice %264 {offsets = [0, 192], sizes = [8, 64], strides = [1, 1]} : vector<8x256xf32> to vector<8x64xf32>
    %280 = arith.negf %279 : vector<8x64xf32>
    %281 = math.exp %280 : vector<8x64xf32>
    %cst_67 = arith.constant 1.000000e+00 : f32
    %282 = vector.broadcast %cst_67 : f32 to vector<8x64xf32>
    %283 = arith.addf %282, %281 : vector<8x64xf32>
    %284 = arith.divf %282, %283 : vector<8x64xf32>
    %285 = arith.mulf %276, %261 : vector<8x64xf32>
    %286 = arith.mulf %270, %278 : vector<8x64xf32>
    %287 = arith.addf %285, %286 : vector<8x64xf32>
    %288 = math.tanh %287 : vector<8x64xf32>
    %289 = arith.mulf %284, %288 : vector<8x64xf32>
    %290 = tpu.concatenate %289, %287 in 1 : vector<8x64xf32>, vector<8x64xf32> -> vector<8x128xf32>
    %c0_68 = arith.constant 0 : index
    %c0_69 = arith.constant 0 : index
    %291 = vector.load %arg16[%c0_68, %c0_69] : memref<64x128xf32, #tpu.memory_space<vmem>>, vector<8x128xf32>
    tpu.vector_store %arg16[%c0_68, %c0_69], %290 {strides = array<i32>} : memref<64x128xf32, #tpu.memory_space<vmem>>, vector<8x128xf32>,
    %292 = vector.extract_strided_slice %13 {offsets = [8, 0], sizes = [8, 256], strides = [1, 1]} : vector<64x256xf32> to vector<8x256xf32>
    %cst_70 = arith.constant dense<0.000000e+00> : vector<8x256xf32>
    %293 = tpu.matmul %289, %1, %cst_70 {dimension_numbers = #tpu.dot_dimension_numbers<[1], [0], [0], [1], [0, 0, 1, 1], [], []>} : vector<8x64xf32>, vector<64x256xf32>, vector<8x256xf32> -> vector<8x256xf32>
    %294 = arith.addf %292, %293 : vector<8x256xf32>
    %295 = vector.extract_strided_slice %294 {offsets = [0, 0], sizes = [8, 64], strides = [1, 1]} : vector<8x256xf32> to vector<8x64xf32>
    %296 = arith.negf %295 : vector<8x64xf32>
    %297 = math.exp %296 : vector<8x64xf32>
    %cst_71 = arith.constant 1.000000e+00 : f32
    %298 = vector.broadcast %cst_71 : f32 to vector<8x64xf32>
    %299 = arith.addf %298, %297 : vector<8x64xf32>
    %300 = arith.divf %298, %299 : vector<8x64xf32>
    %301 = vector.extract_strided_slice %294 {offsets = [0, 64], sizes = [8, 64], strides = [1, 1]} : vector<8x256xf32> to vector<8x64xf32>
    %302 = arith.negf %301 : vector<8x64xf32>
    %303 = math.exp %302 : vector<8x64xf32>
    %cst_72 = arith.constant 1.000000e+00 : f32
    %304 = vector.broadcast %cst_72 : f32 to vector<8x64xf32>
    %305 = arith.addf %304, %303 : vector<8x64xf32>
    %306 = arith.divf %304, %305 : vector<8x64xf32>
    %307 = vector.extract_strided_slice %294 {offsets = [0, 128], sizes = [8, 64], strides = [1, 1]} : vector<8x256xf32> to vector<8x64xf32>
    %308 = math.tanh %307 : vector<8x64xf32>
    %309 = vector.extract_strided_slice %294 {offsets = [0, 192], sizes = [8, 64], strides = [1, 1]} : vector<8x256xf32> to vector<8x64xf32>
    %310 = arith.negf %309 : vector<8x64xf32>
    %311 = math.exp %310 : vector<8x64xf32>
    %cst_73 = arith.constant 1.000000e+00 : f32
    %312 = vector.broadcast %cst_73 : f32 to vector<8x64xf32>
    %313 = arith.addf %312, %311 : vector<8x64xf32>
    %314 = arith.divf %312, %313 : vector<8x64xf32>
    %315 = arith.mulf %306, %287 : vector<8x64xf32>
    %316 = arith.mulf %300, %308 : vector<8x64xf32>
    %317 = arith.addf %315, %316 : vector<8x64xf32>
    %318 = math.tanh %317 : vector<8x64xf32>
    %319 = arith.mulf %314, %318 : vector<8x64xf32>
    %320 = tpu.concatenate %319, %317 in 1 : vector<8x64xf32>, vector<8x64xf32> -> vector<8x128xf32>
    %c8_74 = arith.constant 8 : index
    %c0_75 = arith.constant 0 : index
    %321 = vector.load %arg16[%c8_74, %c0_75] : memref<64x128xf32, #tpu.memory_space<vmem>>, vector<8x128xf32>
    tpu.vector_store %arg16[%c8_74, %c0_75], %320 {strides = array<i32>} : memref<64x128xf32, #tpu.memory_space<vmem>>, vector<8x128xf32>,
    %322 = vector.extract_strided_slice %13 {offsets = [16, 0], sizes = [8, 256], strides = [1, 1]} : vector<64x256xf32> to vector<8x256xf32>
    %cst_76 = arith.constant dense<0.000000e+00> : vector<8x256xf32>
    %323 = tpu.matmul %319, %1, %cst_76 {dimension_numbers = #tpu.dot_dimension_numbers<[1], [0], [0], [1], [0, 0, 1, 1], [], []>} : vector<8x64xf32>, vector<64x256xf32>, vector<8x256xf32> -> vector<8x256xf32>
    %324 = arith.addf %322, %323 : vector<8x256xf32>
    %325 = vector.extract_strided_slice %324 {offsets = [0, 0], sizes = [8, 64], strides = [1, 1]} : vector<8x256xf32> to vector<8x64xf32>
    %326 = arith.negf %325 : vector<8x64xf32>
    %327 = math.exp %326 : vector<8x64xf32>
    %cst_77 = arith.constant 1.000000e+00 : f32
    %328 = vector.broadcast %cst_77 : f32 to vector<8x64xf32>
    %329 = arith.addf %328, %327 : vector<8x64xf32>
    %330 = arith.divf %328, %329 : vector<8x64xf32>
    %331 = vector.extract_strided_slice %324 {offsets = [0, 64], sizes = [8, 64], strides = [1, 1]} : vector<8x256xf32> to vector<8x64xf32>
    %332 = arith.negf %331 : vector<8x64xf32>
    %333 = math.exp %332 : vector<8x64xf32>
    %cst_78 = arith.constant 1.000000e+00 : f32
    %334 = vector.broadcast %cst_78 : f32 to vector<8x64xf32>
    %335 = arith.addf %334, %333 : vector<8x64xf32>
    %336 = arith.divf %334, %335 : vector<8x64xf32>
    %337 = vector.extract_strided_slice %324 {offsets = [0, 128], sizes = [8, 64], strides = [1, 1]} : vector<8x256xf32> to vector<8x64xf32>
    %338 = math.tanh %337 : vector<8x64xf32>
    %339 = vector.extract_strided_slice %324 {offsets = [0, 192], sizes = [8, 64], strides = [1, 1]} : vector<8x256xf32> to vector<8x64xf32>
    %340 = arith.negf %339 : vector<8x64xf32>
    %341 = math.exp %340 : vector<8x64xf32>
    %cst_79 = arith.constant 1.000000e+00 : f32
    %342 = vector.broadcast %cst_79 : f32 to vector<8x64xf32>
    %343 = arith.addf %342, %341 : vector<8x64xf32>
    %344 = arith.divf %342, %343 : vector<8x64xf32>
    %345 = arith.mulf %336, %317 : vector<8x64xf32>
    %346 = arith.mulf %330, %338 : vector<8x64xf32>
    %347 = arith.addf %345, %346 : vector<8x64xf32>
    %348 = math.tanh %347 : vector<8x64xf32>
    %349 = arith.mulf %344, %348 : vector<8x64xf32>
    %350 = tpu.concatenate %349, %347 in 1 : vector<8x64xf32>, vector<8x64xf32> -> vector<8x128xf32>
    %c16_80 = arith.constant 16 : index
    %c0_81 = arith.constant 0 : index
    %351 = vector.load %arg16[%c16_80, %c0_81] : memref<64x128xf32, #tpu.memory_space<vmem>>, vector<8x128xf32>
    tpu.vector_store %arg16[%c16_80, %c0_81], %350 {strides = array<i32>} : memref<64x128xf32, #tpu.memory_space<vmem>>, vector<8x128xf32>,
    %352 = vector.extract_strided_slice %13 {offsets = [24, 0], sizes = [8, 256], strides = [1, 1]} : vector<64x256xf32> to vector<8x256xf32>
    %cst_82 = arith.constant dense<0.000000e+00> : vector<8x256xf32>
    %353 = tpu.matmul %349, %1, %cst_82 {dimension_numbers = #tpu.dot_dimension_numbers<[1], [0], [0], [1], [0, 0, 1, 1], [], []>} : vector<8x64xf32>, vector<64x256xf32>, vector<8x256xf32> -> vector<8x256xf32>
    %354 = arith.addf %352, %353 : vector<8x256xf32>
    %355 = vector.extract_strided_slice %354 {offsets = [0, 0], sizes = [8, 64], strides = [1, 1]} : vector<8x256xf32> to vector<8x64xf32>
    %356 = arith.negf %355 : vector<8x64xf32>
    %357 = math.exp %356 : vector<8x64xf32>
    %cst_83 = arith.constant 1.000000e+00 : f32
    %358 = vector.broadcast %cst_83 : f32 to vector<8x64xf32>
    %359 = arith.addf %358, %357 : vector<8x64xf32>
    %360 = arith.divf %358, %359 : vector<8x64xf32>
    %361 = vector.extract_strided_slice %354 {offsets = [0, 64], sizes = [8, 64], strides = [1, 1]} : vector<8x256xf32> to vector<8x64xf32>
    %362 = arith.negf %361 : vector<8x64xf32>
    %363 = math.exp %362 : vector<8x64xf32>
    %cst_84 = arith.constant 1.000000e+00 : f32
    %364 = vector.broadcast %cst_84 : f32 to vector<8x64xf32>
    %365 = arith.addf %364, %363 : vector<8x64xf32>
    %366 = arith.divf %364, %365 : vector<8x64xf32>
    %367 = vector.extract_strided_slice %354 {offsets = [0, 128], sizes = [8, 64], strides = [1, 1]} : vector<8x256xf32> to vector<8x64xf32>
    %368 = math.tanh %367 : vector<8x64xf32>
    %369 = vector.extract_strided_slice %354 {offsets = [0, 192], sizes = [8, 64], strides = [1, 1]} : vector<8x256xf32> to vector<8x64xf32>
    %370 = arith.negf %369 : vector<8x64xf32>
    %371 = math.exp %370 : vector<8x64xf32>
    %cst_85 = arith.constant 1.000000e+00 : f32
    %372 = vector.broadcast %cst_85 : f32 to vector<8x64xf32>
    %373 = arith.addf %372, %371 : vector<8x64xf32>
    %374 = arith.divf %372, %373 : vector<8x64xf32>
    %375 = arith.mulf %366, %347 : vector<8x64xf32>
    %376 = arith.mulf %360, %368 : vector<8x64xf32>
    %377 = arith.addf %375, %376 : vector<8x64xf32>
    %378 = math.tanh %377 : vector<8x64xf32>
    %379 = arith.mulf %374, %378 : vector<8x64xf32>
    %380 = tpu.concatenate %379, %377 in 1 : vector<8x64xf32>, vector<8x64xf32> -> vector<8x128xf32>
    %c24_86 = arith.constant 24 : index
    %c0_87 = arith.constant 0 : index
    %381 = vector.load %arg16[%c24_86, %c0_87] : memref<64x128xf32, #tpu.memory_space<vmem>>, vector<8x128xf32>
    tpu.vector_store %arg16[%c24_86, %c0_87], %380 {strides = array<i32>} : memref<64x128xf32, #tpu.memory_space<vmem>>, vector<8x128xf32>,
    %382 = vector.extract_strided_slice %13 {offsets = [32, 0], sizes = [8, 256], strides = [1, 1]} : vector<64x256xf32> to vector<8x256xf32>
    %cst_88 = arith.constant dense<0.000000e+00> : vector<8x256xf32>
    %383 = tpu.matmul %379, %1, %cst_88 {dimension_numbers = #tpu.dot_dimension_numbers<[1], [0], [0], [1], [0, 0, 1, 1], [], []>} : vector<8x64xf32>, vector<64x256xf32>, vector<8x256xf32> -> vector<8x256xf32>
    %384 = arith.addf %382, %383 : vector<8x256xf32>
    %385 = vector.extract_strided_slice %384 {offsets = [0, 0], sizes = [8, 64], strides = [1, 1]} : vector<8x256xf32> to vector<8x64xf32>
    %386 = arith.negf %385 : vector<8x64xf32>
    %387 = math.exp %386 : vector<8x64xf32>
    %cst_89 = arith.constant 1.000000e+00 : f32
    %388 = vector.broadcast %cst_89 : f32 to vector<8x64xf32>
    %389 = arith.addf %388, %387 : vector<8x64xf32>
    %390 = arith.divf %388, %389 : vector<8x64xf32>
    %391 = vector.extract_strided_slice %384 {offsets = [0, 64], sizes = [8, 64], strides = [1, 1]} : vector<8x256xf32> to vector<8x64xf32>
    %392 = arith.negf %391 : vector<8x64xf32>
    %393 = math.exp %392 : vector<8x64xf32>
    %cst_90 = arith.constant 1.000000e+00 : f32
    %394 = vector.broadcast %cst_90 : f32 to vector<8x64xf32>
    %395 = arith.addf %394, %393 : vector<8x64xf32>
    %396 = arith.divf %394, %395 : vector<8x64xf32>
    %397 = vector.extract_strided_slice %384 {offsets = [0, 128], sizes = [8, 64], strides = [1, 1]} : vector<8x256xf32> to vector<8x64xf32>
    %398 = math.tanh %397 : vector<8x64xf32>
    %399 = vector.extract_strided_slice %384 {offsets = [0, 192], sizes = [8, 64], strides = [1, 1]} : vector<8x256xf32> to vector<8x64xf32>
    %400 = arith.negf %399 : vector<8x64xf32>
    %401 = math.exp %400 : vector<8x64xf32>
    %cst_91 = arith.constant 1.000000e+00 : f32
    %402 = vector.broadcast %cst_91 : f32 to vector<8x64xf32>
    %403 = arith.addf %402, %401 : vector<8x64xf32>
    %404 = arith.divf %402, %403 : vector<8x64xf32>
    %405 = arith.mulf %396, %377 : vector<8x64xf32>
    %406 = arith.mulf %390, %398 : vector<8x64xf32>
    %407 = arith.addf %405, %406 : vector<8x64xf32>
    %408 = math.tanh %407 : vector<8x64xf32>
    %409 = arith.mulf %404, %408 : vector<8x64xf32>
    %410 = tpu.concatenate %409, %407 in 1 : vector<8x64xf32>, vector<8x64xf32> -> vector<8x128xf32>
    %c32_92 = arith.constant 32 : index
    %c0_93 = arith.constant 0 : index
    %411 = vector.load %arg16[%c32_92, %c0_93] : memref<64x128xf32, #tpu.memory_space<vmem>>, vector<8x128xf32>
    tpu.vector_store %arg16[%c32_92, %c0_93], %410 {strides = array<i32>} : memref<64x128xf32, #tpu.memory_space<vmem>>, vector<8x128xf32>,
    %412 = vector.extract_strided_slice %13 {offsets = [40, 0], sizes = [8, 256], strides = [1, 1]} : vector<64x256xf32> to vector<8x256xf32>
    %cst_94 = arith.constant dense<0.000000e+00> : vector<8x256xf32>
    %413 = tpu.matmul %409, %1, %cst_94 {dimension_numbers = #tpu.dot_dimension_numbers<[1], [0], [0], [1], [0, 0, 1, 1], [], []>} : vector<8x64xf32>, vector<64x256xf32>, vector<8x256xf32> -> vector<8x256xf32>
    %414 = arith.addf %412, %413 : vector<8x256xf32>
    %415 = vector.extract_strided_slice %414 {offsets = [0, 0], sizes = [8, 64], strides = [1, 1]} : vector<8x256xf32> to vector<8x64xf32>
    %416 = arith.negf %415 : vector<8x64xf32>
    %417 = math.exp %416 : vector<8x64xf32>
    %cst_95 = arith.constant 1.000000e+00 : f32
    %418 = vector.broadcast %cst_95 : f32 to vector<8x64xf32>
    %419 = arith.addf %418, %417 : vector<8x64xf32>
    %420 = arith.divf %418, %419 : vector<8x64xf32>
    %421 = vector.extract_strided_slice %414 {offsets = [0, 64], sizes = [8, 64], strides = [1, 1]} : vector<8x256xf32> to vector<8x64xf32>
    %422 = arith.negf %421 : vector<8x64xf32>
    %423 = math.exp %422 : vector<8x64xf32>
    %cst_96 = arith.constant 1.000000e+00 : f32
    %424 = vector.broadcast %cst_96 : f32 to vector<8x64xf32>
    %425 = arith.addf %424, %423 : vector<8x64xf32>
    %426 = arith.divf %424, %425 : vector<8x64xf32>
    %427 = vector.extract_strided_slice %414 {offsets = [0, 128], sizes = [8, 64], strides = [1, 1]} : vector<8x256xf32> to vector<8x64xf32>
    %428 = math.tanh %427 : vector<8x64xf32>
    %429 = vector.extract_strided_slice %414 {offsets = [0, 192], sizes = [8, 64], strides = [1, 1]} : vector<8x256xf32> to vector<8x64xf32>
    %430 = arith.negf %429 : vector<8x64xf32>
    %431 = math.exp %430 : vector<8x64xf32>
    %cst_97 = arith.constant 1.000000e+00 : f32
    %432 = vector.broadcast %cst_97 : f32 to vector<8x64xf32>
    %433 = arith.addf %432, %431 : vector<8x64xf32>
    %434 = arith.divf %432, %433 : vector<8x64xf32>
    %435 = arith.mulf %426, %407 : vector<8x64xf32>
    %436 = arith.mulf %420, %428 : vector<8x64xf32>
    %437 = arith.addf %435, %436 : vector<8x64xf32>
    %438 = math.tanh %437 : vector<8x64xf32>
    %439 = arith.mulf %434, %438 : vector<8x64xf32>
    %440 = tpu.concatenate %439, %437 in 1 : vector<8x64xf32>, vector<8x64xf32> -> vector<8x128xf32>
    %c40_98 = arith.constant 40 : index
    %c0_99 = arith.constant 0 : index
    %441 = vector.load %arg16[%c40_98, %c0_99] : memref<64x128xf32, #tpu.memory_space<vmem>>, vector<8x128xf32>
    tpu.vector_store %arg16[%c40_98, %c0_99], %440 {strides = array<i32>} : memref<64x128xf32, #tpu.memory_space<vmem>>, vector<8x128xf32>,
    %442 = vector.extract_strided_slice %13 {offsets = [48, 0], sizes = [8, 256], strides = [1, 1]} : vector<64x256xf32> to vector<8x256xf32>
    %cst_100 = arith.constant dense<0.000000e+00> : vector<8x256xf32>
    %443 = tpu.matmul %439, %1, %cst_100 {dimension_numbers = #tpu.dot_dimension_numbers<[1], [0], [0], [1], [0, 0, 1, 1], [], []>} : vector<8x64xf32>, vector<64x256xf32>, vector<8x256xf32> -> vector<8x256xf32>
    %444 = arith.addf %442, %443 : vector<8x256xf32>
    %445 = vector.extract_strided_slice %444 {offsets = [0, 0], sizes = [8, 64], strides = [1, 1]} : vector<8x256xf32> to vector<8x64xf32>
    %446 = arith.negf %445 : vector<8x64xf32>
    %447 = math.exp %446 : vector<8x64xf32>
    %cst_101 = arith.constant 1.000000e+00 : f32
    %448 = vector.broadcast %cst_101 : f32 to vector<8x64xf32>
    %449 = arith.addf %448, %447 : vector<8x64xf32>
    %450 = arith.divf %448, %449 : vector<8x64xf32>
    %451 = vector.extract_strided_slice %444 {offsets = [0, 64], sizes = [8, 64], strides = [1, 1]} : vector<8x256xf32> to vector<8x64xf32>
    %452 = arith.negf %451 : vector<8x64xf32>
    %453 = math.exp %452 : vector<8x64xf32>
    %cst_102 = arith.constant 1.000000e+00 : f32
    %454 = vector.broadcast %cst_102 : f32 to vector<8x64xf32>
    %455 = arith.addf %454, %453 : vector<8x64xf32>
    %456 = arith.divf %454, %455 : vector<8x64xf32>
    %457 = vector.extract_strided_slice %444 {offsets = [0, 128], sizes = [8, 64], strides = [1, 1]} : vector<8x256xf32> to vector<8x64xf32>
    %458 = math.tanh %457 : vector<8x64xf32>
    %459 = vector.extract_strided_slice %444 {offsets = [0, 192], sizes = [8, 64], strides = [1, 1]} : vector<8x256xf32> to vector<8x64xf32>
    %460 = arith.negf %459 : vector<8x64xf32>
    %461 = math.exp %460 : vector<8x64xf32>
    %cst_103 = arith.constant 1.000000e+00 : f32
    %462 = vector.broadcast %cst_103 : f32 to vector<8x64xf32>
    %463 = arith.addf %462, %461 : vector<8x64xf32>
    %464 = arith.divf %462, %463 : vector<8x64xf32>
    %465 = arith.mulf %456, %437 : vector<8x64xf32>
    %466 = arith.mulf %450, %458 : vector<8x64xf32>
    %467 = arith.addf %465, %466 : vector<8x64xf32>
    %468 = math.tanh %467 : vector<8x64xf32>
    %469 = arith.mulf %464, %468 : vector<8x64xf32>
    %470 = tpu.concatenate %469, %467 in 1 : vector<8x64xf32>, vector<8x64xf32> -> vector<8x128xf32>
    %c48_104 = arith.constant 48 : index
    %c0_105 = arith.constant 0 : index
    %471 = vector.load %arg16[%c48_104, %c0_105] : memref<64x128xf32, #tpu.memory_space<vmem>>, vector<8x128xf32>
    tpu.vector_store %arg16[%c48_104, %c0_105], %470 {strides = array<i32>} : memref<64x128xf32, #tpu.memory_space<vmem>>, vector<8x128xf32>,
    %472 = vector.extract_strided_slice %13 {offsets = [56, 0], sizes = [8, 256], strides = [1, 1]} : vector<64x256xf32> to vector<8x256xf32>
    %cst_106 = arith.constant dense<0.000000e+00> : vector<8x256xf32>
    %473 = tpu.matmul %469, %1, %cst_106 {dimension_numbers = #tpu.dot_dimension_numbers<[1], [0], [0], [1], [0, 0, 1, 1], [], []>} : vector<8x64xf32>, vector<64x256xf32>, vector<8x256xf32> -> vector<8x256xf32>
    %474 = arith.addf %472, %473 : vector<8x256xf32>
    %475 = vector.extract_strided_slice %474 {offsets = [0, 0], sizes = [8, 64], strides = [1, 1]} : vector<8x256xf32> to vector<8x64xf32>
    %476 = arith.negf %475 : vector<8x64xf32>
    %477 = math.exp %476 : vector<8x64xf32>
    %cst_107 = arith.constant 1.000000e+00 : f32
    %478 = vector.broadcast %cst_107 : f32 to vector<8x64xf32>
    %479 = arith.addf %478, %477 : vector<8x64xf32>
    %480 = arith.divf %478, %479 : vector<8x64xf32>
    %481 = vector.extract_strided_slice %474 {offsets = [0, 64], sizes = [8, 64], strides = [1, 1]} : vector<8x256xf32> to vector<8x64xf32>
    %482 = arith.negf %481 : vector<8x64xf32>
    %483 = math.exp %482 : vector<8x64xf32>
    %cst_108 = arith.constant 1.000000e+00 : f32
    %484 = vector.broadcast %cst_108 : f32 to vector<8x64xf32>
    %485 = arith.addf %484, %483 : vector<8x64xf32>
    %486 = arith.divf %484, %485 : vector<8x64xf32>
    %487 = vector.extract_strided_slice %474 {offsets = [0, 128], sizes = [8, 64], strides = [1, 1]} : vector<8x256xf32> to vector<8x64xf32>
    %488 = math.tanh %487 : vector<8x64xf32>
    %489 = vector.extract_strided_slice %474 {offsets = [0, 192], sizes = [8, 64], strides = [1, 1]} : vector<8x256xf32> to vector<8x64xf32>
    %490 = arith.negf %489 : vector<8x64xf32>
    %491 = math.exp %490 : vector<8x64xf32>
    %cst_109 = arith.constant 1.000000e+00 : f32
    %492 = vector.broadcast %cst_109 : f32 to vector<8x64xf32>
    %493 = arith.addf %492, %491 : vector<8x64xf32>
    %494 = arith.divf %492, %493 : vector<8x64xf32>
    %495 = arith.mulf %486, %467 : vector<8x64xf32>
    %496 = arith.mulf %480, %488 : vector<8x64xf32>
    %497 = arith.addf %495, %496 : vector<8x64xf32>
    %498 = math.tanh %497 : vector<8x64xf32>
    %499 = arith.mulf %494, %498 : vector<8x64xf32>
    %500 = tpu.concatenate %499, %497 in 1 : vector<8x64xf32>, vector<8x64xf32> -> vector<8x128xf32>
    %c56_110 = arith.constant 56 : index
    %c0_111 = arith.constant 0 : index
    %501 = vector.load %arg16[%c56_110, %c0_111] : memref<64x128xf32, #tpu.memory_space<vmem>>, vector<8x128xf32>
    tpu.vector_store %arg16[%c56_110, %c0_111], %500 {strides = array<i32>} : memref<64x128xf32, #tpu.memory_space<vmem>>, vector<8x128xf32>,
    %c0_112 = arith.constant 0 : index
    %c0_113 = arith.constant 0 : index
    %502 = vector.load %arg12[%c0_112, %c0_113] : memref<8x64xf32, #tpu.memory_space<vmem>>, vector<8x64xf32>
    %c0_114 = arith.constant 0 : index
    %c0_115 = arith.constant 0 : index
    %503 = vector.load %arg16[%c0_114, %c0_115] : memref<64x128xf32, #tpu.memory_space<vmem>>, vector<64x128xf32>
    %cst_116 = arith.constant dense<0.000000e+00> : vector<8x128xf32>
    %504 = tpu.matmul %502, %503, %cst_116 {dimension_numbers = #tpu.dot_dimension_numbers<[1], [0], [0], [1], [0, 0, 1, 1], [], []>} : vector<8x64xf32>, vector<64x128xf32>, vector<8x128xf32> -> vector<8x128xf32>
    %505 = vector.extract_strided_slice %504 {offsets = [0, 0], sizes = [8, 64], strides = [1, 1]} : vector<8x128xf32> to vector<8x64xf32>
    %506 = tpu.concatenate %505, %505, %505, %505, %505, %505, %505, %505 in 0 : vector<8x64xf32>, vector<8x64xf32>, vector<8x64xf32>, vector<8x64xf32>, vector<8x64xf32>, vector<8x64xf32>, vector<8x64xf32>, vector<8x64xf32> -> vector<64x64xf32>
    %507 = tpu.concatenate %257, %506 in 1 : vector<64x64xf32>, vector<64x64xf32> -> vector<64x128xf32>
    %c0_117 = arith.constant 0 : index
    %c0_118 = arith.constant 0 : index
    %508 = vector.load %arg8[%c0_117, %c0_118] : memref<128x64xf32, #tpu.memory_space<vmem>>, vector<128x64xf32>
    %cst_119 = arith.constant dense<0.000000e+00> : vector<64x64xf32>
    %509 = tpu.matmul %507, %508, %cst_119 {dimension_numbers = #tpu.dot_dimension_numbers<[1], [0], [0], [1], [0, 0, 1, 1], [], []>} : vector<64x128xf32>, vector<128x64xf32>, vector<64x64xf32> -> vector<64x64xf32>
    %510 = math.tanh %509 : vector<64x64xf32>
    %c0_120 = arith.constant 0 : index
    %c0_121 = arith.constant 0 : index
    %511 = vector.load %arg9[%c0_120, %c0_121] : memref<1x64xf32, #tpu.memory_space<vmem>>, vector<1x64xf32>
    %cst_122 = arith.constant dense<0.000000e+00> : vector<1x64xf32>
    %512 = tpu.matmul %511, %510, %cst_122 {dimension_numbers = #tpu.dot_dimension_numbers<[1], [1], [0], [0], [0, 0, 1, 0], [], []>} : vector<1x64xf32>, vector<64x64xf32>, vector<1x64xf32> -> vector<1x64xf32>
    %c0_123 = arith.constant 0 : index
    %c0_124 = arith.constant 0 : index
    %513 = vector.load %arg13[%c0_123, %c0_124] : memref<8x64xf32, #tpu.memory_space<vmem>>, vector<8x64xf32>
    %514 = vector.broadcast %512 : vector<1x64xf32> to vector<8x64xf32>
    %515 = arith.mulf %513, %514 : vector<8x64xf32>
    %cst_125 = arith.constant 1.000000e+00 : f32
    %516 = vector.broadcast %cst_125 : f32 to vector<8x64xf32>
    %517 = arith.subf %516, %513 : vector<8x64xf32>
    %cst_126 = arith.constant 9.99999995E+11 : f32
    %518 = vector.broadcast %cst_126 : f32 to vector<8x64xf32>
    %519 = arith.mulf %517, %518 : vector<8x64xf32>
    %520 = arith.subf %515, %519 : vector<8x64xf32>
    %cst_127 = arith.constant dense<0xFF800000> : vector<8xf32>
    %521 = vector.multi_reduction <maximumf>, %520, %cst_127 [1] : vector<8x64xf32> to vector<8xf32>
    %522 = vector.shape_cast %521 : vector<8xf32> to vector<8x1xf32>
    %523 = vector.broadcast %522 : vector<8x1xf32> to vector<8x64xf32>
    %524 = arith.subf %520, %523 : vector<8x64xf32>
    %525 = math.exp %524 : vector<8x64xf32>
    %cst_128 = arith.constant dense<0.000000e+00> : vector<8xf32>
    %526 = vector.multi_reduction <add>, %525, %cst_128 [1] : vector<8x64xf32> to vector<8xf32>
    %527 = vector.shape_cast %526 : vector<8xf32> to vector<8x1xf32>
    %528 = tpu.reciprocal %527 {approx = true} : vector<8x1xf32> -> vector<8x1xf32>
    %529 = vector.broadcast %528 : vector<8x1xf32> to vector<8x64xf32>
    %530 = arith.mulf %525, %529 : vector<8x64xf32>
    %cst_129 = arith.constant dense<0.000000e+00> : vector<8x64xf32>
    %531 = tpu.matmul %530, %257, %cst_129 {dimension_numbers = #tpu.dot_dimension_numbers<[1], [0], [0], [1], [0, 0, 1, 1], [], []>} : vector<8x64xf32>, vector<64x64xf32>, vector<8x64xf32> -> vector<8x64xf32>
    %532 = tpu.concatenate %531, %505 in 1 : vector<8x64xf32>, vector<8x64xf32> -> vector<8x128xf32>
    %c0_130 = arith.constant 0 : index
    %c0_131 = arith.constant 0 : index
    %533 = vector.load %arg10[%c0_130, %c0_131] : memref<128x64xf32, #tpu.memory_space<vmem>>, vector<128x64xf32>
    %cst_132 = arith.constant dense<0.000000e+00> : vector<8x64xf32>
    %534 = tpu.matmul %532, %533, %cst_132 {dimension_numbers = #tpu.dot_dimension_numbers<[1], [0], [0], [1], [0, 0, 1, 1], [], []>} : vector<8x128xf32>, vector<128x64xf32>, vector<8x64xf32> -> vector<8x64xf32>
    %535 = math.tanh %534 : vector<8x64xf32>
    %c0_133 = arith.constant 0 : index
    %c0_134 = arith.constant 0 : index
    %536 = vector.load %arg14[%c0_133, %c0_134] : memref<8x64xf32, #tpu.memory_space<vmem>>, vector<8x64xf32>
    tpu.vector_store %arg14[%c0_133, %c0_134], %535 {strides = array<i32>} : memref<8x64xf32, #tpu.memory_space<vmem>>, vector<8x64xf32>,
    return
  }
}

</mosaic_0001>

<llo_original>
// kernel: tpu_custom_call.1
$region0: #{tpu_custom_call.1}
  #allocation0 [shape = 'u32[]', space=smem, size = 0x4, offset = 0x4, fixed_abs, tag = 'smem constant byte address 0x4 - core index']
  #allocation1 [shape = 'u32[144,128]{1,0:T(1,128)}', space=vmem, size = 0x12000, scoped, tag = 'internal scratch']
  #allocation2 [shape = 'f32[64,128]{1,0:T(8,128)}', space=vmem, size = 0x8000, scoped, tag = 'scratch operand']
  #allocation3 [shape = 'f32[64,128]{1,0:T(8,128)}', space=vmem, size = 0x8000, scoped, tag = 'scratch operand']
  %s0 = inlined_call_operand.hbm [shape: f32[64,64], index: 0, kind: input, shape index: {}]
  %s1 = inlined_call_operand.hbm [shape: f32[64,64], index: 1, kind: input, shape index: {}]
  %s2 = inlined_call_operand.vmem [shape: f32[64,256], index: 2, kind: input, shape index: {}]
  %s3 = inlined_call_operand.vmem [shape: f32[64,256], index: 3, kind: input, shape index: {}]
  %s4 = inlined_call_operand.vmem [shape: f32[1,256], index: 4, kind: input, shape index: {}]
  %s5 = inlined_call_operand.vmem [shape: f32[64,256], index: 5, kind: input, shape index: {}]
  %s6 = inlined_call_operand.hbm [shape: f32[64,256], index: 6, kind: input, shape index: {}]
  %s7 = inlined_call_operand.vmem [shape: f32[1,256], index: 7, kind: input, shape index: {}]
  %s8 = inlined_call_operand.vmem [shape: f32[128,64], index: 8, kind: input, shape index: {}]
  %s9 = inlined_call_operand.vmem [shape: f32[1,64], index: 9, kind: input, shape index: {}]
  %s10 = inlined_call_operand.vmem [shape: f32[128,64], index: 10, kind: input, shape index: {}]
  %s11 = inlined_call_operand.vmem [shape: f32[8,64], index: 11, kind: input, shape index: {}]
  %s12 = inlined_call_operand.vmem [shape: f32[8,64], index: 12, kind: input, shape index: {}]
  %s13 = inlined_call_operand.vmem [shape: f32[8,64], index: 13, kind: input, shape index: {}]
  %s14 = inlined_call_operand.hbm [shape: f32[8,64], index: 14, kind: output, shape index: {}]
  %s15 = sld [smem:[#allocation0]]
  $region78: #{tpu_custom_call.1} parent=0
    _
  %s17 = ssub.s32 1, %s15
  %s18 = scalar_select 0, %s17, %s15
  $region1: #{tpu_custom_call.1} parent=0
    #allocation4 [shape = 'u8[32768]{0}', space=vmem, size = 0x8000, scoped, tag = 'input window, operand 0, single buffered']
    #allocation5 [shape = 's32[1]{0}', space=sflag, size = 0x4, scoped, tag = 'scoped memory for tpu_custom_call.1']
    #allocation6 [shape = 's32[1]{0}', space=sflag, size = 0x4, scoped, tag = 'scoped memory for tpu_custom_call.1']
    #allocation7 [shape = 'u8[32768]{0}', space=vmem, size = 0x8000, scoped, tag = 'input window, operand 1, single buffered']
    #allocation8 [shape = 's32[1]{0}', space=sflag, size = 0x4, scoped, tag = 'scoped memory for tpu_custom_call.1']
    #allocation9 [shape = 'u8[65536]{0}', space=vmem, size = 0x10000, scoped, tag = 'input window, operand 6, single buffered']
    #allocation10 [shape = 'u8[4096]{0}', space=vmem, size = 0x1000, scoped, tag = 'output window, operand 0, single buffered']
    %19 = vsyncpa [#allocation5], 0
    %20 = vsyncpa [#allocation8], 0
    %21 = vsyncpa [#allocation6], 0
    // Predicated region
    $region2: #{tpu_custom_call.1} parent=1 // pred_check
      _
    $region3: #{tpu_custom_call.1} parent=1 // pred_check_branch
      %23 = sbr.rel (0) target = $region5
    $region4: #{tpu_custom_call.1} parent=1 // pred_region
      %s25 = ssub.s32 1024, 1024
      %26 = vsyncadd [#allocation5], %s25
      %s27 = sshll.u32 [#allocation4], 4
      %s28 = int_to_ptr.vmem [resolvable:$true] %s27
      %33 = dma.hbm_to_vmem [thread:$0]  %s0, 1024, %s28, [#allocation5], 128, 128, 8
    $region5: #{tpu_custom_call.1} parent=1 // pred_fallthru
      _
    // Predicated region
    $region6: #{tpu_custom_call.1} parent=1 // pred_check
      _
    $region7: #{tpu_custom_call.1} parent=1 // pred_check_branch
      %35 = sbr.rel (0) target = $region9
    $region8: #{tpu_custom_call.1} parent=1 // pred_region
      %s37 = ssub.s32 1024, 1024
      %38 = vsyncadd [#allocation8], %s37
      %s39 = sshll.u32 [#allocation7], 4
      %s40 = int_to_ptr.vmem [resolvable:$true] %s39
      %45 = dma.hbm_to_vmem [thread:$0]  %s1, 1024, %s40, [#allocation8], 128, 128, 8
    $region9: #{tpu_custom_call.1} parent=1 // pred_fallthru
      _
    // Predicated region
    $region10: #{tpu_custom_call.1} parent=1 // pred_check
      _
    $region11: #{tpu_custom_call.1} parent=1 // pred_check_branch
      %47 = sbr.rel (0) target = $region13
    $region12: #{tpu_custom_call.1} parent=1 // pred_region
      _
    $region13: #{tpu_custom_call.1} parent=1 // pred_fallthru
      _
    // Predicated region
    $region14: #{tpu_custom_call.1} parent=1 // pred_check
      _
    $region15: #{tpu_custom_call.1} parent=1 // pred_check_branch
      %49 = sbr.rel (0) target = $region17
    $region16: #{tpu_custom_call.1} parent=1 // pred_region
      _
    $region17: #{tpu_custom_call.1} parent=1 // pred_fallthru
      _
    // Predicated region
    $region18: #{tpu_custom_call.1} parent=1 // pred_check
      _
    $region19: #{tpu_custom_call.1} parent=1 // pred_check_branch
      %51 = sbr.rel (0) target = $region21
    $region20: #{tpu_custom_call.1} parent=1 // pred_region
      _
    $region21: #{tpu_custom_call.1} parent=1 // pred_fallthru
      _
    // Predicated region
    $region22: #{tpu_custom_call.1} parent=1 // pred_check
      _
    $region23: #{tpu_custom_call.1} parent=1 // pred_check_branch
      %53 = sbr.rel (0) target = $region25
    $region24: #{tpu_custom_call.1} parent=1 // pred_region
      _
    $region25: #{tpu_custom_call.1} parent=1 // pred_fallthru
      _
    // Predicated region
    $region26: #{tpu_custom_call.1} parent=1 // pred_check
      _
    $region27: #{tpu_custom_call.1} parent=1 // pred_check_branch
      %55 = sbr.rel (0) target = $region29
    $region28: #{tpu_custom_call.1} parent=1 // pred_region
      %s57 = ssub.s32 2048, 2048
      %58 = vsyncadd [#allocation8], %s57
      %s59 = sshll.u32 [#allocation9], 4
      %s60 = int_to_ptr.vmem [resolvable:$true] %s59
      %65 = dma.hbm_to_vmem [thread:$0]  %s6, 2048, %s60, [#allocation8], 256, 256, 16
    $region29: #{tpu_custom_call.1} parent=1 // pred_fallthru
      _
    // Predicated region
    $region30: #{tpu_custom_call.1} parent=1 // pred_check
      _
    $region31: #{tpu_custom_call.1} parent=1 // pred_check_branch
      %67 = sbr.rel (0) target = $region33
    $region32: #{tpu_custom_call.1} parent=1 // pred_region
      _
    $region33: #{tpu_custom_call.1} parent=1 // pred_fallthru
      _
    // Predicated region
    $region34: #{tpu_custom_call.1} parent=1 // pred_check
      _
    $region35: #{tpu_custom_call.1} parent=1 // pred_check_branch
      %69 = sbr.rel (0) target = $region37
    $region36: #{tpu_custom_call.1} parent=1 // pred_region
      _
    $region37: #{tpu_custom_call.1} parent=1 // pred_fallthru
      _
    // Predicated region
    $region38: #{tpu_custom_call.1} parent=1 // pred_check
      _
    $region39: #{tpu_custom_call.1} parent=1 // pred_check_branch
      %71 = sbr.rel (0) target = $region41
    $region40: #{tpu_custom_call.1} parent=1 // pred_region
      _
    $region41: #{tpu_custom_call.1} parent=1 // pred_fallthru
      _
    // Predicated region
    $region42: #{tpu_custom_call.1} parent=1 // pred_check
      _
    $region43: #{tpu_custom_call.1} parent=1 // pred_check_branch
      %73 = sbr.rel (0) target = $region45
    $region44: #{tpu_custom_call.1} parent=1 // pred_region
      _
    $region45: #{tpu_custom_call.1} parent=1 // pred_fallthru
      _
    // Predicated region
    $region46: #{tpu_custom_call.1} parent=1 // pred_check
      _
    $region47: #{tpu_custom_call.1} parent=1 // pred_check_branch
      %75 = sbr.rel (0) target = $region49
    $region48: #{tpu_custom_call.1} parent=1 // pred_region
      _
    $region49: #{tpu_custom_call.1} parent=1 // pred_fallthru
      _
    // Predicated region
    $region50: #{tpu_custom_call.1} parent=1 // pred_check
      _
    $region51: #{tpu_custom_call.1} parent=1 // pred_check_branch
      %77 = sbr.rel (0) target = $region53
    $region52: #{tpu_custom_call.1} parent=1 // pred_region
      _
    $region53: #{tpu_custom_call.1} parent=1 // pred_fallthru
      _
    // Predicated region
    $region54: #{tpu_custom_call.1} parent=1 // pred_check
      _
    $region55: #{tpu_custom_call.1} parent=1 // pred_check_branch
      %79 = sbr.rel (0) target = $region57
    $region56: #{tpu_custom_call.1} parent=1 // pred_region
      _
    $region57: #{tpu_custom_call.1} parent=1 // pred_fallthru
      _
    // Predicated region
    $region58: #{tpu_custom_call.1} parent=1 // pred_check
      _
    $region59: #{tpu_custom_call.1} parent=1 // pred_check_branch
      %81 = sbr.rel (0) target = $region61
    $region60: #{tpu_custom_call.1} parent=1 // pred_region
      %82 = dma.done [#allocation5], 1024
    $region61: #{tpu_custom_call.1} parent=1 // pred_fallthru
      _
    // Predicated region
    $region62: #{tpu_custom_call.1} parent=1 // pred_check
      _
    $region63: #{tpu_custom_call.1} parent=1 // pred_check_branch
      %84 = sbr.rel (0) target = $region65
    $region64: #{tpu_custom_call.1} parent=1 // pred_region
      %85 = dma.done [#allocation8], 1024
    $region65: #{tpu_custom_call.1} parent=1 // pred_fallthru
      _
    // Predicated region
    $region66: #{tpu_custom_call.1} parent=1 // pred_check
      _
    $region67: #{tpu_custom_call.1} parent=1 // pred_check_branch
      %87 = sbr.rel (0) target = $region69
    $region68: #{tpu_custom_call.1} parent=1 // pred_region
      %88 = dma.done [#allocation8], 2048
    $region69: #{tpu_custom_call.1} parent=1 // pred_fallthru
      _
    %v89 = vld [vmem:[%s3] sm:$0xff]
    %v90 = vld [vmem:[%s3 + $0x8] sm:$0xff]
    %v91 = vld [vmem:[%s3 + $0x10] sm:$0xff]
    %v92 = vld [vmem:[%s3 + $0x18] sm:$0xff]
    %v93 = vld [vmem:[%s3 + $0x20] sm:$0xff]
    %v94 = vld [vmem:[%s3 + $0x28] sm:$0xff]
    %v95 = vld [vmem:[%s3 + $0x30] sm:$0xff]
    %v96 = vld [vmem:[%s3 + $0x38] sm:$0xff]
    %v97 = vld [vmem:[%s3 + $0x40] sm:$0xff]
    %v98 = vld [vmem:[%s3 + $0x48] sm:$0xff]
    %v99 = vld [vmem:[%s3 + $0x50] sm:$0xff]
    %v100 = vld [vmem:[%s3 + $0x58] sm:$0xff]
    %v101 = vld [vmem:[%s3 + $0x60] sm:$0xff]
    %v102 = vld [vmem:[%s3 + $0x68] sm:$0xff]
    %v103 = vld [vmem:[%s3 + $0x70] sm:$0xff]
    %v104 = vld [vmem:[%s3 + $0x78] sm:$0xff]
    %v105 = vld [vmem:[#allocation9] sm:$0xff]
    %v106 = vld [vmem:[#allocation9 + $0x8] sm:$0xff]
    %v107 = vld [vmem:[#allocation9 + $0x10] sm:$0xff]
    %v108 = vld [vmem:[#allocation9 + $0x18] sm:$0xff]
    %v109 = vld [vmem:[#allocation9 + $0x20] sm:$0xff]
    %v110 = vld [vmem:[#allocation9 + $0x28] sm:$0xff]
    %v111 = vld [vmem:[#allocation9 + $0x30] sm:$0xff]
    %v112 = vld [vmem:[#allocation9 + $0x38] sm:$0xff]
    %v113 = vld [vmem:[#allocation9 + $0x40] sm:$0xff]
    %v114 = vld [vmem:[#allocation9 + $0x48] sm:$0xff]
    %v115 = vld [vmem:[#allocation9 + $0x50] sm:$0xff]
    %v116 = vld [vmem:[#allocation9 + $0x58] sm:$0xff]
    %v117 = vld [vmem:[#allocation9 + $0x60] sm:$0xff]
    %v118 = vld [vmem:[#allocation9 + $0x68] sm:$0xff]
    %v119 = vld [vmem:[#allocation9 + $0x70] sm:$0xff]
    %v120 = vld [vmem:[#allocation9 + $0x78] sm:$0xff]
    %v121 = vld [vmem:[#allocation4] sm:$0xff]
    %v122 = vld [vmem:[#allocation4 + $0x8] sm:$0xff]
    %v123 = vld [vmem:[#allocation4 + $0x10] sm:$0xff]
    %v124 = vld [vmem:[#allocation4 + $0x18] sm:$0xff]
    %v125 = vld [vmem:[#allocation4 + $0x20] sm:$0xff]
    %v126 = vld [vmem:[#allocation4 + $0x28] sm:$0xff]
    %v127 = vld [vmem:[#allocation4 + $0x30] sm:$0xff]
    %v128 = vld [vmem:[#allocation4 + $0x38] sm:$0xff]
    %v129 = vld [vmem:[%s2] sm:$0xff]
    %v130 = vld [vmem:[%s2 + $0x8] sm:$0xff]
    %v131 = vld [vmem:[%s2 + $0x10] sm:$0xff]
    %v132 = vld [vmem:[%s2 + $0x18] sm:$0xff]
    %v133 = vld [vmem:[%s2 + $0x20] sm:$0xff]
    %v134 = vld [vmem:[%s2 + $0x28] sm:$0xff]
    %v135 = vld [vmem:[%s2 + $0x30] sm:$0xff]
    %v136 = vld [vmem:[%s2 + $0x38] sm:$0xff]
    %v137 = vld [vmem:[%s2 + $0x40] sm:$0xff]
    %v138 = vld [vmem:[%s2 + $0x48] sm:$0xff]
    %v139 = vld [vmem:[%s2 + $0x50] sm:$0xff]
    %v140 = vld [vmem:[%s2 + $0x58] sm:$0xff]
    %v141 = vld [vmem:[%s2 + $0x60] sm:$0xff]
    %v142 = vld [vmem:[%s2 + $0x68] sm:$0xff]
    %v143 = vld [vmem:[%s2 + $0x70] sm:$0xff]
    %v144 = vld [vmem:[%s2 + $0x78] sm:$0xff]
    %v145 = vld [vmem:[%s4] sm:$0x3]
    %v147 = vlaneseq
    %v148 = vshrl.u32 %v147, 7
    %v149 = vsub.s32 0, %v148
    %v150 = vrot.slane %v145, %v149
    %v151 = vlaneseq
    %v152 = vshrl.u32 %v151, 7
    %v153 = vsub.s32 1, %v152
    %v154 = vrot.slane %v145, %v153
    %vm157 = vcmask 523264
    %v159 = vsel %vm157, %v121, 0
    %v162 = vsel %vm157, %v122, 0
    %v165 = vsel %vm157, %v123, 0
    %v168 = vsel %vm157, %v124, 0
    %v171 = vsel %vm157, %v125, 0
    %v174 = vsel %vm157, %v126, 0
    %v177 = vsel %vm157, %v127, 0
    %v180 = vsel %vm157, %v128, 0
    %182 = vmatprep.subr.mxu0 %v130
    %183 = vmatpush1.msra.mxu0 %v129
    %184 = vmatprep.subr.mxu0 %v132
    %185 = vmatpush1.msra.mxu0 %v131
    %186 = vmatprep.subr.mxu0 %v134
    %187 = vmatpush1.msra.mxu0 %v133
    %188 = vmatprep.subr.mxu0 %v136
    %189 = vmatpush1.msra.mxu0 %v135
    %190 = vmatprep.subr.mxu0 %v138
    %191 = vmatpush1.msra.mxu0 %v137
    %192 = vmatprep.subr.mxu0 %v140
    %193 = vmatpush1.msra.mxu0 %v139
    %194 = vmatprep.subr.mxu0 %v142
    %195 = vmatpush1.msra.mxu0 %v141
    %196 = vmatprep.subr.mxu0 %v144
    %197 = vmatpush1.msra.mxu0 %v143
    %198 = vmatprep.subr.mxu0 0.0
    %199 = vmatpush1.msra.mxu0 0.0
    %200 = vmatprep.subr.mxu0 0.0
    %201 = vmatpush1.msra.mxu0 0.0
    %202 = vmatprep.subr.mxu0 0.0
    %203 = vmatpush1.msra.mxu0 0.0
    %204 = vmatprep.subr.mxu0 0.0
    %205 = vmatpush1.msra.mxu0 0.0
    %206 = vmatprep.subr.mxu0 0.0
    %207 = vmatpush1.msra.mxu0 0.0
    %208 = vmatprep.subr.mxu0 0.0
    %209 = vmatpush1.msra.mxu0 0.0
    %210 = vmatprep.subr.mxu0 0.0
    %211 = vmatpush1.msra.mxu0 0.0
    %212 = vmatprep.subr.mxu0 0.0
    %213 = vmatpush1.msra.mxu0 0.0
    %214 = vmatprep.subr.mxu0 0.0
    %215 = vmatpush1.msra.mxu0 0.0
    %216 = vmatprep.subr.mxu0 0.0
    %217 = vmatpush1.msra.mxu0 0.0
    %218 = vmatprep.subr.mxu0 0.0
    %219 = vmatpush1.msra.mxu0 0.0
    %220 = vmatprep.subr.mxu0 0.0
    %221 = vmatpush1.msra.mxu0 0.0
    %222 = vmatprep.subr.mxu0 0.0
    %223 = vmatpush1.msra.mxu0 0.0
    %224 = vmatprep.subr.mxu0 0.0
    %225 = vmatpush1.msra.mxu0 0.0
    %226 = vmatprep.subr.mxu0 0.0
    %227 = vmatpush1.msra.mxu0 0.0
    %228 = vmatprep.subr.mxu0 0.0
    %229 = vmatpush1.msra.mxu0 0.0
    %230 = vmatprep.subr.mxu0 0.0
    %231 = vmatpush1.msra.mxu0 0.0
    %232 = vmatprep.subr.mxu0 0.0
    %233 = vmatpush1.msra.mxu0 0.0
    %234 = vmatprep.subr.mxu0 0.0
    %235 = vmatpush1.msra.mxu0 0.0
    %236 = vmatprep.subr.mxu0 0.0
    %237 = vmatpush1.msra.mxu0 0.0
    %238 = vmatprep.subr.mxu0 0.0
    %239 = vmatpush1.msra.mxu0 0.0
    %240 = vmatprep.subr.mxu0 0.0
    %241 = vmatpush1.msra.mxu0 0.0
    %242 = vmatprep.subr.mxu0 0.0
    %243 = vmatpush1.msra.mxu0 0.0
    %244 = vmatprep.subr.mxu0 0.0
    %245 = vmatpush1.msra.mxu0 0.0
    %246 = vmatprep.mubr.f32.mxu0 0.0
    %247 = vmatmul.mubr.f32.gmra.mrb[0].mxu0 %v159
    %v248 = vpop.f32.mrb[0].mxu0
    %v249 = vadd.f32 %v150, %v248
    %v250 = vpop.f32.mrb[0].mxu0
    %v251 = vadd.f32 %v154, %v250
    %252 = vmatprep.mubr.f32.mxu0 0.0
    %253 = vmatmul.mubr.f32.gmra.mrb[0].mxu0 %v162
    %v254 = vpop.f32.mrb[0].mxu0
    %v255 = vadd.f32 %v150, %v254
    %v256 = vpop.f32.mrb[0].mxu0
    %v257 = vadd.f32 %v154, %v256
    %258 = vmatprep.mubr.f32.mxu0 0.0
    %259 = vmatmul.mubr.f32.gmra.mrb[0].mxu0 %v165
    %v260 = vpop.f32.mrb[0].mxu0
    %v261 = vadd.f32 %v150, %v260
    %v262 = vpop.f32.mrb[0].mxu0
    %v263 = vadd.f32 %v154, %v262
    %264 = vmatprep.mubr.f32.mxu0 0.0
    %265 = vmatmul.mubr.f32.gmra.mrb[0].mxu0 %v168
    %v266 = vpop.f32.mrb[0].mxu0
    %v267 = vadd.f32 %v150, %v266
    %v268 = vpop.f32.mrb[0].mxu0
    %v269 = vadd.f32 %v154, %v268
    %270 = vmatprep.mubr.f32.mxu0 0.0
    %271 = vmatmul.mubr.f32.gmra.mrb[0].mxu0 %v171
    %v272 = vpop.f32.mrb[0].mxu0
    %v273 = vadd.f32 %v150, %v272
    %v274 = vpop.f32.mrb[0].mxu0
    %v275 = vadd.f32 %v154, %v274
    %276 = vmatprep.mubr.f32.mxu0 0.0
    %277 = vmatmul.mubr.f32.gmra.mrb[0].mxu0 %v174
    %v278 = vpop.f32.mrb[0].mxu0
    %v279 = vadd.f32 %v150, %v278
    %v280 = vpop.f32.mrb[0].mxu0
    %v281 = vadd.f32 %v154, %v280
    %282 = vmatprep.mubr.f32.mxu0 0.0
    %283 = vmatmul.mubr.f32.gmra.mrb[0].mxu0 %v177
    %v284 = vpop.f32.mrb[0].mxu0
    %v285 = vadd.f32 %v150, %v284
    %v286 = vpop.f32.mrb[0].mxu0
    %v287 = vadd.f32 %v154, %v286
    %288 = vmatprep.mubr.f32.mxu0 0.0
    %289 = vmatmul.mubr.f32.gmra.mrb[0].mxu0 %v180
    %v290 = vpop.f32.mrb[0].mxu0
    %v291 = vadd.f32 %v150, %v290
    %v292 = vpop.f32.mrb[0].mxu0
    %v293 = vadd.f32 %v154, %v292
    %294 = vdwg.mxu0
    %v295 = vld [vmem:[#allocation7] sm:$0xff]
    %v296 = vld [vmem:[#allocation7 + $0x8] sm:$0xff]
    %v297 = vld [vmem:[#allocation7 + $0x10] sm:$0xff]
    %v298 = vld [vmem:[#allocation7 + $0x18] sm:$0xff]
    %v299 = vld [vmem:[#allocation7 + $0x20] sm:$0xff]
    %v300 = vld [vmem:[#allocation7 + $0x28] sm:$0xff]
    %v301 = vld [vmem:[#allocation7 + $0x30] sm:$0xff]
    %v302 = vld [vmem:[#allocation7 + $0x38] sm:$0xff]
    %v303 = vld [vmem:[%s5] sm:$0xff]
    %v304 = vld [vmem:[%s5 + $0x8] sm:$0xff]
    %v305 = vld [vmem:[%s5 + $0x10] sm:$0xff]
    %v306 = vld [vmem:[%s5 + $0x18] sm:$0xff]
    %v307 = vld [vmem:[%s5 + $0x20] sm:$0xff]
    %v308 = vld [vmem:[%s5 + $0x28] sm:$0xff]
    %v309 = vld [vmem:[%s5 + $0x30] sm:$0xff]
    %v310 = vld [vmem:[%s5 + $0x38] sm:$0xff]
    %v311 = vld [vmem:[%s5 + $0x40] sm:$0xff]
    %v312 = vld [vmem:[%s5 + $0x48] sm:$0xff]
    %v313 = vld [vmem:[%s5 + $0x50] sm:$0xff]
    %v314 = vld [vmem:[%s5 + $0x58] sm:$0xff]
    %v315 = vld [vmem:[%s5 + $0x60] sm:$0xff]
    %v316 = vld [vmem:[%s5 + $0x68] sm:$0xff]
    %v317 = vld [vmem:[%s5 + $0x70] sm:$0xff]
    %v318 = vld [vmem:[%s5 + $0x78] sm:$0xff]
    %v319 = vld [vmem:[%s7] sm:$0x3]
    %v321 = vlaneseq
    %v322 = vshrl.u32 %v321, 7
    %v323 = vsub.s32 0, %v322
    %v324 = vrot.slane %v319, %v323
    %v325 = vlaneseq
    %v326 = vshrl.u32 %v325, 7
    %v327 = vsub.s32 1, %v326
    %v328 = vrot.slane %v319, %v327
    %v332 = vsel %vm157, %v295, 0
    %v335 = vsel %vm157, %v296, 0
    %v338 = vsel %vm157, %v297, 0
    %v341 = vsel %vm157, %v298, 0
    %v344 = vsel %vm157, %v299, 0
    %v347 = vsel %vm157, %v300, 0
    %v350 = vsel %vm157, %v301, 0
    %v353 = vsel %vm157, %v302, 0
    %355 = vmatprep.subr.mxu0 %v304
    %356 = vmatpush1.msra.mxu0 %v303
    %357 = vmatprep.subr.mxu0 %v306
    %358 = vmatpush1.msra.mxu0 %v305
    %359 = vmatprep.subr.mxu0 %v308
    %360 = vmatpush1.msra.mxu0 %v307
    %361 = vmatprep.subr.mxu0 %v310
    %362 = vmatpush1.msra.mxu0 %v309
    %363 = vmatprep.subr.mxu0 %v312
    %364 = vmatpush1.msra.mxu0 %v311
    %365 = vmatprep.subr.mxu0 %v314
    %366 = vmatpush1.msra.mxu0 %v313
    %367 = vmatprep.subr.mxu0 %v316
    %368 = vmatpush1.msra.mxu0 %v315
    %369 = vmatprep.subr.mxu0 %v318
    %370 = vmatpush1.msra.mxu0 %v317
    %371 = vmatprep.subr.mxu0 0.0
    %372 = vmatpush1.msra.mxu0 0.0
    %373 = vmatprep.subr.mxu0 0.0
    %374 = vmatpush1.msra.mxu0 0.0
    %375 = vmatprep.subr.mxu0 0.0
    %376 = vmatpush1.msra.mxu0 0.0
    %377 = vmatprep.subr.mxu0 0.0
    %378 = vmatpush1.msra.mxu0 0.0
    %379 = vmatprep.subr.mxu0 0.0
    %380 = vmatpush1.msra.mxu0 0.0
    %381 = vmatprep.subr.mxu0 0.0
    %382 = vmatpush1.msra.mxu0 0.0
    %383 = vmatprep.subr.mxu0 0.0
    %384 = vmatpush1.msra.mxu0 0.0
    %385 = vmatprep.subr.mxu0 0.0
    %386 = vmatpush1.msra.mxu0 0.0
    %387 = vmatprep.subr.mxu0 0.0
    %388 = vmatpush1.msra.mxu0 0.0
    %389 = vmatprep.subr.mxu0 0.0
    %390 = vmatpush1.msra.mxu0 0.0
    %391 = vmatprep.subr.mxu0 0.0
    %392 = vmatpush1.msra.mxu0 0.0
    %393 = vmatprep.subr.mxu0 0.0
    %394 = vmatpush1.msra.mxu0 0.0
    %395 = vmatprep.subr.mxu0 0.0
    %396 = vmatpush1.msra.mxu0 0.0
    %397 = vmatprep.subr.mxu0 0.0
    %398 = vmatpush1.msra.mxu0 0.0
    %399 = vmatprep.subr.mxu0 0.0
    %400 = vmatpush1.msra.mxu0 0.0
    %401 = vmatprep.subr.mxu0 0.0
    %402 = vmatpush1.msra.mxu0 0.0
    %403 = vmatprep.subr.mxu0 0.0
    %404 = vmatpush1.msra.mxu0 0.0
    %405 = vmatprep.subr.mxu0 0.0
    %406 = vmatpush1.msra.mxu0 0.0
    %407 = vmatprep.subr.mxu0 0.0
    %408 = vmatpush1.msra.mxu0 0.0
    %409 = vmatprep.subr.mxu0 0.0
    %410 = vmatpush1.msra.mxu0 0.0
    %411 = vmatprep.subr.mxu0 0.0
    %412 = vmatpush1.msra.mxu0 0.0
    %413 = vmatprep.subr.mxu0 0.0
    %414 = vmatpush1.msra.mxu0 0.0
    %415 = vmatprep.subr.mxu0 0.0
    %416 = vmatpush1.msra.mxu0 0.0
    %417 = vmatprep.subr.mxu0 0.0
    %418 = vmatpush1.msra.mxu0 0.0
    %419 = vmatprep.mubr.f32.mxu0 0.0
    %420 = vmatmul.mubr.f32.gmra.mrb[0].mxu0 %v332
    %v421 = vpop.f32.mrb[0].mxu0
    %v422 = vadd.f32 %v324, %v421
    %v423 = vpop.f32.mrb[0].mxu0
    %v424 = vadd.f32 %v328, %v423
    %425 = vmatprep.mubr.f32.mxu0 0.0
    %426 = vmatmul.mubr.f32.gmra.mrb[0].mxu0 %v335
    %v427 = vpop.f32.mrb[0].mxu0
    %v428 = vadd.f32 %v324, %v427
    %v429 = vpop.f32.mrb[0].mxu0
    %v430 = vadd.f32 %v328, %v429
    %431 = vmatprep.mubr.f32.mxu0 0.0
    %432 = vmatmul.mubr.f32.gmra.mrb[0].mxu0 %v338
    %v433 = vpop.f32.mrb[0].mxu0
    %v434 = vadd.f32 %v324, %v433
    %v435 = vpop.f32.mrb[0].mxu0
    %v436 = vadd.f32 %v328, %v435
    %437 = vmatprep.mubr.f32.mxu0 0.0
    %438 = vmatmul.mubr.f32.gmra.mrb[0].mxu0 %v341
    %v439 = vpop.f32.mrb[0].mxu0
    %v440 = vadd.f32 %v324, %v439
    %v441 = vpop.f32.mrb[0].mxu0
    %v442 = vadd.f32 %v328, %v441
    %443 = vmatprep.mubr.f32.mxu0 0.0
    %444 = vmatmul.mubr.f32.gmra.mrb[0].mxu0 %v344
    %v445 = vpop.f32.mrb[0].mxu0
    %v446 = vadd.f32 %v324, %v445
    %v447 = vpop.f32.mrb[0].mxu0
    %v448 = vadd.f32 %v328, %v447
    %449 = vmatprep.mubr.f32.mxu0 0.0
    %450 = vmatmul.mubr.f32.gmra.mrb[0].mxu0 %v347
    %v451 = vpop.f32.mrb[0].mxu0
    %v452 = vadd.f32 %v324, %v451
    %v453 = vpop.f32.mrb[0].mxu0
    %v454 = vadd.f32 %v328, %v453
    %455 = vmatprep.mubr.f32.mxu0 0.0
    %456 = vmatmul.mubr.f32.gmra.mrb[0].mxu0 %v350
    %v457 = vpop.f32.mrb[0].mxu0
    %v458 = vadd.f32 %v324, %v457
    %v459 = vpop.f32.mrb[0].mxu0
    %v460 = vadd.f32 %v328, %v459
    %461 = vmatprep.mubr.f32.mxu0 0.0
    %462 = vmatmul.mubr.f32.gmra.mrb[0].mxu0 %v353
    %v463 = vpop.f32.mrb[0].mxu0
    %v464 = vadd.f32 %v324, %v463
    %v465 = vpop.f32.mrb[0].mxu0
    %v466 = vadd.f32 %v328, %v465
    %467 = vdwg.mxu0
    %v469 = vsel %vm157, 0.0, 0
    %471 = vmatprep.subr.mxu0 %v90
    %472 = vmatpush1.msra.mxu0 %v89
    %473 = vmatprep.subr.mxu0 %v92
    %474 = vmatpush1.msra.mxu0 %v91
    %475 = vmatprep.subr.mxu0 %v94
    %476 = vmatpush1.msra.mxu0 %v93
    %477 = vmatprep.subr.mxu0 %v96
    %478 = vmatpush1.msra.mxu0 %v95
    %479 = vmatprep.subr.mxu0 %v98
    %480 = vmatpush1.msra.mxu0 %v97
    %481 = vmatprep.subr.mxu0 %v100
    %482 = vmatpush1.msra.mxu0 %v99
    %483 = vmatprep.subr.mxu0 %v102
    %484 = vmatpush1.msra.mxu0 %v101
    %485 = vmatprep.subr.mxu0 %v104
    %486 = vmatpush1.msra.mxu0 %v103
    %487 = vmatprep.subr.mxu0 0.0
    %488 = vmatpush1.msra.mxu0 0.0
    %489 = vmatprep.subr.mxu0 0.0
    %490 = vmatpush1.msra.mxu0 0.0
    %491 = vmatprep.subr.mxu0 0.0
    %492 = vmatpush1.msra.mxu0 0.0
    %493 = vmatprep.subr.mxu0 0.0
    %494 = vmatpush1.msra.mxu0 0.0
    %495 = vmatprep.subr.mxu0 0.0
    %496 = vmatpush1.msra.mxu0 0.0
    %497 = vmatprep.subr.mxu0 0.0
    %498 = vmatpush1.msra.mxu0 0.0
    %499 = vmatprep.subr.mxu0 0.0
    %500 = vmatpush1.msra.mxu0 0.0
    %501 = vmatprep.subr.mxu0 0.0
    %502 = vmatpush1.msra.mxu0 0.0
    %503 = vmatprep.subr.mxu0 0.0
    %504 = vmatpush1.msra.mxu0 0.0
    %505 = vmatprep.subr.mxu0 0.0
    %506 = vmatpush1.msra.mxu0 0.0
    %507 = vmatprep.subr.mxu0 0.0
    %508 = vmatpush1.msra.mxu0 0.0
    %509 = vmatprep.subr.mxu0 0.0
    %510 = vmatpush1.msra.mxu0 0.0
    %511 = vmatprep.subr.mxu0 0.0
    %512 = vmatpush1.msra.mxu0 0.0
    %513 = vmatprep.subr.mxu0 0.0
    %514 = vmatpush1.msra.mxu0 0.0
    %515 = vmatprep.subr.mxu0 0.0
    %516 = vmatpush1.msra.mxu0 0.0
    %517 = vmatprep.subr.mxu0 0.0
    %518 = vmatpush1.msra.mxu0 0.0
    %519 = vmatprep.subr.mxu0 0.0
    %520 = vmatpush1.msra.mxu0 0.0
    %521 = vmatprep.subr.mxu0 0.0
    %522 = vmatpush1.msra.mxu0 0.0
    %523 = vmatprep.subr.mxu0 0.0
    %524 = vmatpush1.msra.mxu0 0.0
    %525 = vmatprep.subr.mxu0 0.0
    %526 = vmatpush1.msra.mxu0 0.0
    %527 = vmatprep.subr.mxu0 0.0
    %528 = vmatpush1.msra.mxu0 0.0
    %529 = vmatprep.subr.mxu0 0.0
    %530 = vmatpush1.msra.mxu0 0.0
    %531 = vmatprep.subr.mxu0 0.0
    %532 = vmatpush1.msra.mxu0 0.0
    %533 = vmatprep.subr.mxu0 0.0
    %534 = vmatpush1.msra.mxu0 0.0
    %535 = vmatprep.mubr.f32.mxu0 0.0
    %536 = vmatmul.mubr.f32.gmra.mrb[0].mxu0 %v469
    %v537 = vpop.f32.mrb[0].mxu0
    %v538 = vadd.f32 0.0, %v537
    %v539 = vpop.f32.mrb[0].mxu0
    %v540 = vadd.f32 0.0, %v539
    %541 = vdwg.mxu0
    %v542 = vadd.f32 %v249, %v538
    %v543 = vadd.f32 %v251, %v540
    %v544 = vxor.u32 %v542, 2147483648
    %v545 = vmul.f32 %v544, 1.442695
    %v546 = vpow.pop %v545
    %v547 = vadd.f32 %v546, 1.0
    %v548 = vrcp.pop %v547
    %v549 = vmul.f32 1.0, %v548
    %v550 = vtanh.pop %v543
    %v551 = vxor.u32 %v543, 2147483648
    %v552 = vmul.f32 %v551, 1.442695
    %v553 = vpow.pop %v552
    %v554 = vadd.f32 %v553, 1.0
    %v555 = vrcp.pop %v554
    %v556 = vmul.f32 1.0, %v555
    %v557 = vmul.f32 %v549, 0.0
    %v558 = vmul.f32 %v549, %v550
    %560 = vrot.lane.b32.xlu0 %v558, 64
    %v561 = vpop.permute.xlu0 %560
    %v563 = vadd.f32 %v557, %v561
    %v564 = vtanh.pop %v563
    %v565 = vmul.f32 %v556, %v564
    %567 = vrot.lane.b32.xlu0 %v565, 64
    %v568 = vpop.permute.xlu0 %567
    %v570 = vsel %vm157, %v568, %v563
    %571 = vst [vmem:[#allocation2] sm:$0xff] %v570
    %v572 = vsel %vm157, %v568, 0
    %574 = vmatprep.subr.mxu0 %v90
    %575 = vmatpush1.msra.mxu0 %v89
    %576 = vmatprep.subr.mxu0 %v92
    %577 = vmatpush1.msra.mxu0 %v91
    %578 = vmatprep.subr.mxu0 %v94
    %579 = vmatpush1.msra.mxu0 %v93
    %580 = vmatprep.subr.mxu0 %v96
    %581 = vmatpush1.msra.mxu0 %v95
    %582 = vmatprep.subr.mxu0 %v98
    %583 = vmatpush1.msra.mxu0 %v97
    %584 = vmatprep.subr.mxu0 %v100
    %585 = vmatpush1.msra.mxu0 %v99
    %586 = vmatprep.subr.mxu0 %v102
    %587 = vmatpush1.msra.mxu0 %v101
    %588 = vmatprep.subr.mxu0 %v104
    %589 = vmatpush1.msra.mxu0 %v103
    %590 = vmatprep.subr.mxu0 0.0
    %591 = vmatpush1.msra.mxu0 0.0
    %592 = vmatprep.subr.mxu0 0.0
    %593 = vmatpush1.msra.mxu0 0.0
    %594 = vmatprep.subr.mxu0 0.0
    %595 = vmatpush1.msra.mxu0 0.0
    %596 = vmatprep.subr.mxu0 0.0
    %597 = vmatpush1.msra.mxu0 0.0
    %598 = vmatprep.subr.mxu0 0.0
    %599 = vmatpush1.msra.mxu0 0.0
    %600 = vmatprep.subr.mxu0 0.0
    %601 = vmatpush1.msra.mxu0 0.0
    %602 = vmatprep.subr.mxu0 0.0
    %603 = vmatpush1.msra.mxu0 0.0
    %604 = vmatprep.subr.mxu0 0.0
    %605 = vmatpush1.msra.mxu0 0.0
    %606 = vmatprep.subr.mxu0 0.0
    %607 = vmatpush1.msra.mxu0 0.0
    %608 = vmatprep.subr.mxu0 0.0
    %609 = vmatpush1.msra.mxu0 0.0
    %610 = vmatprep.subr.mxu0 0.0
    %611 = vmatpush1.msra.mxu0 0.0
    %612 = vmatprep.subr.mxu0 0.0
    %613 = vmatpush1.msra.mxu0 0.0
    %614 = vmatprep.subr.mxu0 0.0
    %615 = vmatpush1.msra.mxu0 0.0
    %616 = vmatprep.subr.mxu0 0.0
    %617 = vmatpush1.msra.mxu0 0.0
    %618 = vmatprep.subr.mxu0 0.0
    %619 = vmatpush1.msra.mxu0 0.0
    %620 = vmatprep.subr.mxu0 0.0
    %621 = vmatpush1.msra.mxu0 0.0
    %622 = vmatprep.subr.mxu0 0.0
    %623 = vmatpush1.msra.mxu0 0.0
    %624 = vmatprep.subr.mxu0 0.0
    %625 = vmatpush1.msra.mxu0 0.0
    %626 = vmatprep.subr.mxu0 0.0
    %627 = vmatpush1.msra.mxu0 0.0
    %628 = vmatprep.subr.mxu0 0.0
    %629 = vmatpush1.msra.mxu0 0.0
    %630 = vmatprep.subr.mxu0 0.0
    %631 = vmatpush1.msra.mxu0 0.0
    %632 = vmatprep.subr.mxu0 0.0
    %633 = vmatpush1.msra.mxu0 0.0
    %634 = vmatprep.subr.mxu0 0.0
    %635 = vmatpush1.msra.mxu0 0.0
    %636 = vmatprep.subr.mxu0 0.0
    %637 = vmatpush1.msra.mxu0 0.0
    %638 = vmatprep.mubr.f32.mxu0 0.0
    %639 = vmatmul.mubr.f32.gmra.mrb[0].mxu0 %v572
    %v640 = vpop.f32.mrb[0].mxu0
    %v641 = vadd.f32 0.0, %v640
    %v642 = vpop.f32.mrb[0].mxu0
    %v643 = vadd.f32 0.0, %v642
    %644 = vdwg.mxu0
    %v645 = vadd.f32 %v255, %v641
    %v646 = vadd.f32 %v257, %v643
    %v647 = vxor.u32 %v645, 2147483648
    %v648 = vmul.f32 %v647, 1.442695
    %v649 = vpow.pop %v648
    %v650 = vadd.f32 %v649, 1.0
    %v651 = vrcp.pop %v650
    %v652 = vmul.f32 1.0, %v651
    %v653 = vtanh.pop %v646
    %v654 = vxor.u32 %v646, 2147483648
    %v655 = vmul.f32 %v654, 1.442695
    %v656 = vpow.pop %v655
    %v657 = vadd.f32 %v656, 1.0
    %v658 = vrcp.pop %v657
    %v659 = vmul.f32 1.0, %v658
    %v660 = vmul.f32 %v652, %v563
    %v661 = vmul.f32 %v652, %v653
    %663 = vrot.lane.b32.xlu0 %v661, 64
    %v664 = vpop.permute.xlu0 %663
    %v666 = vadd.f32 %v660, %v664
    %v667 = vtanh.pop %v666
    %v668 = vmul.f32 %v659, %v667
    %670 = vrot.lane.b32.xlu0 %v668, 64
    %v671 = vpop.permute.xlu0 %670
    %v673 = vsel %vm157, %v671, %v666
    %674 = vst [vmem:[#allocation2 + $0x8] sm:$0xff] %v673
    %v675 = vsel %vm157, %v671, 0
    %677 = vmatprep.subr.mxu0 %v90
    %678 = vmatpush1.msra.mxu0 %v89
    %679 = vmatprep.subr.mxu0 %v92
    %680 = vmatpush1.msra.mxu0 %v91
    %681 = vmatprep.subr.mxu0 %v94
    %682 = vmatpush1.msra.mxu0 %v93
    %683 = vmatprep.subr.mxu0 %v96
    %684 = vmatpush1.msra.mxu0 %v95
    %685 = vmatprep.subr.mxu0 %v98
    %686 = vmatpush1.msra.mxu0 %v97
    %687 = vmatprep.subr.mxu0 %v100
    %688 = vmatpush1.msra.mxu0 %v99
    %689 = vmatprep.subr.mxu0 %v102
    %690 = vmatpush1.msra.mxu0 %v101
    %691 = vmatprep.subr.mxu0 %v104
    %692 = vmatpush1.msra.mxu0 %v103
    %693 = vmatprep.subr.mxu0 0.0
    %694 = vmatpush1.msra.mxu0 0.0
    %695 = vmatprep.subr.mxu0 0.0
    %696 = vmatpush1.msra.mxu0 0.0
    %697 = vmatprep.subr.mxu0 0.0
    %698 = vmatpush1.msra.mxu0 0.0
    %699 = vmatprep.subr.mxu0 0.0
    %700 = vmatpush1.msra.mxu0 0.0
    %701 = vmatprep.subr.mxu0 0.0
    %702 = vmatpush1.msra.mxu0 0.0
    %703 = vmatprep.subr.mxu0 0.0
    %704 = vmatpush1.msra.mxu0 0.0
    %705 = vmatprep.subr.mxu0 0.0
    %706 = vmatpush1.msra.mxu0 0.0
    %707 = vmatprep.subr.mxu0 0.0
    %708 = vmatpush1.msra.mxu0 0.0
    %709 = vmatprep.subr.mxu0 0.0
    %710 = vmatpush1.msra.mxu0 0.0
    %711 = vmatprep.subr.mxu0 0.0
    %712 = vmatpush1.msra.mxu0 0.0
    %713 = vmatprep.subr.mxu0 0.0
    %714 = vmatpush1.msra.mxu0 0.0
    %715 = vmatprep.subr.mxu0 0.0
    %716 = vmatpush1.msra.mxu0 0.0
    %717 = vmatprep.subr.mxu0 0.0
    %718 = vmatpush1.msra.mxu0 0.0
    %719 = vmatprep.subr.mxu0 0.0
    %720 = vmatpush1.msra.mxu0 0.0
    %721 = vmatprep.subr.mxu0 0.0
    %722 = vmatpush1.msra.mxu0 0.0
    %723 = vmatprep.subr.mxu0 0.0
    %724 = vmatpush1.msra.mxu0 0.0
    %725 = vmatprep.subr.mxu0 0.0
    %726 = vmatpush1.msra.mxu0 0.0
    %727 = vmatprep.subr.mxu0 0.0
    %728 = vmatpush1.msra.mxu0 0.0
    %729 = vmatprep.subr.mxu0 0.0
    %730 = vmatpush1.msra.mxu0 0.0
    %731 = vmatprep.subr.mxu0 0.0
    %732 = vmatpush1.msra.mxu0 0.0
    %733 = vmatprep.subr.mxu0 0.0
    %734 = vmatpush1.msra.mxu0 0.0
    %735 = vmatprep.subr.mxu0 0.0
    %736 = vmatpush1.msra.mxu0 0.0
    %737 = vmatprep.subr.mxu0 0.0
    %738 = vmatpush1.msra.mxu0 0.0
    %739 = vmatprep.subr.mxu0 0.0
    %740 = vmatpush1.msra.mxu0 0.0
    %741 = vmatprep.mubr.f32.mxu0 0.0
    %742 = vmatmul.mubr.f32.gmra.mrb[0].mxu0 %v675
    %v743 = vpop.f32.mrb[0].mxu0
    %v744 = vadd.f32 0.0, %v743
    %v745 = vpop.f32.mrb[0].mxu0
    %v746 = vadd.f32 0.0, %v745
    %747 = vdwg.mxu0
    %v748 = vadd.f32 %v261, %v744
    %v749 = vadd.f32 %v263, %v746
    %v750 = vxor.u32 %v748, 2147483648
    %v751 = vmul.f32 %v750, 1.442695
    %v752 = vpow.pop %v751
    %v753 = vadd.f32 %v752, 1.0
    %v754 = vrcp.pop %v753
    %v755 = vmul.f32 1.0, %v754
    %v756 = vtanh.pop %v749
    %v757 = vxor.u32 %v749, 2147483648
    %v758 = vmul.f32 %v757, 1.442695
    %v759 = vpow.pop %v758
    %v760 = vadd.f32 %v759, 1.0
    %v761 = vrcp.pop %v760
    %v762 = vmul.f32 1.0, %v761
    %v763 = vmul.f32 %v755, %v666
    %v764 = vmul.f32 %v755, %v756
    %766 = vrot.lane.b32.xlu0 %v764, 64
    %v767 = vpop.permute.xlu0 %766
    %v769 = vadd.f32 %v763, %v767
    %v770 = vtanh.pop %v769
    %v771 = vmul.f32 %v762, %v770
    %773 = vrot.lane.b32.xlu0 %v771, 64
    %v774 = vpop.permute.xlu0 %773
    %v776 = vsel %vm157, %v774, %v769
    %777 = vst [vmem:[#allocation2 + $0x10] sm:$0xff] %v776
    %v778 = vsel %vm157, %v774, 0
    %780 = vmatprep.subr.mxu0 %v90
    %781 = vmatpush1.msra.mxu0 %v89
    %782 = vmatprep.subr.mxu0 %v92
    %783 = vmatpush1.msra.mxu0 %v91
    %784 = vmatprep.subr.mxu0 %v94
    %785 = vmatpush1.msra.mxu0 %v93
    %786 = vmatprep.subr.mxu0 %v96
    %787 = vmatpush1.msra.mxu0 %v95
    %788 = vmatprep.subr.mxu0 %v98
    %789 = vmatpush1.msra.mxu0 %v97
    %790 = vmatprep.subr.mxu0 %v100
    %791 = vmatpush1.msra.mxu0 %v99
    %792 = vmatprep.subr.mxu0 %v102
    %793 = vmatpush1.msra.mxu0 %v101
    %794 = vmatprep.subr.mxu0 %v104
    %795 = vmatpush1.msra.mxu0 %v103
    %796 = vmatprep.subr.mxu0 0.0
    %797 = vmatpush1.msra.mxu0 0.0
    %798 = vmatprep.subr.mxu0 0.0
    %799 = vmatpush1.msra.mxu0 0.0
    %800 = vmatprep.subr.mxu0 0.0
    %801 = vmatpush1.msra.mxu0 0.0
    %802 = vmatprep.subr.mxu0 0.0
    %803 = vmatpush1.msra.mxu0 0.0
    %804 = vmatprep.subr.mxu0 0.0
    %805 = vmatpush1.msra.mxu0 0.0
    %806 = vmatprep.subr.mxu0 0.0
    %807 = vmatpush1.msra.mxu0 0.0
    %808 = vmatprep.subr.mxu0 0.0
    %809 = vmatpush1.msra.mxu0 0.0
    %810 = vmatprep.subr.mxu0 0.0
    %811 = vmatpush1.msra.mxu0 0.0
    %812 = vmatprep.subr.mxu0 0.0
    %813 = vmatpush1.msra.mxu0 0.0
    %814 = vmatprep.subr.mxu0 0.0
    %815 = vmatpush1.msra.mxu0 0.0
    %816 = vmatprep.subr.mxu0 0.0
    %817 = vmatpush1.msra.mxu0 0.0
    %818 = vmatprep.subr.mxu0 0.0
    %819 = vmatpush1.msra.mxu0 0.0
    %820 = vmatprep.subr.mxu0 0.0
    %821 = vmatpush1.msra.mxu0 0.0
    %822 = vmatprep.subr.mxu0 0.0
    %823 = vmatpush1.msra.mxu0 0.0
    %824 = vmatprep.subr.mxu0 0.0
    %825 = vmatpush1.msra.mxu0 0.0
    %826 = vmatprep.subr.mxu0 0.0
    %827 = vmatpush1.msra.mxu0 0.0
    %828 = vmatprep.subr.mxu0 0.0
    %829 = vmatpush1.msra.mxu0 0.0
    %830 = vmatprep.subr.mxu0 0.0
    %831 = vmatpush1.msra.mxu0 0.0
    %832 = vmatprep.subr.mxu0 0.0
    %833 = vmatpush1.msra.mxu0 0.0
    %834 = vmatprep.subr.mxu0 0.0
    %835 = vmatpush1.msra.mxu0 0.0
    %836 = vmatprep.subr.mxu0 0.0
    %837 = vmatpush1.msra.mxu0 0.0
    %838 = vmatprep.subr.mxu0 0.0
    %839 = vmatpush1.msra.mxu0 0.0
    %840 = vmatprep.subr.mxu0 0.0
    %841 = vmatpush1.msra.mxu0 0.0
    %842 = vmatprep.subr.mxu0 0.0
    %843 = vmatpush1.msra.mxu0 0.0
    %844 = vmatprep.mubr.f32.mxu0 0.0
    %845 = vmatmul.mubr.f32.gmra.mrb[0].mxu0 %v778
    %v846 = vpop.f32.mrb[0].mxu0
    %v847 = vadd.f32 0.0, %v846
    %v848 = vpop.f32.mrb[0].mxu0
    %v849 = vadd.f32 0.0, %v848
    %850 = vdwg.mxu0
    %v851 = vadd.f32 %v267, %v847
    %v852 = vadd.f32 %v269, %v849
    %v853 = vxor.u32 %v851, 2147483648
    %v854 = vmul.f32 %v853, 1.442695
    %v855 = vpow.pop %v854
    %v856 = vadd.f32 %v855, 1.0
    %v857 = vrcp.pop %v856
    %v858 = vmul.f32 1.0, %v857
    %v859 = vtanh.pop %v852
    %v860 = vxor.u32 %v852, 2147483648
    %v861 = vmul.f32 %v860, 1.442695
    %v862 = vpow.pop %v861
    %v863 = vadd.f32 %v862, 1.0
    %v864 = vrcp.pop %v863
    %v865 = vmul.f32 1.0, %v864
    %v866 = vmul.f32 %v858, %v769
    %v867 = vmul.f32 %v858, %v859
    %869 = vrot.lane.b32.xlu0 %v867, 64
    %v870 = vpop.permute.xlu0 %869
    %v872 = vadd.f32 %v866, %v870
    %v873 = vtanh.pop %v872
    %v874 = vmul.f32 %v865, %v873
    %876 = vrot.lane.b32.xlu0 %v874, 64
    %v877 = vpop.permute.xlu0 %876
    %v879 = vsel %vm157, %v877, %v872
    %880 = vst [vmem:[#allocation2 + $0x18] sm:$0xff] %v879
    %v881 = vsel %vm157, %v877, 0
    %883 = vmatprep.subr.mxu0 %v90
    %884 = vmatpush1.msra.mxu0 %v89
    %885 = vmatprep.subr.mxu0 %v92
    %886 = vmatpush1.msra.mxu0 %v91
    %887 = vmatprep.subr.mxu0 %v94
    %888 = vmatpush1.msra.mxu0 %v93
    %889 = vmatprep.subr.mxu0 %v96
    %890 = vmatpush1.msra.mxu0 %v95
    %891 = vmatprep.subr.mxu0 %v98
    %892 = vmatpush1.msra.mxu0 %v97
    %893 = vmatprep.subr.mxu0 %v100
    %894 = vmatpush1.msra.mxu0 %v99
    %895 = vmatprep.subr.mxu0 %v102
    %896 = vmatpush1.msra.mxu0 %v101
    %897 = vmatprep.subr.mxu0 %v104
    %898 = vmatpush1.msra.mxu0 %v103
    %899 = vmatprep.subr.mxu0 0.0
    %900 = vmatpush1.msra.mxu0 0.0
    %901 = vmatprep.subr.mxu0 0.0
    %902 = vmatpush1.msra.mxu0 0.0
    %903 = vmatprep.subr.mxu0 0.0
    %904 = vmatpush1.msra.mxu0 0.0
    %905 = vmatprep.subr.mxu0 0.0
    %906 = vmatpush1.msra.mxu0 0.0
    %907 = vmatprep.subr.mxu0 0.0
    %908 = vmatpush1.msra.mxu0 0.0
    %909 = vmatprep.subr.mxu0 0.0
    %910 = vmatpush1.msra.mxu0 0.0
    %911 = vmatprep.subr.mxu0 0.0
    %912 = vmatpush1.msra.mxu0 0.0
    %913 = vmatprep.subr.mxu0 0.0
    %914 = vmatpush1.msra.mxu0 0.0
    %915 = vmatprep.subr.mxu0 0.0
    %916 = vmatpush1.msra.mxu0 0.0
    %917 = vmatprep.subr.mxu0 0.0
    %918 = vmatpush1.msra.mxu0 0.0
    %919 = vmatprep.subr.mxu0 0.0
    %920 = vmatpush1.msra.mxu0 0.0
    %921 = vmatprep.subr.mxu0 0.0
    %922 = vmatpush1.msra.mxu0 0.0
    %923 = vmatprep.subr.mxu0 0.0
    %924 = vmatpush1.msra.mxu0 0.0
    %925 = vmatprep.subr.mxu0 0.0
    %926 = vmatpush1.msra.mxu0 0.0
    %927 = vmatprep.subr.mxu0 0.0
    %928 = vmatpush1.msra.mxu0 0.0
    %929 = vmatprep.subr.mxu0 0.0
    %930 = vmatpush1.msra.mxu0 0.0
    %931 = vmatprep.subr.mxu0 0.0
    %932 = vmatpush1.msra.mxu0 0.0
    %933 = vmatprep.subr.mxu0 0.0
    %934 = vmatpush1.msra.mxu0 0.0
    %935 = vmatprep.subr.mxu0 0.0
    %936 = vmatpush1.msra.mxu0 0.0
    %937 = vmatprep.subr.mxu0 0.0
    %938 = vmatpush1.msra.mxu0 0.0
    %939 = vmatprep.subr.mxu0 0.0
    %940 = vmatpush1.msra.mxu0 0.0
    %941 = vmatprep.subr.mxu0 0.0
    %942 = vmatpush1.msra.mxu0 0.0
    %943 = vmatprep.subr.mxu0 0.0
    %944 = vmatpush1.msra.mxu0 0.0
    %945 = vmatprep.subr.mxu0 0.0
    %946 = vmatpush1.msra.mxu0 0.0
    %947 = vmatprep.mubr.f32.mxu0 0.0
    %948 = vmatmul.mubr.f32.gmra.mrb[0].mxu0 %v881
    %v949 = vpop.f32.mrb[0].mxu0
    %v950 = vadd.f32 0.0, %v949
    %v951 = vpop.f32.mrb[0].mxu0
    %v952 = vadd.f32 0.0, %v951
    %953 = vdwg.mxu0
    %v954 = vadd.f32 %v273, %v950
    %v955 = vadd.f32 %v275, %v952
    %v956 = vxor.u32 %v954, 2147483648
    %v957 = vmul.f32 %v956, 1.442695
    %v958 = vpow.pop %v957
    %v959 = vadd.f32 %v958, 1.0
    %v960 = vrcp.pop %v959
    %v961 = vmul.f32 1.0, %v960
    %v962 = vtanh.pop %v955
    %v963 = vxor.u32 %v955, 2147483648
    %v964 = vmul.f32 %v963, 1.442695
    %v965 = vpow.pop %v964
    %v966 = vadd.f32 %v965, 1.0
    %v967 = vrcp.pop %v966
    %v968 = vmul.f32 1.0, %v967
    %v969 = vmul.f32 %v961, %v872
    %v970 = vmul.f32 %v961, %v962
    %972 = vrot.lane.b32.xlu0 %v970, 64
    %v973 = vpop.permute.xlu0 %972
    %v975 = vadd.f32 %v969, %v973
    %v976 = vtanh.pop %v975
    %v977 = vmul.f32 %v968, %v976
    %979 = vrot.lane.b32.xlu0 %v977, 64
    %v980 = vpop.permute.xlu0 %979
    %v982 = vsel %vm157, %v980, %v975
    %983 = vst [vmem:[#allocation2 + $0x20] sm:$0xff] %v982
    %v984 = vsel %vm157, %v980, 0
    %986 = vmatprep.subr.mxu0 %v90
    %987 = vmatpush1.msra.mxu0 %v89
    %988 = vmatprep.subr.mxu0 %v92
    %989 = vmatpush1.msra.mxu0 %v91
    %990 = vmatprep.subr.mxu0 %v94
    %991 = vmatpush1.msra.mxu0 %v93
    %992 = vmatprep.subr.mxu0 %v96
    %993 = vmatpush1.msra.mxu0 %v95
    %994 = vmatprep.subr.mxu0 %v98
    %995 = vmatpush1.msra.mxu0 %v97
    %996 = vmatprep.subr.mxu0 %v100
    %997 = vmatpush1.msra.mxu0 %v99
    %998 = vmatprep.subr.mxu0 %v102
    %999 = vmatpush1.msra.mxu0 %v101
    %1000 = vmatprep.subr.mxu0 %v104
    %1001 = vmatpush1.msra.mxu0 %v103
    %1002 = vmatprep.subr.mxu0 0.0
    %1003 = vmatpush1.msra.mxu0 0.0
    %1004 = vmatprep.subr.mxu0 0.0
    %1005 = vmatpush1.msra.mxu0 0.0
    %1006 = vmatprep.subr.mxu0 0.0
    %1007 = vmatpush1.msra.mxu0 0.0
    %1008 = vmatprep.subr.mxu0 0.0
    %1009 = vmatpush1.msra.mxu0 0.0
    %1010 = vmatprep.subr.mxu0 0.0
    %1011 = vmatpush1.msra.mxu0 0.0
    %1012 = vmatprep.subr.mxu0 0.0
    %1013 = vmatpush1.msra.mxu0 0.0
    %1014 = vmatprep.subr.mxu0 0.0
    %1015 = vmatpush1.msra.mxu0 0.0
    %1016 = vmatprep.subr.mxu0 0.0
    %1017 = vmatpush1.msra.mxu0 0.0
    %1018 = vmatprep.subr.mxu0 0.0
    %1019 = vmatpush1.msra.mxu0 0.0
    %1020 = vmatprep.subr.mxu0 0.0
    %1021 = vmatpush1.msra.mxu0 0.0
    %1022 = vmatprep.subr.mxu0 0.0
    %1023 = vmatpush1.msra.mxu0 0.0
    %1024 = vmatprep.subr.mxu0 0.0
    %1025 = vmatpush1.msra.mxu0 0.0
    %1026 = vmatprep.subr.mxu0 0.0
    %1027 = vmatpush1.msra.mxu0 0.0
    %1028 = vmatprep.subr.mxu0 0.0
    %1029 = vmatpush1.msra.mxu0 0.0
    %1030 = vmatprep.subr.mxu0 0.0
    %1031 = vmatpush1.msra.mxu0 0.0
    %1032 = vmatprep.subr.mxu0 0.0
    %1033 = vmatpush1.msra.mxu0 0.0
    %1034 = vmatprep.subr.mxu0 0.0
    %1035 = vmatpush1.msra.mxu0 0.0
    %1036 = vmatprep.subr.mxu0 0.0
    %1037 = vmatpush1.msra.mxu0 0.0
    %1038 = vmatprep.subr.mxu0 0.0
    %1039 = vmatpush1.msra.mxu0 0.0
    %1040 = vmatprep.subr.mxu0 0.0
    %1041 = vmatpush1.msra.mxu0 0.0
    %1042 = vmatprep.subr.mxu0 0.0
    %1043 = vmatpush1.msra.mxu0 0.0
    %1044 = vmatprep.subr.mxu0 0.0
    %1045 = vmatpush1.msra.mxu0 0.0
    %1046 = vmatprep.subr.mxu0 0.0
    %1047 = vmatpush1.msra.mxu0 0.0
    %1048 = vmatprep.subr.mxu0 0.0
    %1049 = vmatpush1.msra.mxu0 0.0
    %1050 = vmatprep.mubr.f32.mxu0 0.0
    %1051 = vmatmul.mubr.f32.gmra.mrb[0].mxu0 %v984
    %v1052 = vpop.f32.mrb[0].mxu0
    %v1053 = vadd.f32 0.0, %v1052
    %v1054 = vpop.f32.mrb[0].mxu0
    %v1055 = vadd.f32 0.0, %v1054
    %1056 = vdwg.mxu0
    %v1057 = vadd.f32 %v279, %v1053
    %v1058 = vadd.f32 %v281, %v1055
    %v1059 = vxor.u32 %v1057, 2147483648
    %v1060 = vmul.f32 %v1059, 1.442695
    %v1061 = vpow.pop %v1060
    %v1062 = vadd.f32 %v1061, 1.0
    %v1063 = vrcp.pop %v1062
    %v1064 = vmul.f32 1.0, %v1063
    %v1065 = vtanh.pop %v1058
    %v1066 = vxor.u32 %v1058, 2147483648
    %v1067 = vmul.f32 %v1066, 1.442695
    %v1068 = vpow.pop %v1067
    %v1069 = vadd.f32 %v1068, 1.0
    %v1070 = vrcp.pop %v1069
    %v1071 = vmul.f32 1.0, %v1070
    %v1072 = vmul.f32 %v1064, %v975
    %v1073 = vmul.f32 %v1064, %v1065
    %1075 = vrot.lane.b32.xlu0 %v1073, 64
    %v1076 = vpop.permute.xlu0 %1075
    %v1078 = vadd.f32 %v1072, %v1076
    %v1079 = vtanh.pop %v1078
    %v1080 = vmul.f32 %v1071, %v1079
    %1082 = vrot.lane.b32.xlu0 %v1080, 64
    %v1083 = vpop.permute.xlu0 %1082
    %v1085 = vsel %vm157, %v1083, %v1078
    %1086 = vst [vmem:[#allocation2 + $0x28] sm:$0xff] %v1085
    %v1087 = vsel %vm157, %v1083, 0
    %1089 = vmatprep.subr.mxu0 %v90
    %1090 = vmatpush1.msra.mxu0 %v89
    %1091 = vmatprep.subr.mxu0 %v92
    %1092 = vmatpush1.msra.mxu0 %v91
    %1093 = vmatprep.subr.mxu0 %v94
    %1094 = vmatpush1.msra.mxu0 %v93
    %1095 = vmatprep.subr.mxu0 %v96
    %1096 = vmatpush1.msra.mxu0 %v95
    %1097 = vmatprep.subr.mxu0 %v98
    %1098 = vmatpush1.msra.mxu0 %v97
    %1099 = vmatprep.subr.mxu0 %v100
    %1100 = vmatpush1.msra.mxu0 %v99
    %1101 = vmatprep.subr.mxu0 %v102
    %1102 = vmatpush1.msra.mxu0 %v101
    %1103 = vmatprep.subr.mxu0 %v104
    %1104 = vmatpush1.msra.mxu0 %v103
    %1105 = vmatprep.subr.mxu0 0.0
    %1106 = vmatpush1.msra.mxu0 0.0
    %1107 = vmatprep.subr.mxu0 0.0
    %1108 = vmatpush1.msra.mxu0 0.0
    %1109 = vmatprep.subr.mxu0 0.0
    %1110 = vmatpush1.msra.mxu0 0.0
    %1111 = vmatprep.subr.mxu0 0.0
    %1112 = vmatpush1.msra.mxu0 0.0
    %1113 = vmatprep.subr.mxu0 0.0
    %1114 = vmatpush1.msra.mxu0 0.0
    %1115 = vmatprep.subr.mxu0 0.0
    %1116 = vmatpush1.msra.mxu0 0.0
    %1117 = vmatprep.subr.mxu0 0.0
    %1118 = vmatpush1.msra.mxu0 0.0
    %1119 = vmatprep.subr.mxu0 0.0
    %1120 = vmatpush1.msra.mxu0 0.0
    %1121 = vmatprep.subr.mxu0 0.0
    %1122 = vmatpush1.msra.mxu0 0.0
    %1123 = vmatprep.subr.mxu0 0.0
    %1124 = vmatpush1.msra.mxu0 0.0
    %1125 = vmatprep.subr.mxu0 0.0
    %1126 = vmatpush1.msra.mxu0 0.0
    %1127 = vmatprep.subr.mxu0 0.0
    %1128 = vmatpush1.msra.mxu0 0.0
    %1129 = vmatprep.subr.mxu0 0.0
    %1130 = vmatpush1.msra.mxu0 0.0
    %1131 = vmatprep.subr.mxu0 0.0
    %1132 = vmatpush1.msra.mxu0 0.0
    %1133 = vmatprep.subr.mxu0 0.0
    %1134 = vmatpush1.msra.mxu0 0.0
    %1135 = vmatprep.subr.mxu0 0.0
    %1136 = vmatpush1.msra.mxu0 0.0
    %1137 = vmatprep.subr.mxu0 0.0
    %1138 = vmatpush1.msra.mxu0 0.0
    %1139 = vmatprep.subr.mxu0 0.0
    %1140 = vmatpush1.msra.mxu0 0.0
    %1141 = vmatprep.subr.mxu0 0.0
    %1142 = vmatpush1.msra.mxu0 0.0
    %1143 = vmatprep.subr.mxu0 0.0
    %1144 = vmatpush1.msra.mxu0 0.0
    %1145 = vmatprep.subr.mxu0 0.0
    %1146 = vmatpush1.msra.mxu0 0.0
    %1147 = vmatprep.subr.mxu0 0.0
    %1148 = vmatpush1.msra.mxu0 0.0
    %1149 = vmatprep.subr.mxu0 0.0
    %1150 = vmatpush1.msra.mxu0 0.0
    %1151 = vmatprep.subr.mxu0 0.0
    %1152 = vmatpush1.msra.mxu0 0.0
    %1153 = vmatprep.mubr.f32.mxu0 0.0
    %1154 = vmatmul.mubr.f32.gmra.mrb[0].mxu0 %v1087
    %v1155 = vpop.f32.mrb[0].mxu0
    %v1156 = vadd.f32 0.0, %v1155
    %v1157 = vpop.f32.mrb[0].mxu0
    %v1158 = vadd.f32 0.0, %v1157
    %1159 = vdwg.mxu0
    %v1160 = vadd.f32 %v285, %v1156
    %v1161 = vadd.f32 %v287, %v1158
    %v1162 = vxor.u32 %v1160, 2147483648
    %v1163 = vmul.f32 %v1162, 1.442695
    %v1164 = vpow.pop %v1163
    %v1165 = vadd.f32 %v1164, 1.0
    %v1166 = vrcp.pop %v1165
    %v1167 = vmul.f32 1.0, %v1166
    %v1168 = vtanh.pop %v1161
    %v1169 = vxor.u32 %v1161, 2147483648
    %v1170 = vmul.f32 %v1169, 1.442695
    %v1171 = vpow.pop %v1170
    %v1172 = vadd.f32 %v1171, 1.0
    %v1173 = vrcp.pop %v1172
    %v1174 = vmul.f32 1.0, %v1173
    %v1175 = vmul.f32 %v1167, %v1078
    %v1176 = vmul.f32 %v1167, %v1168
    %1178 = vrot.lane.b32.xlu0 %v1176, 64
    %v1179 = vpop.permute.xlu0 %1178
    %v1181 = vadd.f32 %v1175, %v1179
    %v1182 = vtanh.pop %v1181
    %v1183 = vmul.f32 %v1174, %v1182
    %1185 = vrot.lane.b32.xlu0 %v1183, 64
    %v1186 = vpop.permute.xlu0 %1185
    %v1188 = vsel %vm157, %v1186, %v1181
    %1189 = vst [vmem:[#allocation2 + $0x30] sm:$0xff] %v1188
    %v1190 = vsel %vm157, %v1186, 0
    %1192 = vmatprep.subr.mxu0 %v90
    %1193 = vmatpush1.msra.mxu0 %v89
    %1194 = vmatprep.subr.mxu0 %v92
    %1195 = vmatpush1.msra.mxu0 %v91
    %1196 = vmatprep.subr.mxu0 %v94
    %1197 = vmatpush1.msra.mxu0 %v93
    %1198 = vmatprep.subr.mxu0 %v96
    %1199 = vmatpush1.msra.mxu0 %v95
    %1200 = vmatprep.subr.mxu0 %v98
    %1201 = vmatpush1.msra.mxu0 %v97
    %1202 = vmatprep.subr.mxu0 %v100
    %1203 = vmatpush1.msra.mxu0 %v99
    %1204 = vmatprep.subr.mxu0 %v102
    %1205 = vmatpush1.msra.mxu0 %v101
    %1206 = vmatprep.subr.mxu0 %v104
    %1207 = vmatpush1.msra.mxu0 %v103
    %1208 = vmatprep.subr.mxu0 0.0
    %1209 = vmatpush1.msra.mxu0 0.0
    %1210 = vmatprep.subr.mxu0 0.0
    %1211 = vmatpush1.msra.mxu0 0.0
    %1212 = vmatprep.subr.mxu0 0.0
    %1213 = vmatpush1.msra.mxu0 0.0
    %1214 = vmatprep.subr.mxu0 0.0
    %1215 = vmatpush1.msra.mxu0 0.0
    %1216 = vmatprep.subr.mxu0 0.0
    %1217 = vmatpush1.msra.mxu0 0.0
    %1218 = vmatprep.subr.mxu0 0.0
    %1219 = vmatpush1.msra.mxu0 0.0
    %1220 = vmatprep.subr.mxu0 0.0
    %1221 = vmatpush1.msra.mxu0 0.0
    %1222 = vmatprep.subr.mxu0 0.0
    %1223 = vmatpush1.msra.mxu0 0.0
    %1224 = vmatprep.subr.mxu0 0.0
    %1225 = vmatpush1.msra.mxu0 0.0
    %1226 = vmatprep.subr.mxu0 0.0
    %1227 = vmatpush1.msra.mxu0 0.0
    %1228 = vmatprep.subr.mxu0 0.0
    %1229 = vmatpush1.msra.mxu0 0.0
    %1230 = vmatprep.subr.mxu0 0.0
    %1231 = vmatpush1.msra.mxu0 0.0
    %1232 = vmatprep.subr.mxu0 0.0
    %1233 = vmatpush1.msra.mxu0 0.0
    %1234 = vmatprep.subr.mxu0 0.0
    %1235 = vmatpush1.msra.mxu0 0.0
    %1236 = vmatprep.subr.mxu0 0.0
    %1237 = vmatpush1.msra.mxu0 0.0
    %1238 = vmatprep.subr.mxu0 0.0
    %1239 = vmatpush1.msra.mxu0 0.0
    %1240 = vmatprep.subr.mxu0 0.0
    %1241 = vmatpush1.msra.mxu0 0.0
    %1242 = vmatprep.subr.mxu0 0.0
    %1243 = vmatpush1.msra.mxu0 0.0
    %1244 = vmatprep.subr.mxu0 0.0
    %1245 = vmatpush1.msra.mxu0 0.0
    %1246 = vmatprep.subr.mxu0 0.0
    %1247 = vmatpush1.msra.mxu0 0.0
    %1248 = vmatprep.subr.mxu0 0.0
    %1249 = vmatpush1.msra.mxu0 0.0
    %1250 = vmatprep.subr.mxu0 0.0
    %1251 = vmatpush1.msra.mxu0 0.0
    %1252 = vmatprep.subr.mxu0 0.0
    %1253 = vmatpush1.msra.mxu0 0.0
    %1254 = vmatprep.subr.mxu0 0.0
    %1255 = vmatpush1.msra.mxu0 0.0
    %1256 = vmatprep.mubr.f32.mxu0 0.0
    %1257 = vmatmul.mubr.f32.gmra.mrb[0].mxu0 %v1190
    %v1258 = vpop.f32.mrb[0].mxu0
    %v1259 = vadd.f32 0.0, %v1258
    %v1260 = vpop.f32.mrb[0].mxu0
    %v1261 = vadd.f32 0.0, %v1260
    %1262 = vdwg.mxu0
    %v1263 = vadd.f32 %v291, %v1259
    %v1264 = vadd.f32 %v293, %v1261
    %v1265 = vxor.u32 %v1263, 2147483648
    %v1266 = vmul.f32 %v1265, 1.442695
    %v1267 = vpow.pop %v1266
    %v1268 = vadd.f32 %v1267, 1.0
    %v1269 = vrcp.pop %v1268
    %v1270 = vmul.f32 1.0, %v1269
    %v1271 = vtanh.pop %v1264
    %v1272 = vxor.u32 %v1264, 2147483648
    %v1273 = vmul.f32 %v1272, 1.442695
    %v1274 = vpow.pop %v1273
    %v1275 = vadd.f32 %v1274, 1.0
    %v1276 = vrcp.pop %v1275
    %v1277 = vmul.f32 1.0, %v1276
    %v1278 = vmul.f32 %v1270, %v1181
    %v1279 = vmul.f32 %v1270, %v1271
    %1281 = vrot.lane.b32.xlu0 %v1279, 64
    %v1282 = vpop.permute.xlu0 %1281
    %v1284 = vadd.f32 %v1278, %v1282
    %v1285 = vtanh.pop %v1284
    %v1286 = vmul.f32 %v1277, %v1285
    %1288 = vrot.lane.b32.xlu0 %v1286, 64
    %v1289 = vpop.permute.xlu0 %1288
    %v1291 = vsel %vm157, %v1289, %v1284
    %1292 = vst [vmem:[#allocation2 + $0x38] sm:$0xff] %v1291
    %v1293 = vld [vmem:[#allocation2] sm:$0xff]
    %v1294 = vld [vmem:[#allocation2 + $0x8] sm:$0xff]
    %v1295 = vld [vmem:[#allocation2 + $0x10] sm:$0xff]
    %v1296 = vld [vmem:[#allocation2 + $0x18] sm:$0xff]
    %v1297 = vld [vmem:[#allocation2 + $0x20] sm:$0xff]
    %v1298 = vld [vmem:[#allocation2 + $0x28] sm:$0xff]
    %v1299 = vld [vmem:[#allocation2 + $0x30] sm:$0xff]
    %v1300 = vld [vmem:[#allocation2 + $0x38] sm:$0xff]
    %v1301 = vld [vmem:[%s11] sm:$0xff]
    %v1303 = vsel %vm157, %v1301, 0
    %1305 = vmatprep.subr.mxu0 0.0
    %1306 = vmatpush1.msra.mxu0 %v1293
    %1307 = vmatprep.subr.mxu0 0.0
    %1308 = vmatpush1.msra.mxu0 %v1294
    %1309 = vmatprep.subr.mxu0 0.0
    %1310 = vmatpush1.msra.mxu0 %v1295
    %1311 = vmatprep.subr.mxu0 0.0
    %1312 = vmatpush1.msra.mxu0 %v1296
    %1313 = vmatprep.subr.mxu0 0.0
    %1314 = vmatpush1.msra.mxu0 %v1297
    %1315 = vmatprep.subr.mxu0 0.0
    %1316 = vmatpush1.msra.mxu0 %v1298
    %1317 = vmatprep.subr.mxu0 0.0
    %1318 = vmatpush1.msra.mxu0 %v1299
    %1319 = vmatprep.subr.mxu0 0.0
    %1320 = vmatpush1.msra.mxu0 %v1300
    %1321 = vmatprep.subr.mxu0 0.0
    %1322 = vmatpush1.msra.mxu0 0.0
    %1323 = vmatprep.subr.mxu0 0.0
    %1324 = vmatpush1.msra.mxu0 0.0
    %1325 = vmatprep.subr.mxu0 0.0
    %1326 = vmatpush1.msra.mxu0 0.0
    %1327 = vmatprep.subr.mxu0 0.0
    %1328 = vmatpush1.msra.mxu0 0.0
    %1329 = vmatprep.subr.mxu0 0.0
    %1330 = vmatpush1.msra.mxu0 0.0
    %1331 = vmatprep.subr.mxu0 0.0
    %1332 = vmatpush1.msra.mxu0 0.0
    %1333 = vmatprep.subr.mxu0 0.0
    %1334 = vmatpush1.msra.mxu0 0.0
    %1335 = vmatprep.subr.mxu0 0.0
    %1336 = vmatpush1.msra.mxu0 0.0
    %1337 = vmatprep.subr.mxu0 0.0
    %1338 = vmatpush1.msra.mxu0 0.0
    %1339 = vmatprep.subr.mxu0 0.0
    %1340 = vmatpush1.msra.mxu0 0.0
    %1341 = vmatprep.subr.mxu0 0.0
    %1342 = vmatpush1.msra.mxu0 0.0
    %1343 = vmatprep.subr.mxu0 0.0
    %1344 = vmatpush1.msra.mxu0 0.0
    %1345 = vmatprep.subr.mxu0 0.0
    %1346 = vmatpush1.msra.mxu0 0.0
    %1347 = vmatprep.subr.mxu0 0.0
    %1348 = vmatpush1.msra.mxu0 0.0
    %1349 = vmatprep.subr.mxu0 0.0
    %1350 = vmatpush1.msra.mxu0 0.0
    %1351 = vmatprep.subr.mxu0 0.0
    %1352 = vmatpush1.msra.mxu0 0.0
    %1353 = vmatprep.subr.mxu0 0.0
    %1354 = vmatpush1.msra.mxu0 0.0
    %1355 = vmatprep.subr.mxu0 0.0
    %1356 = vmatpush1.msra.mxu0 0.0
    %1357 = vmatprep.subr.mxu0 0.0
    %1358 = vmatpush1.msra.mxu0 0.0
    %1359 = vmatprep.subr.mxu0 0.0
    %1360 = vmatpush1.msra.mxu0 0.0
    %1361 = vmatprep.subr.mxu0 0.0
    %1362 = vmatpush1.msra.mxu0 0.0
    %1363 = vmatprep.subr.mxu0 0.0
    %1364 = vmatpush1.msra.mxu0 0.0
    %1365 = vmatprep.subr.mxu0 0.0
    %1366 = vmatpush1.msra.mxu0 0.0
    %1367 = vmatprep.subr.mxu0 0.0
    %1368 = vmatpush1.msra.mxu0 0.0
    %1369 = vmatprep.mubr.f32.mxu0 0.0
    %1370 = vmatmul.mubr.f32.gmra.mrb[0].mxu0 %v1303
    %v1371 = vpop.f32.mrb[0].mxu0
    %v1372 = vadd.f32 0.0, %v1371
    %v1373 = vpop.f32.mrb[0].mxu0
    %1374 = vdwg.mxu0
    %v1376 = vsel %vm157, %v1372, 0
    %1378 = vmatprep.subr.mxu0 %v106
    %1379 = vmatpush1.msra.mxu0 %v105
    %1380 = vmatprep.subr.mxu0 %v108
    %1381 = vmatpush1.msra.mxu0 %v107
    %1382 = vmatprep.subr.mxu0 %v110
    %1383 = vmatpush1.msra.mxu0 %v109
    %1384 = vmatprep.subr.mxu0 %v112
    %1385 = vmatpush1.msra.mxu0 %v111
    %1386 = vmatprep.subr.mxu0 %v114
    %1387 = vmatpush1.msra.mxu0 %v113
    %1388 = vmatprep.subr.mxu0 %v116
    %1389 = vmatpush1.msra.mxu0 %v115
    %1390 = vmatprep.subr.mxu0 %v118
    %1391 = vmatpush1.msra.mxu0 %v117
    %1392 = vmatprep.subr.mxu0 %v120
    %1393 = vmatpush1.msra.mxu0 %v119
    %1394 = vmatprep.subr.mxu0 0.0
    %1395 = vmatpush1.msra.mxu0 0.0
    %1396 = vmatprep.subr.mxu0 0.0
    %1397 = vmatpush1.msra.mxu0 0.0
    %1398 = vmatprep.subr.mxu0 0.0
    %1399 = vmatpush1.msra.mxu0 0.0
    %1400 = vmatprep.subr.mxu0 0.0
    %1401 = vmatpush1.msra.mxu0 0.0
    %1402 = vmatprep.subr.mxu0 0.0
    %1403 = vmatpush1.msra.mxu0 0.0
    %1404 = vmatprep.subr.mxu0 0.0
    %1405 = vmatpush1.msra.mxu0 0.0
    %1406 = vmatprep.subr.mxu0 0.0
    %1407 = vmatpush1.msra.mxu0 0.0
    %1408 = vmatprep.subr.mxu0 0.0
    %1409 = vmatpush1.msra.mxu0 0.0
    %1410 = vmatprep.subr.mxu0 0.0
    %1411 = vmatpush1.msra.mxu0 0.0
    %1412 = vmatprep.subr.mxu0 0.0
    %1413 = vmatpush1.msra.mxu0 0.0
    %1414 = vmatprep.subr.mxu0 0.0
    %1415 = vmatpush1.msra.mxu0 0.0
    %1416 = vmatprep.subr.mxu0 0.0
    %1417 = vmatpush1.msra.mxu0 0.0
    %1418 = vmatprep.subr.mxu0 0.0
    %1419 = vmatpush1.msra.mxu0 0.0
    %1420 = vmatprep.subr.mxu0 0.0
    %1421 = vmatpush1.msra.mxu0 0.0
    %1422 = vmatprep.subr.mxu0 0.0
    %1423 = vmatpush1.msra.mxu0 0.0
    %1424 = vmatprep.subr.mxu0 0.0
    %1425 = vmatpush1.msra.mxu0 0.0
    %1426 = vmatprep.subr.mxu0 0.0
    %1427 = vmatpush1.msra.mxu0 0.0
    %1428 = vmatprep.subr.mxu0 0.0
    %1429 = vmatpush1.msra.mxu0 0.0
    %1430 = vmatprep.subr.mxu0 0.0
    %1431 = vmatpush1.msra.mxu0 0.0
    %1432 = vmatprep.subr.mxu0 0.0
    %1433 = vmatpush1.msra.mxu0 0.0
    %1434 = vmatprep.subr.mxu0 0.0
    %1435 = vmatpush1.msra.mxu0 0.0
    %1436 = vmatprep.subr.mxu0 0.0
    %1437 = vmatpush1.msra.mxu0 0.0
    %1438 = vmatprep.subr.mxu0 0.0
    %1439 = vmatpush1.msra.mxu0 0.0
    %1440 = vmatprep.subr.mxu0 0.0
    %1441 = vmatpush1.msra.mxu0 0.0
    %1442 = vmatprep.mubr.f32.mxu0 0.0
    %1443 = vmatmul.mubr.f32.gmra.mrb[0].mxu0 %v1376
    %v1444 = vpop.f32.mrb[0].mxu0
    %v1445 = vadd.f32 0.0, %v1444
    %v1446 = vpop.f32.mrb[0].mxu0
    %v1447 = vadd.f32 0.0, %v1446
    %1448 = vdwg.mxu0
    %v1449 = vadd.f32 %v422, %v1445
    %v1450 = vadd.f32 %v424, %v1447
    %v1451 = vxor.u32 %v1449, 2147483648
    %v1452 = vmul.f32 %v1451, 1.442695
    %v1453 = vpow.pop %v1452
    %v1454 = vadd.f32 %v1453, 1.0
    %v1455 = vrcp.pop %v1454
    %v1456 = vmul.f32 1.0, %v1455
    %v1457 = vtanh.pop %v1450
    %v1458 = vxor.u32 %v1450, 2147483648
    %v1459 = vmul.f32 %v1458, 1.442695
    %v1460 = vpow.pop %v1459
    %v1461 = vadd.f32 %v1460, 1.0
    %v1462 = vrcp.pop %v1461
    %v1463 = vmul.f32 1.0, %v1462
    %v1464 = vmul.f32 %v1456, %v1372
    %v1465 = vmul.f32 %v1456, %v1457
    %1467 = vrot.lane.b32.xlu0 %v1465, 64
    %v1468 = vpop.permute.xlu0 %1467
    %v1470 = vadd.f32 %v1464, %v1468
    %v1471 = vtanh.pop %v1470
    %v1472 = vmul.f32 %v1463, %v1471
    %1474 = vrot.lane.b32.xlu0 %v1472, 64
    %v1475 = vpop.permute.xlu0 %1474
    %v1477 = vsel %vm157, %v1475, %v1470
    %1478 = vst [vmem:[#allocation3] sm:$0xff] %v1477
    %v1479 = vsel %vm157, %v1475, 0
    %1481 = vmatprep.subr.mxu0 %v106
    %1482 = vmatpush1.msra.mxu0 %v105
    %1483 = vmatprep.subr.mxu0 %v108
    %1484 = vmatpush1.msra.mxu0 %v107
    %1485 = vmatprep.subr.mxu0 %v110
    %1486 = vmatpush1.msra.mxu0 %v109
    %1487 = vmatprep.subr.mxu0 %v112
    %1488 = vmatpush1.msra.mxu0 %v111
    %1489 = vmatprep.subr.mxu0 %v114
    %1490 = vmatpush1.msra.mxu0 %v113
    %1491 = vmatprep.subr.mxu0 %v116
    %1492 = vmatpush1.msra.mxu0 %v115
    %1493 = vmatprep.subr.mxu0 %v118
    %1494 = vmatpush1.msra.mxu0 %v117
    %1495 = vmatprep.subr.mxu0 %v120
    %1496 = vmatpush1.msra.mxu0 %v119
    %1497 = vmatprep.subr.mxu0 0.0
    %1498 = vmatpush1.msra.mxu0 0.0
    %1499 = vmatprep.subr.mxu0 0.0
    %1500 = vmatpush1.msra.mxu0 0.0
    %1501 = vmatprep.subr.mxu0 0.0
    %1502 = vmatpush1.msra.mxu0 0.0
    %1503 = vmatprep.subr.mxu0 0.0
    %1504 = vmatpush1.msra.mxu0 0.0
    %1505 = vmatprep.subr.mxu0 0.0
    %1506 = vmatpush1.msra.mxu0 0.0
    %1507 = vmatprep.subr.mxu0 0.0
    %1508 = vmatpush1.msra.mxu0 0.0
    %1509 = vmatprep.subr.mxu0 0.0
    %1510 = vmatpush1.msra.mxu0 0.0
    %1511 = vmatprep.subr.mxu0 0.0
    %1512 = vmatpush1.msra.mxu0 0.0
    %1513 = vmatprep.subr.mxu0 0.0
    %1514 = vmatpush1.msra.mxu0 0.0
    %1515 = vmatprep.subr.mxu0 0.0
    %1516 = vmatpush1.msra.mxu0 0.0
    %1517 = vmatprep.subr.mxu0 0.0
    %1518 = vmatpush1.msra.mxu0 0.0
    %1519 = vmatprep.subr.mxu0 0.0
    %1520 = vmatpush1.msra.mxu0 0.0
    %1521 = vmatprep.subr.mxu0 0.0
    %1522 = vmatpush1.msra.mxu0 0.0
    %1523 = vmatprep.subr.mxu0 0.0
    %1524 = vmatpush1.msra.mxu0 0.0
    %1525 = vmatprep.subr.mxu0 0.0
    %1526 = vmatpush1.msra.mxu0 0.0
    %1527 = vmatprep.subr.mxu0 0.0
    %1528 = vmatpush1.msra.mxu0 0.0
    %1529 = vmatprep.subr.mxu0 0.0
    %1530 = vmatpush1.msra.mxu0 0.0
    %1531 = vmatprep.subr.mxu0 0.0
    %1532 = vmatpush1.msra.mxu0 0.0
    %1533 = vmatprep.subr.mxu0 0.0
    %1534 = vmatpush1.msra.mxu0 0.0
    %1535 = vmatprep.subr.mxu0 0.0
    %1536 = vmatpush1.msra.mxu0 0.0
    %1537 = vmatprep.subr.mxu0 0.0
    %1538 = vmatpush1.msra.mxu0 0.0
    %1539 = vmatprep.subr.mxu0 0.0
    %1540 = vmatpush1.msra.mxu0 0.0
    %1541 = vmatprep.subr.mxu0 0.0
    %1542 = vmatpush1.msra.mxu0 0.0
    %1543 = vmatprep.subr.mxu0 0.0
    %1544 = vmatpush1.msra.mxu0 0.0
    %1545 = vmatprep.mubr.f32.mxu0 0.0
    %1546 = vmatmul.mubr.f32.gmra.mrb[0].mxu0 %v1479
    %v1547 = vpop.f32.mrb[0].mxu0
    %v1548 = vadd.f32 0.0, %v1547
    %v1549 = vpop.f32.mrb[0].mxu0
    %v1550 = vadd.f32 0.0, %v1549
    %1551 = vdwg.mxu0
    %v1552 = vadd.f32 %v428, %v1548
    %v1553 = vadd.f32 %v430, %v1550
    %v1554 = vxor.u32 %v1552, 2147483648
    %v1555 = vmul.f32 %v1554, 1.442695
    %v1556 = vpow.pop %v1555
    %v1557 = vadd.f32 %v1556, 1.0
    %v1558 = vrcp.pop %v1557
    %v1559 = vmul.f32 1.0, %v1558
    %v1560 = vtanh.pop %v1553
    %v1561 = vxor.u32 %v1553, 2147483648
    %v1562 = vmul.f32 %v1561, 1.442695
    %v1563 = vpow.pop %v1562
    %v1564 = vadd.f32 %v1563, 1.0
    %v1565 = vrcp.pop %v1564
    %v1566 = vmul.f32 1.0, %v1565
    %v1567 = vmul.f32 %v1559, %v1470
    %v1568 = vmul.f32 %v1559, %v1560
    %1570 = vrot.lane.b32.xlu0 %v1568, 64
    %v1571 = vpop.permute.xlu0 %1570
    %v1573 = vadd.f32 %v1567, %v1571
    %v1574 = vtanh.pop %v1573
    %v1575 = vmul.f32 %v1566, %v1574
    %1577 = vrot.lane.b32.xlu0 %v1575, 64
    %v1578 = vpop.permute.xlu0 %1577
    %v1580 = vsel %vm157, %v1578, %v1573
    %1581 = vst [vmem:[#allocation3 + $0x8] sm:$0xff] %v1580
    %v1582 = vsel %vm157, %v1578, 0
    %1584 = vmatprep.subr.mxu0 %v106
    %1585 = vmatpush1.msra.mxu0 %v105
    %1586 = vmatprep.subr.mxu0 %v108
    %1587 = vmatpush1.msra.mxu0 %v107
    %1588 = vmatprep.subr.mxu0 %v110
    %1589 = vmatpush1.msra.mxu0 %v109
    %1590 = vmatprep.subr.mxu0 %v112
    %1591 = vmatpush1.msra.mxu0 %v111
    %1592 = vmatprep.subr.mxu0 %v114
    %1593 = vmatpush1.msra.mxu0 %v113
    %1594 = vmatprep.subr.mxu0 %v116
    %1595 = vmatpush1.msra.mxu0 %v115
    %1596 = vmatprep.subr.mxu0 %v118
    %1597 = vmatpush1.msra.mxu0 %v117
    %1598 = vmatprep.subr.mxu0 %v120
    %1599 = vmatpush1.msra.mxu0 %v119
    %1600 = vmatprep.subr.mxu0 0.0
    %1601 = vmatpush1.msra.mxu0 0.0
    %1602 = vmatprep.subr.mxu0 0.0
    %1603 = vmatpush1.msra.mxu0 0.0
    %1604 = vmatprep.subr.mxu0 0.0
    %1605 = vmatpush1.msra.mxu0 0.0
    %1606 = vmatprep.subr.mxu0 0.0
    %1607 = vmatpush1.msra.mxu0 0.0
    %1608 = vmatprep.subr.mxu0 0.0
    %1609 = vmatpush1.msra.mxu0 0.0
    %1610 = vmatprep.subr.mxu0 0.0
    %1611 = vmatpush1.msra.mxu0 0.0
    %1612 = vmatprep.subr.mxu0 0.0
    %1613 = vmatpush1.msra.mxu0 0.0
    %1614 = vmatprep.subr.mxu0 0.0
    %1615 = vmatpush1.msra.mxu0 0.0
    %1616 = vmatprep.subr.mxu0 0.0
    %1617 = vmatpush1.msra.mxu0 0.0
    %1618 = vmatprep.subr.mxu0 0.0
    %1619 = vmatpush1.msra.mxu0 0.0
    %1620 = vmatprep.subr.mxu0 0.0
    %1621 = vmatpush1.msra.mxu0 0.0
    %1622 = vmatprep.subr.mxu0 0.0
    %1623 = vmatpush1.msra.mxu0 0.0
    %1624 = vmatprep.subr.mxu0 0.0
    %1625 = vmatpush1.msra.mxu0 0.0
    %1626 = vmatprep.subr.mxu0 0.0
    %1627 = vmatpush1.msra.mxu0 0.0
    %1628 = vmatprep.subr.mxu0 0.0
    %1629 = vmatpush1.msra.mxu0 0.0
    %1630 = vmatprep.subr.mxu0 0.0
    %1631 = vmatpush1.msra.mxu0 0.0
    %1632 = vmatprep.subr.mxu0 0.0
    %1633 = vmatpush1.msra.mxu0 0.0
    %1634 = vmatprep.subr.mxu0 0.0
    %1635 = vmatpush1.msra.mxu0 0.0
    %1636 = vmatprep.subr.mxu0 0.0
    %1637 = vmatpush1.msra.mxu0 0.0
    %1638 = vmatprep.subr.mxu0 0.0
    %1639 = vmatpush1.msra.mxu0 0.0
    %1640 = vmatprep.subr.mxu0 0.0
    %1641 = vmatpush1.msra.mxu0 0.0
    %1642 = vmatprep.subr.mxu0 0.0
    %1643 = vmatpush1.msra.mxu0 0.0
    %1644 = vmatprep.subr.mxu0 0.0
    %1645 = vmatpush1.msra.mxu0 0.0
    %1646 = vmatprep.subr.mxu0 0.0
    %1647 = vmatpush1.msra.mxu0 0.0
    %1648 = vmatprep.mubr.f32.mxu0 0.0
    %1649 = vmatmul.mubr.f32.gmra.mrb[0].mxu0 %v1582
    %v1650 = vpop.f32.mrb[0].mxu0
    %v1651 = vadd.f32 0.0, %v1650
    %v1652 = vpop.f32.mrb[0].mxu0
    %v1653 = vadd.f32 0.0, %v1652
    %1654 = vdwg.mxu0
    %v1655 = vadd.f32 %v434, %v1651
    %v1656 = vadd.f32 %v436, %v1653
    %v1657 = vxor.u32 %v1655, 2147483648
    %v1658 = vmul.f32 %v1657, 1.442695
    %v1659 = vpow.pop %v1658
    %v1660 = vadd.f32 %v1659, 1.0
    %v1661 = vrcp.pop %v1660
    %v1662 = vmul.f32 1.0, %v1661
    %v1663 = vtanh.pop %v1656
    %v1664 = vxor.u32 %v1656, 2147483648
    %v1665 = vmul.f32 %v1664, 1.442695
    %v1666 = vpow.pop %v1665
    %v1667 = vadd.f32 %v1666, 1.0
    %v1668 = vrcp.pop %v1667
    %v1669 = vmul.f32 1.0, %v1668
    %v1670 = vmul.f32 %v1662, %v1573
    %v1671 = vmul.f32 %v1662, %v1663
    %1673 = vrot.lane.b32.xlu0 %v1671, 64
    %v1674 = vpop.permute.xlu0 %1673
    %v1676 = vadd.f32 %v1670, %v1674
    %v1677 = vtanh.pop %v1676
    %v1678 = vmul.f32 %v1669, %v1677
    %1680 = vrot.lane.b32.xlu0 %v1678, 64
    %v1681 = vpop.permute.xlu0 %1680
    %v1683 = vsel %vm157, %v1681, %v1676
    %1684 = vst [vmem:[#allocation3 + $0x10] sm:$0xff] %v1683
    %v1685 = vsel %vm157, %v1681, 0
    %1687 = vmatprep.subr.mxu0 %v106
    %1688 = vmatpush1.msra.mxu0 %v105
    %1689 = vmatprep.subr.mxu0 %v108
    %1690 = vmatpush1.msra.mxu0 %v107
    %1691 = vmatprep.subr.mxu0 %v110
    %1692 = vmatpush1.msra.mxu0 %v109
    %1693 = vmatprep.subr.mxu0 %v112
    %1694 = vmatpush1.msra.mxu0 %v111
    %1695 = vmatprep.subr.mxu0 %v114
    %1696 = vmatpush1.msra.mxu0 %v113
    %1697 = vmatprep.subr.mxu0 %v116
    %1698 = vmatpush1.msra.mxu0 %v115
    %1699 = vmatprep.subr.mxu0 %v118
    %1700 = vmatpush1.msra.mxu0 %v117
    %1701 = vmatprep.subr.mxu0 %v120
    %1702 = vmatpush1.msra.mxu0 %v119
    %1703 = vmatprep.subr.mxu0 0.0
    %1704 = vmatpush1.msra.mxu0 0.0
    %1705 = vmatprep.subr.mxu0 0.0
    %1706 = vmatpush1.msra.mxu0 0.0
    %1707 = vmatprep.subr.mxu0 0.0
    %1708 = vmatpush1.msra.mxu0 0.0
    %1709 = vmatprep.subr.mxu0 0.0
    %1710 = vmatpush1.msra.mxu0 0.0
    %1711 = vmatprep.subr.mxu0 0.0
    %1712 = vmatpush1.msra.mxu0 0.0
    %1713 = vmatprep.subr.mxu0 0.0
    %1714 = vmatpush1.msra.mxu0 0.0
    %1715 = vmatprep.subr.mxu0 0.0
    %1716 = vmatpush1.msra.mxu0 0.0
    %1717 = vmatprep.subr.mxu0 0.0
    %1718 = vmatpush1.msra.mxu0 0.0
    %1719 = vmatprep.subr.mxu0 0.0
    %1720 = vmatpush1.msra.mxu0 0.0
    %1721 = vmatprep.subr.mxu0 0.0
    %1722 = vmatpush1.msra.mxu0 0.0
    %1723 = vmatprep.subr.mxu0 0.0
    %1724 = vmatpush1.msra.mxu0 0.0
    %1725 = vmatprep.subr.mxu0 0.0
    %1726 = vmatpush1.msra.mxu0 0.0
    %1727 = vmatprep.subr.mxu0 0.0
    %1728 = vmatpush1.msra.mxu0 0.0
    %1729 = vmatprep.subr.mxu0 0.0
    %1730 = vmatpush1.msra.mxu0 0.0
    %1731 = vmatprep.subr.mxu0 0.0
    %1732 = vmatpush1.msra.mxu0 0.0
    %1733 = vmatprep.subr.mxu0 0.0
    %1734 = vmatpush1.msra.mxu0 0.0
    %1735 = vmatprep.subr.mxu0 0.0
    %1736 = vmatpush1.msra.mxu0 0.0
    %1737 = vmatprep.subr.mxu0 0.0
    %1738 = vmatpush1.msra.mxu0 0.0
    %1739 = vmatprep.subr.mxu0 0.0
    %1740 = vmatpush1.msra.mxu0 0.0
    %1741 = vmatprep.subr.mxu0 0.0
    %1742 = vmatpush1.msra.mxu0 0.0
    %1743 = vmatprep.subr.mxu0 0.0
    %1744 = vmatpush1.msra.mxu0 0.0
    %1745 = vmatprep.subr.mxu0 0.0
    %1746 = vmatpush1.msra.mxu0 0.0
    %1747 = vmatprep.subr.mxu0 0.0
    %1748 = vmatpush1.msra.mxu0 0.0
    %1749 = vmatprep.subr.mxu0 0.0
    %1750 = vmatpush1.msra.mxu0 0.0
    %1751 = vmatprep.mubr.f32.mxu0 0.0
    %1752 = vmatmul.mubr.f32.gmra.mrb[0].mxu0 %v1685
    %v1753 = vpop.f32.mrb[0].mxu0
    %v1754 = vadd.f32 0.0, %v1753
    %v1755 = vpop.f32.mrb[0].mxu0
    %v1756 = vadd.f32 0.0, %v1755
    %1757 = vdwg.mxu0
    %v1758 = vadd.f32 %v440, %v1754
    %v1759 = vadd.f32 %v442, %v1756
    %v1760 = vxor.u32 %v1758, 2147483648
    %v1761 = vmul.f32 %v1760, 1.442695
    %v1762 = vpow.pop %v1761
    %v1763 = vadd.f32 %v1762, 1.0
    %v1764 = vrcp.pop %v1763
    %v1765 = vmul.f32 1.0, %v1764
    %v1766 = vtanh.pop %v1759
    %v1767 = vxor.u32 %v1759, 2147483648
    %v1768 = vmul.f32 %v1767, 1.442695
    %v1769 = vpow.pop %v1768
    %v1770 = vadd.f32 %v1769, 1.0
    %v1771 = vrcp.pop %v1770
    %v1772 = vmul.f32 1.0, %v1771
    %v1773 = vmul.f32 %v1765, %v1676
    %v1774 = vmul.f32 %v1765, %v1766
    %1776 = vrot.lane.b32.xlu0 %v1774, 64
    %v1777 = vpop.permute.xlu0 %1776
    %v1779 = vadd.f32 %v1773, %v1777
    %v1780 = vtanh.pop %v1779
    %v1781 = vmul.f32 %v1772, %v1780
    %1783 = vrot.lane.b32.xlu0 %v1781, 64
    %v1784 = vpop.permute.xlu0 %1783
    %v1786 = vsel %vm157, %v1784, %v1779
    %1787 = vst [vmem:[#allocation3 + $0x18] sm:$0xff] %v1786
    %v1788 = vsel %vm157, %v1784, 0
    %1790 = vmatprep.subr.mxu0 %v106
    %1791 = vmatpush1.msra.mxu0 %v105
    %1792 = vmatprep.subr.mxu0 %v108
    %1793 = vmatpush1.msra.mxu0 %v107
    %1794 = vmatprep.subr.mxu0 %v110
    %1795 = vmatpush1.msra.mxu0 %v109
    %1796 = vmatprep.subr.mxu0 %v112
    %1797 = vmatpush1.msra.mxu0 %v111
    %1798 = vmatprep.subr.mxu0 %v114
    %1799 = vmatpush1.msra.mxu0 %v113
    %1800 = vmatprep.subr.mxu0 %v116
    %1801 = vmatpush1.msra.mxu0 %v115
    %1802 = vmatprep.subr.mxu0 %v118
    %1803 = vmatpush1.msra.mxu0 %v117
    %1804 = vmatprep.subr.mxu0 %v120
    %1805 = vmatpush1.msra.mxu0 %v119
    %1806 = vmatprep.subr.mxu0 0.0
    %1807 = vmatpush1.msra.mxu0 0.0
    %1808 = vmatprep.subr.mxu0 0.0
    %1809 = vmatpush1.msra.mxu0 0.0
    %1810 = vmatprep.subr.mxu0 0.0
    %1811 = vmatpush1.msra.mxu0 0.0
    %1812 = vmatprep.subr.mxu0 0.0
    %1813 = vmatpush1.msra.mxu0 0.0
    %1814 = vmatprep.subr.mxu0 0.0
    %1815 = vmatpush1.msra.mxu0 0.0
    %1816 = vmatprep.subr.mxu0 0.0
    %1817 = vmatpush1.msra.mxu0 0.0
    %1818 = vmatprep.subr.mxu0 0.0
    %1819 = vmatpush1.msra.mxu0 0.0
    %1820 = vmatprep.subr.mxu0 0.0
    %1821 = vmatpush1.msra.mxu0 0.0
    %1822 = vmatprep.subr.mxu0 0.0
    %1823 = vmatpush1.msra.mxu0 0.0
    %1824 = vmatprep.subr.mxu0 0.0
    %1825 = vmatpush1.msra.mxu0 0.0
    %1826 = vmatprep.subr.mxu0 0.0
    %1827 = vmatpush1.msra.mxu0 0.0
    %1828 = vmatprep.subr.mxu0 0.0
    %1829 = vmatpush1.msra.mxu0 0.0
    %1830 = vmatprep.subr.mxu0 0.0
    %1831 = vmatpush1.msra.mxu0 0.0
    %1832 = vmatprep.subr.mxu0 0.0
    %1833 = vmatpush1.msra.mxu0 0.0
    %1834 = vmatprep.subr.mxu0 0.0
    %1835 = vmatpush1.msra.mxu0 0.0
    %1836 = vmatprep.subr.mxu0 0.0
    %1837 = vmatpush1.msra.mxu0 0.0
    %1838 = vmatprep.subr.mxu0 0.0
    %1839 = vmatpush1.msra.mxu0 0.0
    %1840 = vmatprep.subr.mxu0 0.0
    %1841 = vmatpush1.msra.mxu0 0.0
    %1842 = vmatprep.subr.mxu0 0.0
    %1843 = vmatpush1.msra.mxu0 0.0
    %1844 = vmatprep.subr.mxu0 0.0
    %1845 = vmatpush1.msra.mxu0 0.0
    %1846 = vmatprep.subr.mxu0 0.0
    %1847 = vmatpush1.msra.mxu0 0.0
    %1848 = vmatprep.subr.mxu0 0.0
    %1849 = vmatpush1.msra.mxu0 0.0
    %1850 = vmatprep.subr.mxu0 0.0
    %1851 = vmatpush1.msra.mxu0 0.0
    %1852 = vmatprep.subr.mxu0 0.0
    %1853 = vmatpush1.msra.mxu0 0.0
    %1854 = vmatprep.mubr.f32.mxu0 0.0
    %1855 = vmatmul.mubr.f32.gmra.mrb[0].mxu0 %v1788
    %v1856 = vpop.f32.mrb[0].mxu0
    %v1857 = vadd.f32 0.0, %v1856
    %v1858 = vpop.f32.mrb[0].mxu0
    %v1859 = vadd.f32 0.0, %v1858
    %1860 = vdwg.mxu0
    %v1861 = vadd.f32 %v446, %v1857
    %v1862 = vadd.f32 %v448, %v1859
    %v1863 = vxor.u32 %v1861, 2147483648
    %v1864 = vmul.f32 %v1863, 1.442695
    %v1865 = vpow.pop %v1864
    %v1866 = vadd.f32 %v1865, 1.0
    %v1867 = vrcp.pop %v1866
    %v1868 = vmul.f32 1.0, %v1867
    %v1869 = vtanh.pop %v1862
    %v1870 = vxor.u32 %v1862, 2147483648
    %v1871 = vmul.f32 %v1870, 1.442695
    %v1872 = vpow.pop %v1871
    %v1873 = vadd.f32 %v1872, 1.0
    %v1874 = vrcp.pop %v1873
    %v1875 = vmul.f32 1.0, %v1874
    %v1876 = vmul.f32 %v1868, %v1779
    %v1877 = vmul.f32 %v1868, %v1869
    %1879 = vrot.lane.b32.xlu0 %v1877, 64
    %v1880 = vpop.permute.xlu0 %1879
    %v1882 = vadd.f32 %v1876, %v1880
    %v1883 = vtanh.pop %v1882
    %v1884 = vmul.f32 %v1875, %v1883
    %1886 = vrot.lane.b32.xlu0 %v1884, 64
    %v1887 = vpop.permute.xlu0 %1886
    %v1889 = vsel %vm157, %v1887, %v1882
    %1890 = vst [vmem:[#allocation3 + $0x20] sm:$0xff] %v1889
    %v1891 = vsel %vm157, %v1887, 0
    %1893 = vmatprep.subr.mxu0 %v106
    %1894 = vmatpush1.msra.mxu0 %v105
    %1895 = vmatprep.subr.mxu0 %v108
    %1896 = vmatpush1.msra.mxu0 %v107
    %1897 = vmatprep.subr.mxu0 %v110
    %1898 = vmatpush1.msra.mxu0 %v109
    %1899 = vmatprep.subr.mxu0 %v112
    %1900 = vmatpush1.msra.mxu0 %v111
    %1901 = vmatprep.subr.mxu0 %v114
    %1902 = vmatpush1.msra.mxu0 %v113
    %1903 = vmatprep.subr.mxu0 %v116
    %1904 = vmatpush1.msra.mxu0 %v115
    %1905 = vmatprep.subr.mxu0 %v118
    %1906 = vmatpush1.msra.mxu0 %v117
    %1907 = vmatprep.subr.mxu0 %v120
    %1908 = vmatpush1.msra.mxu0 %v119
    %1909 = vmatprep.subr.mxu0 0.0
    %1910 = vmatpush1.msra.mxu0 0.0
    %1911 = vmatprep.subr.mxu0 0.0
    %1912 = vmatpush1.msra.mxu0 0.0
    %1913 = vmatprep.subr.mxu0 0.0
    %1914 = vmatpush1.msra.mxu0 0.0
    %1915 = vmatprep.subr.mxu0 0.0
    %1916 = vmatpush1.msra.mxu0 0.0
    %1917 = vmatprep.subr.mxu0 0.0
    %1918 = vmatpush1.msra.mxu0 0.0
    %1919 = vmatprep.subr.mxu0 0.0
    %1920 = vmatpush1.msra.mxu0 0.0
    %1921 = vmatprep.subr.mxu0 0.0
    %1922 = vmatpush1.msra.mxu0 0.0
    %1923 = vmatprep.subr.mxu0 0.0
    %1924 = vmatpush1.msra.mxu0 0.0
    %1925 = vmatprep.subr.mxu0 0.0
    %1926 = vmatpush1.msra.mxu0 0.0
    %1927 = vmatprep.subr.mxu0 0.0
    %1928 = vmatpush1.msra.mxu0 0.0
    %1929 = vmatprep.subr.mxu0 0.0
    %1930 = vmatpush1.msra.mxu0 0.0
    %1931 = vmatprep.subr.mxu0 0.0
    %1932 = vmatpush1.msra.mxu0 0.0
    %1933 = vmatprep.subr.mxu0 0.0
    %1934 = vmatpush1.msra.mxu0 0.0
    %1935 = vmatprep.subr.mxu0 0.0
    %1936 = vmatpush1.msra.mxu0 0.0
    %1937 = vmatprep.subr.mxu0 0.0
    %1938 = vmatpush1.msra.mxu0 0.0
    %1939 = vmatprep.subr.mxu0 0.0
    %1940 = vmatpush1.msra.mxu0 0.0
    %1941 = vmatprep.subr.mxu0 0.0
    %1942 = vmatpush1.msra.mxu0 0.0
    %1943 = vmatprep.subr.mxu0 0.0
    %1944 = vmatpush1.msra.mxu0 0.0
    %1945 = vmatprep.subr.mxu0 0.0
    %1946 = vmatpush1.msra.mxu0 0.0
    %1947 = vmatprep.subr.mxu0 0.0
    %1948 = vmatpush1.msra.mxu0 0.0
    %1949 = vmatprep.subr.mxu0 0.0
    %1950 = vmatpush1.msra.mxu0 0.0
    %1951 = vmatprep.subr.mxu0 0.0
    %1952 = vmatpush1.msra.mxu0 0.0
    %1953 = vmatprep.subr.mxu0 0.0
    %1954 = vmatpush1.msra.mxu0 0.0
    %1955 = vmatprep.subr.mxu0 0.0
    %1956 = vmatpush1.msra.mxu0 0.0
    %1957 = vmatprep.mubr.f32.mxu0 0.0
    %1958 = vmatmul.mubr.f32.gmra.mrb[0].mxu0 %v1891
    %v1959 = vpop.f32.mrb[0].mxu0
    %v1960 = vadd.f32 0.0, %v1959
    %v1961 = vpop.f32.mrb[0].mxu0
    %v1962 = vadd.f32 0.0, %v1961
    %1963 = vdwg.mxu0
    %v1964 = vadd.f32 %v452, %v1960
    %v1965 = vadd.f32 %v454, %v1962
    %v1966 = vxor.u32 %v1964, 2147483648
    %v1967 = vmul.f32 %v1966, 1.442695
    %v1968 = vpow.pop %v1967
    %v1969 = vadd.f32 %v1968, 1.0
    %v1970 = vrcp.pop %v1969
    %v1971 = vmul.f32 1.0, %v1970
    %v1972 = vtanh.pop %v1965
    %v1973 = vxor.u32 %v1965, 2147483648
    %v1974 = vmul.f32 %v1973, 1.442695
    %v1975 = vpow.pop %v1974
    %v1976 = vadd.f32 %v1975, 1.0
    %v1977 = vrcp.pop %v1976
    %v1978 = vmul.f32 1.0, %v1977
    %v1979 = vmul.f32 %v1971, %v1882
    %v1980 = vmul.f32 %v1971, %v1972
    %1982 = vrot.lane.b32.xlu0 %v1980, 64
    %v1983 = vpop.permute.xlu0 %1982
    %v1985 = vadd.f32 %v1979, %v1983
    %v1986 = vtanh.pop %v1985
    %v1987 = vmul.f32 %v1978, %v1986
    %1989 = vrot.lane.b32.xlu0 %v1987, 64
    %v1990 = vpop.permute.xlu0 %1989
    %v1992 = vsel %vm157, %v1990, %v1985
    %1993 = vst [vmem:[#allocation3 + $0x28] sm:$0xff] %v1992
    %v1994 = vsel %vm157, %v1990, 0
    %1996 = vmatprep.subr.mxu0 %v106
    %1997 = vmatpush1.msra.mxu0 %v105
    %1998 = vmatprep.subr.mxu0 %v108
    %1999 = vmatpush1.msra.mxu0 %v107
    %2000 = vmatprep.subr.mxu0 %v110
    %2001 = vmatpush1.msra.mxu0 %v109
    %2002 = vmatprep.subr.mxu0 %v112
    %2003 = vmatpush1.msra.mxu0 %v111
    %2004 = vmatprep.subr.mxu0 %v114
    %2005 = vmatpush1.msra.mxu0 %v113
    %2006 = vmatprep.subr.mxu0 %v116
    %2007 = vmatpush1.msra.mxu0 %v115
    %2008 = vmatprep.subr.mxu0 %v118
    %2009 = vmatpush1.msra.mxu0 %v117
    %2010 = vmatprep.subr.mxu0 %v120
    %2011 = vmatpush1.msra.mxu0 %v119
    %2012 = vmatprep.subr.mxu0 0.0
    %2013 = vmatpush1.msra.mxu0 0.0
    %2014 = vmatprep.subr.mxu0 0.0
    %2015 = vmatpush1.msra.mxu0 0.0
    %2016 = vmatprep.subr.mxu0 0.0
    %2017 = vmatpush1.msra.mxu0 0.0
    %2018 = vmatprep.subr.mxu0 0.0
    %2019 = vmatpush1.msra.mxu0 0.0
    %2020 = vmatprep.subr.mxu0 0.0
    %2021 = vmatpush1.msra.mxu0 0.0
    %2022 = vmatprep.subr.mxu0 0.0
    %2023 = vmatpush1.msra.mxu0 0.0
    %2024 = vmatprep.subr.mxu0 0.0
    %2025 = vmatpush1.msra.mxu0 0.0
    %2026 = vmatprep.subr.mxu0 0.0
    %2027 = vmatpush1.msra.mxu0 0.0
    %2028 = vmatprep.subr.mxu0 0.0
    %2029 = vmatpush1.msra.mxu0 0.0
    %2030 = vmatprep.subr.mxu0 0.0
    %2031 = vmatpush1.msra.mxu0 0.0
    %2032 = vmatprep.subr.mxu0 0.0
    %2033 = vmatpush1.msra.mxu0 0.0
    %2034 = vmatprep.subr.mxu0 0.0
    %2035 = vmatpush1.msra.mxu0 0.0
    %2036 = vmatprep.subr.mxu0 0.0
    %2037 = vmatpush1.msra.mxu0 0.0
    %2038 = vmatprep.subr.mxu0 0.0
    %2039 = vmatpush1.msra.mxu0 0.0
    %2040 = vmatprep.subr.mxu0 0.0
    %2041 = vmatpush1.msra.mxu0 0.0
    %2042 = vmatprep.subr.mxu0 0.0
    %2043 = vmatpush1.msra.mxu0 0.0
    %2044 = vmatprep.subr.mxu0 0.0
    %2045 = vmatpush1.msra.mxu0 0.0
    %2046 = vmatprep.subr.mxu0 0.0
    %2047 = vmatpush1.msra.mxu0 0.0
    %2048 = vmatprep.subr.mxu0 0.0
    %2049 = vmatpush1.msra.mxu0 0.0
    %2050 = vmatprep.subr.mxu0 0.0
    %2051 = vmatpush1.msra.mxu0 0.0
    %2052 = vmatprep.subr.mxu0 0.0
    %2053 = vmatpush1.msra.mxu0 0.0
    %2054 = vmatprep.subr.mxu0 0.0
    %2055 = vmatpush1.msra.mxu0 0.0
    %2056 = vmatprep.subr.mxu0 0.0
    %2057 = vmatpush1.msra.mxu0 0.0
    %2058 = vmatprep.subr.mxu0 0.0
    %2059 = vmatpush1.msra.mxu0 0.0
    %2060 = vmatprep.mubr.f32.mxu0 0.0
    %2061 = vmatmul.mubr.f32.gmra.mrb[0].mxu0 %v1994
    %v2062 = vpop.f32.mrb[0].mxu0
    %v2063 = vadd.f32 0.0, %v2062
    %v2064 = vpop.f32.mrb[0].mxu0
    %v2065 = vadd.f32 0.0, %v2064
    %2066 = vdwg.mxu0
    %v2067 = vadd.f32 %v458, %v2063
    %v2068 = vadd.f32 %v460, %v2065
    %v2069 = vxor.u32 %v2067, 2147483648
    %v2070 = vmul.f32 %v2069, 1.442695
    %v2071 = vpow.pop %v2070
    %v2072 = vadd.f32 %v2071, 1.0
    %v2073 = vrcp.pop %v2072
    %v2074 = vmul.f32 1.0, %v2073
    %v2075 = vtanh.pop %v2068
    %v2076 = vxor.u32 %v2068, 2147483648
    %v2077 = vmul.f32 %v2076, 1.442695
    %v2078 = vpow.pop %v2077
    %v2079 = vadd.f32 %v2078, 1.0
    %v2080 = vrcp.pop %v2079
    %v2081 = vmul.f32 1.0, %v2080
    %v2082 = vmul.f32 %v2074, %v1985
    %v2083 = vmul.f32 %v2074, %v2075
    %2085 = vrot.lane.b32.xlu0 %v2083, 64
    %v2086 = vpop.permute.xlu0 %2085
    %v2088 = vadd.f32 %v2082, %v2086
    %v2089 = vtanh.pop %v2088
    %v2090 = vmul.f32 %v2081, %v2089
    %2092 = vrot.lane.b32.xlu0 %v2090, 64
    %v2093 = vpop.permute.xlu0 %2092
    %v2095 = vsel %vm157, %v2093, %v2088
    %2096 = vst [vmem:[#allocation3 + $0x30] sm:$0xff] %v2095
    %v2097 = vsel %vm157, %v2093, 0
    %2099 = vmatprep.subr.mxu0 %v106
    %2100 = vmatpush1.msra.mxu0 %v105
    %2101 = vmatprep.subr.mxu0 %v108
    %2102 = vmatpush1.msra.mxu0 %v107
    %2103 = vmatprep.subr.mxu0 %v110
    %2104 = vmatpush1.msra.mxu0 %v109
    %2105 = vmatprep.subr.mxu0 %v112
    %2106 = vmatpush1.msra.mxu0 %v111
    %2107 = vmatprep.subr.mxu0 %v114
    %2108 = vmatpush1.msra.mxu0 %v113
    %2109 = vmatprep.subr.mxu0 %v116
    %2110 = vmatpush1.msra.mxu0 %v115
    %2111 = vmatprep.subr.mxu0 %v118
    %2112 = vmatpush1.msra.mxu0 %v117
    %2113 = vmatprep.subr.mxu0 %v120
    %2114 = vmatpush1.msra.mxu0 %v119
    %2115 = vmatprep.subr.mxu0 0.0
    %2116 = vmatpush1.msra.mxu0 0.0
    %2117 = vmatprep.subr.mxu0 0.0
    %2118 = vmatpush1.msra.mxu0 0.0
    %2119 = vmatprep.subr.mxu0 0.0
    %2120 = vmatpush1.msra.mxu0 0.0
    %2121 = vmatprep.subr.mxu0 0.0
    %2122 = vmatpush1.msra.mxu0 0.0
    %2123 = vmatprep.subr.mxu0 0.0
    %2124 = vmatpush1.msra.mxu0 0.0
    %2125 = vmatprep.subr.mxu0 0.0
    %2126 = vmatpush1.msra.mxu0 0.0
    %2127 = vmatprep.subr.mxu0 0.0
    %2128 = vmatpush1.msra.mxu0 0.0
    %2129 = vmatprep.subr.mxu0 0.0
    %2130 = vmatpush1.msra.mxu0 0.0
    %2131 = vmatprep.subr.mxu0 0.0
    %2132 = vmatpush1.msra.mxu0 0.0
    %2133 = vmatprep.subr.mxu0 0.0
    %2134 = vmatpush1.msra.mxu0 0.0
    %2135 = vmatprep.subr.mxu0 0.0
    %2136 = vmatpush1.msra.mxu0 0.0
    %2137 = vmatprep.subr.mxu0 0.0
    %2138 = vmatpush1.msra.mxu0 0.0
    %2139 = vmatprep.subr.mxu0 0.0
    %2140 = vmatpush1.msra.mxu0 0.0
    %2141 = vmatprep.subr.mxu0 0.0
    %2142 = vmatpush1.msra.mxu0 0.0
    %2143 = vmatprep.subr.mxu0 0.0
    %2144 = vmatpush1.msra.mxu0 0.0
    %2145 = vmatprep.subr.mxu0 0.0
    %2146 = vmatpush1.msra.mxu0 0.0
    %2147 = vmatprep.subr.mxu0 0.0
    %2148 = vmatpush1.msra.mxu0 0.0
    %2149 = vmatprep.subr.mxu0 0.0
    %2150 = vmatpush1.msra.mxu0 0.0
    %2151 = vmatprep.subr.mxu0 0.0
    %2152 = vmatpush1.msra.mxu0 0.0
    %2153 = vmatprep.subr.mxu0 0.0
    %2154 = vmatpush1.msra.mxu0 0.0
    %2155 = vmatprep.subr.mxu0 0.0
    %2156 = vmatpush1.msra.mxu0 0.0
    %2157 = vmatprep.subr.mxu0 0.0
    %2158 = vmatpush1.msra.mxu0 0.0
    %2159 = vmatprep.subr.mxu0 0.0
    %2160 = vmatpush1.msra.mxu0 0.0
    %2161 = vmatprep.subr.mxu0 0.0
    %2162 = vmatpush1.msra.mxu0 0.0
    %2163 = vmatprep.mubr.f32.mxu0 0.0
    %2164 = vmatmul.mubr.f32.gmra.mrb[0].mxu0 %v2097
    %v2165 = vpop.f32.mrb[0].mxu0
    %v2166 = vadd.f32 0.0, %v2165
    %v2167 = vpop.f32.mrb[0].mxu0
    %v2168 = vadd.f32 0.0, %v2167
    %2169 = vdwg.mxu0
    %v2170 = vadd.f32 %v464, %v2166
    %v2171 = vadd.f32 %v466, %v2168
    %v2172 = vxor.u32 %v2170, 2147483648
    %v2173 = vmul.f32 %v2172, 1.442695
    %v2174 = vpow.pop %v2173
    %v2175 = vadd.f32 %v2174, 1.0
    %v2176 = vrcp.pop %v2175
    %v2177 = vmul.f32 1.0, %v2176
    %v2178 = vtanh.pop %v2171
    %v2179 = vxor.u32 %v2171, 2147483648
    %v2180 = vmul.f32 %v2179, 1.442695
    %v2181 = vpow.pop %v2180
    %v2182 = vadd.f32 %v2181, 1.0
    %v2183 = vrcp.pop %v2182
    %v2184 = vmul.f32 1.0, %v2183
    %v2185 = vmul.f32 %v2177, %v2088
    %v2186 = vmul.f32 %v2177, %v2178
    %2188 = vrot.lane.b32.xlu0 %v2186, 64
    %v2189 = vpop.permute.xlu0 %2188
    %v2191 = vadd.f32 %v2185, %v2189
    %v2192 = vtanh.pop %v2191
    %v2193 = vmul.f32 %v2184, %v2192
    %2195 = vrot.lane.b32.xlu0 %v2193, 64
    %v2196 = vpop.permute.xlu0 %2195
    %v2198 = vsel %vm157, %v2196, %v2191
    %2199 = vst [vmem:[#allocation3 + $0x38] sm:$0xff] %v2198
    %v2200 = vld [vmem:[%s12] sm:$0xff]
    %v2201 = vld [vmem:[#allocation3] sm:$0xff]
    %v2202 = vld [vmem:[#allocation3 + $0x8] sm:$0xff]
    %v2203 = vld [vmem:[#allocation3 + $0x10] sm:$0xff]
    %v2204 = vld [vmem:[#allocation3 + $0x18] sm:$0xff]
    %v2205 = vld [vmem:[#allocation3 + $0x20] sm:$0xff]
    %v2206 = vld [vmem:[#allocation3 + $0x28] sm:$0xff]
    %v2207 = vld [vmem:[#allocation3 + $0x30] sm:$0xff]
    %v2208 = vld [vmem:[#allocation3 + $0x38] sm:$0xff]
    %v2210 = vsel %vm157, %v2200, 0
    %2212 = vmatprep.subr.mxu0 0.0
    %2213 = vmatpush1.msra.mxu0 %v2201
    %2214 = vmatprep.subr.mxu0 0.0
    %2215 = vmatpush1.msra.mxu0 %v2202
    %2216 = vmatprep.subr.mxu0 0.0
    %2217 = vmatpush1.msra.mxu0 %v2203
    %2218 = vmatprep.subr.mxu0 0.0
    %2219 = vmatpush1.msra.mxu0 %v2204
    %2220 = vmatprep.subr.mxu0 0.0
    %2221 = vmatpush1.msra.mxu0 %v2205
    %2222 = vmatprep.subr.mxu0 0.0
    %2223 = vmatpush1.msra.mxu0 %v2206
    %2224 = vmatprep.subr.mxu0 0.0
    %2225 = vmatpush1.msra.mxu0 %v2207
    %2226 = vmatprep.subr.mxu0 0.0
    %2227 = vmatpush1.msra.mxu0 %v2208
    %2228 = vmatprep.subr.mxu0 0.0
    %2229 = vmatpush1.msra.mxu0 0.0
    %2230 = vmatprep.subr.mxu0 0.0
    %2231 = vmatpush1.msra.mxu0 0.0
    %2232 = vmatprep.subr.mxu0 0.0
    %2233 = vmatpush1.msra.mxu0 0.0
    %2234 = vmatprep.subr.mxu0 0.0
    %2235 = vmatpush1.msra.mxu0 0.0
    %2236 = vmatprep.subr.mxu0 0.0
    %2237 = vmatpush1.msra.mxu0 0.0
    %2238 = vmatprep.subr.mxu0 0.0
    %2239 = vmatpush1.msra.mxu0 0.0
    %2240 = vmatprep.subr.mxu0 0.0
    %2241 = vmatpush1.msra.mxu0 0.0
    %2242 = vmatprep.subr.mxu0 0.0
    %2243 = vmatpush1.msra.mxu0 0.0
    %2244 = vmatprep.subr.mxu0 0.0
    %2245 = vmatpush1.msra.mxu0 0.0
    %2246 = vmatprep.subr.mxu0 0.0
    %2247 = vmatpush1.msra.mxu0 0.0
    %2248 = vmatprep.subr.mxu0 0.0
    %2249 = vmatpush1.msra.mxu0 0.0
    %2250 = vmatprep.subr.mxu0 0.0
    %2251 = vmatpush1.msra.mxu0 0.0
    %2252 = vmatprep.subr.mxu0 0.0
    %2253 = vmatpush1.msra.mxu0 0.0
    %2254 = vmatprep.subr.mxu0 0.0
    %2255 = vmatpush1.msra.mxu0 0.0
    %2256 = vmatprep.subr.mxu0 0.0
    %2257 = vmatpush1.msra.mxu0 0.0
    %2258 = vmatprep.subr.mxu0 0.0
    %2259 = vmatpush1.msra.mxu0 0.0
    %2260 = vmatprep.subr.mxu0 0.0
    %2261 = vmatpush1.msra.mxu0 0.0
    %2262 = vmatprep.subr.mxu0 0.0
    %2263 = vmatpush1.msra.mxu0 0.0
    %2264 = vmatprep.subr.mxu0 0.0
    %2265 = vmatpush1.msra.mxu0 0.0
    %2266 = vmatprep.subr.mxu0 0.0
    %2267 = vmatpush1.msra.mxu0 0.0
    %2268 = vmatprep.subr.mxu0 0.0
    %2269 = vmatpush1.msra.mxu0 0.0
    %2270 = vmatprep.subr.mxu0 0.0
    %2271 = vmatpush1.msra.mxu0 0.0
    %2272 = vmatprep.subr.mxu0 0.0
    %2273 = vmatpush1.msra.mxu0 0.0
    %2274 = vmatprep.subr.mxu0 0.0
    %2275 = vmatpush1.msra.mxu0 0.0
    %2276 = vmatprep.mubr.f32.mxu0 0.0
    %2277 = vmatmul.mubr.f32.gmra.mrb[0].mxu0 %v2210
    %v2278 = vpop.f32.mrb[0].mxu0
    %v2279 = vadd.f32 0.0, %v2278
    %v2280 = vpop.f32.mrb[0].mxu0
    %2281 = vdwg.mxu0
    %2283 = vrot.lane.b32.xlu0 %v2279, 64
    %v2284 = vpop.permute.xlu0 %2283
    %v2286 = vsel %vm157, %v1293, %v2284
    %v2287 = vsel %vm157, %v1294, %v2284
    %v2288 = vsel %vm157, %v1295, %v2284
    %v2289 = vsel %vm157, %v1296, %v2284
    %v2290 = vsel %vm157, %v1297, %v2284
    %v2291 = vsel %vm157, %v1298, %v2284
    %v2292 = vsel %vm157, %v1299, %v2284
    %v2293 = vsel %vm157, %v1300, %v2284
    %v2294 = vld [vmem:[%s8] sm:$0xff]
    %v2295 = vld [vmem:[%s8 + $0x8] sm:$0xff]
    %v2296 = vld [vmem:[%s8 + $0x10] sm:$0xff]
    %v2297 = vld [vmem:[%s8 + $0x18] sm:$0xff]
    %v2298 = vld [vmem:[%s8 + $0x20] sm:$0xff]
    %v2299 = vld [vmem:[%s8 + $0x28] sm:$0xff]
    %v2300 = vld [vmem:[%s8 + $0x30] sm:$0xff]
    %v2301 = vld [vmem:[%s8 + $0x38] sm:$0xff]
    %v2302 = vld [vmem:[%s8 + $0x40] sm:$0xff]
    %v2303 = vld [vmem:[%s8 + $0x48] sm:$0xff]
    %v2304 = vld [vmem:[%s8 + $0x50] sm:$0xff]
    %v2305 = vld [vmem:[%s8 + $0x58] sm:$0xff]
    %v2306 = vld [vmem:[%s8 + $0x60] sm:$0xff]
    %v2307 = vld [vmem:[%s8 + $0x68] sm:$0xff]
    %v2308 = vld [vmem:[%s8 + $0x70] sm:$0xff]
    %v2309 = vld [vmem:[%s8 + $0x78] sm:$0xff]
    %2310 = vmatprep.subr.mxu0 0.0
    %2311 = vmatpush1.msra.mxu0 %v2294
    %2312 = vmatprep.subr.mxu0 0.0
    %2313 = vmatpush1.msra.mxu0 %v2295
    %2314 = vmatprep.subr.mxu0 0.0
    %2315 = vmatpush1.msra.mxu0 %v2296
    %2316 = vmatprep.subr.mxu0 0.0
    %2317 = vmatpush1.msra.mxu0 %v2297
    %2318 = vmatprep.subr.mxu0 0.0
    %2319 = vmatpush1.msra.mxu0 %v2298
    %2320 = vmatprep.subr.mxu0 0.0
    %2321 = vmatpush1.msra.mxu0 %v2299
    %2322 = vmatprep.subr.mxu0 0.0
    %2323 = vmatpush1.msra.mxu0 %v2300
    %2324 = vmatprep.subr.mxu0 0.0
    %2325 = vmatpush1.msra.mxu0 %v2301
    %2326 = vmatprep.subr.mxu0 0.0
    %2327 = vmatpush1.msra.mxu0 %v2302
    %2328 = vmatprep.subr.mxu0 0.0
    %2329 = vmatpush1.msra.mxu0 %v2303
    %2330 = vmatprep.subr.mxu0 0.0
    %2331 = vmatpush1.msra.mxu0 %v2304
    %2332 = vmatprep.subr.mxu0 0.0
    %2333 = vmatpush1.msra.mxu0 %v2305
    %2334 = vmatprep.subr.mxu0 0.0
    %2335 = vmatpush1.msra.mxu0 %v2306
    %2336 = vmatprep.subr.mxu0 0.0
    %2337 = vmatpush1.msra.mxu0 %v2307
    %2338 = vmatprep.subr.mxu0 0.0
    %2339 = vmatpush1.msra.mxu0 %v2308
    %2340 = vmatprep.subr.mxu0 0.0
    %2341 = vmatpush1.msra.mxu0 %v2309
    %2342 = vmatprep.subr.mxu0 0.0
    %2343 = vmatpush1.msra.mxu0 0.0
    %2344 = vmatprep.subr.mxu0 0.0
    %2345 = vmatpush1.msra.mxu0 0.0
    %2346 = vmatprep.subr.mxu0 0.0
    %2347 = vmatpush1.msra.mxu0 0.0
    %2348 = vmatprep.subr.mxu0 0.0
    %2349 = vmatpush1.msra.mxu0 0.0
    %2350 = vmatprep.subr.mxu0 0.0
    %2351 = vmatpush1.msra.mxu0 0.0
    %2352 = vmatprep.subr.mxu0 0.0
    %2353 = vmatpush1.msra.mxu0 0.0
    %2354 = vmatprep.subr.mxu0 0.0
    %2355 = vmatpush1.msra.mxu0 0.0
    %2356 = vmatprep.subr.mxu0 0.0
    %2357 = vmatpush1.msra.mxu0 0.0
    %2358 = vmatprep.subr.mxu0 0.0
    %2359 = vmatpush1.msra.mxu0 0.0
    %2360 = vmatprep.subr.mxu0 0.0
    %2361 = vmatpush1.msra.mxu0 0.0
    %2362 = vmatprep.subr.mxu0 0.0
    %2363 = vmatpush1.msra.mxu0 0.0
    %2364 = vmatprep.subr.mxu0 0.0
    %2365 = vmatpush1.msra.mxu0 0.0
    %2366 = vmatprep.subr.mxu0 0.0
    %2367 = vmatpush1.msra.mxu0 0.0
    %2368 = vmatprep.subr.mxu0 0.0
    %2369 = vmatpush1.msra.mxu0 0.0
    %2370 = vmatprep.subr.mxu0 0.0
    %2371 = vmatpush1.msra.mxu0 0.0
    %2372 = vmatprep.subr.mxu0 0.0
    %2373 = vmatpush1.msra.mxu0 0.0
    %2374 = vmatprep.mubr.f32.mxu0 0.0
    %2375 = vmatmul.mubr.f32.gmra.mrb[0].mxu0 %v2286
    %v2376 = vpop.f32.mrb[0].mxu0
    %v2377 = vadd.f32 0.0, %v2376
    %v2378 = vpop.f32.mrb[0].mxu0
    %2379 = vmatprep.mubr.f32.mxu0 0.0
    %2380 = vmatmul.mubr.f32.gmra.mrb[0].mxu0 %v2287
    %v2381 = vpop.f32.mrb[0].mxu0
    %v2382 = vadd.f32 0.0, %v2381
    %v2383 = vpop.f32.mrb[0].mxu0
    %2384 = vmatprep.mubr.f32.mxu0 0.0
    %2385 = vmatmul.mubr.f32.gmra.mrb[0].mxu0 %v2288
    %v2386 = vpop.f32.mrb[0].mxu0
    %v2387 = vadd.f32 0.0, %v2386
    %v2388 = vpop.f32.mrb[0].mxu0
    %2389 = vmatprep.mubr.f32.mxu0 0.0
    %2390 = vmatmul.mubr.f32.gmra.mrb[0].mxu0 %v2289
    %v2391 = vpop.f32.mrb[0].mxu0
    %v2392 = vadd.f32 0.0, %v2391
    %v2393 = vpop.f32.mrb[0].mxu0
    %2394 = vmatprep.mubr.f32.mxu0 0.0
    %2395 = vmatmul.mubr.f32.gmra.mrb[0].mxu0 %v2290
    %v2396 = vpop.f32.mrb[0].mxu0
    %v2397 = vadd.f32 0.0, %v2396
    %v2398 = vpop.f32.mrb[0].mxu0
    %2399 = vmatprep.mubr.f32.mxu0 0.0
    %2400 = vmatmul.mubr.f32.gmra.mrb[0].mxu0 %v2291
    %v2401 = vpop.f32.mrb[0].mxu0
    %v2402 = vadd.f32 0.0, %v2401
    %v2403 = vpop.f32.mrb[0].mxu0
    %2404 = vmatprep.mubr.f32.mxu0 0.0
    %2405 = vmatmul.mubr.f32.gmra.mrb[0].mxu0 %v2292
    %v2406 = vpop.f32.mrb[0].mxu0
    %v2407 = vadd.f32 0.0, %v2406
    %v2408 = vpop.f32.mrb[0].mxu0
    %2409 = vmatprep.mubr.f32.mxu0 0.0
    %2410 = vmatmul.mubr.f32.gmra.mrb[0].mxu0 %v2293
    %v2411 = vpop.f32.mrb[0].mxu0
    %v2412 = vadd.f32 0.0, %v2411
    %v2413 = vpop.f32.mrb[0].mxu0
    %2414 = vdwg.mxu0
    %v2415 = vtanh.pop %v2377
    %v2416 = vtanh.pop %v2382
    %v2417 = vtanh.pop %v2387
    %v2418 = vtanh.pop %v2392
    %v2419 = vtanh.pop %v2397
    %v2420 = vtanh.pop %v2402
    %v2421 = vtanh.pop %v2407
    %v2422 = vtanh.pop %v2412
    %v2423 = vld [vmem:[%s9] sm:$0x1]
    %v2425 = vsel %vm157, %v2423, 0
    %v2428 = vsel %vm157, %v2415, 0
    %v2431 = vsel %vm157, %v2416, 0
    %v2434 = vsel %vm157, %v2417, 0
    %v2437 = vsel %vm157, %v2418, 0
    %v2440 = vsel %vm157, %v2419, 0
    %v2443 = vsel %vm157, %v2420, 0
    %v2446 = vsel %vm157, %v2421, 0
    %v2449 = vsel %vm157, %v2422, 0
    %2451 = vmatprep.subr.mxu0 0.0
    %2452 = vmatpush1.xpose.msra.mxu0 %v2428
    %2453 = vmatprep.subr.mxu0 0.0
    %2454 = vmatpush1.xpose.msra.mxu0 %v2431
    %2455 = vmatprep.subr.mxu0 0.0
    %2456 = vmatpush1.xpose.msra.mxu0 %v2434
    %2457 = vmatprep.subr.mxu0 0.0
    %2458 = vmatpush1.xpose.msra.mxu0 %v2437
    %2459 = vmatprep.subr.mxu0 0.0
    %2460 = vmatpush1.xpose.msra.mxu0 %v2440
    %2461 = vmatprep.subr.mxu0 0.0
    %2462 = vmatpush1.xpose.msra.mxu0 %v2443
    %2463 = vmatprep.subr.mxu0 0.0
    %2464 = vmatpush1.xpose.msra.mxu0 %v2446
    %2465 = vmatprep.subr.mxu0 0.0
    %2466 = vmatpush1.xpose.msra.mxu0 %v2449
    %2467 = vmatprep.subr.mxu0 0.0
    %2468 = vmatpush1.xpose.msra.mxu0 0.0
    %2469 = vmatprep.subr.mxu0 0.0
    %2470 = vmatpush1.xpose.msra.mxu0 0.0
    %2471 = vmatprep.subr.mxu0 0.0
    %2472 = vmatpush1.xpose.msra.mxu0 0.0
    %2473 = vmatprep.subr.mxu0 0.0
    %2474 = vmatpush1.xpose.msra.mxu0 0.0
    %2475 = vmatprep.subr.mxu0 0.0
    %2476 = vmatpush1.xpose.msra.mxu0 0.0
    %2477 = vmatprep.subr.mxu0 0.0
    %2478 = vmatpush1.xpose.msra.mxu0 0.0
    %2479 = vmatprep.subr.mxu0 0.0
    %2480 = vmatpush1.xpose.msra.mxu0 0.0
    %2481 = vmatprep.subr.mxu0 0.0
    %2482 = vmatpush1.xpose.msra.mxu0 0.0
    %2483 = vmatprep.subr.mxu0 0.0
    %2484 = vmatpush1.xpose.msra.mxu0 0.0
    %2485 = vmatprep.subr.mxu0 0.0
    %2486 = vmatpush1.xpose.msra.mxu0 0.0
    %2487 = vmatprep.subr.mxu0 0.0
    %2488 = vmatpush1.xpose.msra.mxu0 0.0
    %2489 = vmatprep.subr.mxu0 0.0
    %2490 = vmatpush1.xpose.msra.mxu0 0.0
    %2491 = vmatprep.subr.mxu0 0.0
    %2492 = vmatpush1.xpose.msra.mxu0 0.0
    %2493 = vmatprep.subr.mxu0 0.0
    %2494 = vmatpush1.xpose.msra.mxu0 0.0
    %2495 = vmatprep.subr.mxu0 0.0
    %2496 = vmatpush1.xpose.msra.mxu0 0.0
    %2497 = vmatprep.subr.mxu0 0.0
    %2498 = vmatpush1.xpose.msra.mxu0 0.0
    %2499 = vmatprep.subr.mxu0 0.0
    %2500 = vmatpush1.xpose.msra.mxu0 0.0
    %2501 = vmatprep.subr.mxu0 0.0
    %2502 = vmatpush1.xpose.msra.mxu0 0.0
    %2503 = vmatprep.subr.mxu0 0.0
    %2504 = vmatpush1.xpose.msra.mxu0 0.0
    %2505 = vmatprep.subr.mxu0 0.0
    %2506 = vmatpush1.xpose.msra.mxu0 0.0
    %2507 = vmatprep.subr.mxu0 0.0
    %2508 = vmatpush1.xpose.msra.mxu0 0.0
    %2509 = vmatprep.subr.mxu0 0.0
    %2510 = vmatpush1.xpose.msra.mxu0 0.0
    %2511 = vmatprep.subr.mxu0 0.0
    %2512 = vmatpush1.xpose.msra.mxu0 0.0
    %2513 = vmatprep.subr.mxu0 0.0
    %2514 = vmatpush1.xpose.msra.mxu0 0.0
    %2515 = vmatprep.mubr.f32.mxu0 0.0
    %2516 = vmatmul.mubr.f32.gmra.mrb[0].mxu0 %v2425
    %v2517 = vpop.f32.mrb[0].mxu0
    %v2518 = vadd.f32 0.0, %v2517
    %v2519 = vpop.f32.mrb[0].mxu0
    %2520 = vdwg.mxu0
    %v2521 = vld [vmem:[%s13] sm:$0xff]
    %v2522 = vlaneseq
    %v2523 = vshrl.u32 %v2522, 7
    %v2524 = vsub.s32 0, %v2523
    %v2525 = vrot.slane %v2518, %v2524
    %v2526 = vmul.f32 %v2521, %v2525
    %v2527 = vsub.f32 1.0, %v2521
    %v2528 = vmul.f32 %v2527, 1e+12
    %v2529 = vsub.f32 %v2526, %v2528
    %v2530 = vsel %vm157, %v2529, -inf
    %2531 = vmax.xlane.f32.xlu0 %v2530
    %v2532 = vpop.xlane.xlu0 %2531
    %v2533 = vsub.f32 %v2529, %v2532
    %v2534 = vmul.f32 %v2533, 1.442695
    %v2535 = vpow.pop %v2534
    %v2536 = vsel %vm157, %v2535, 0.0
    %2537 = vadd.xlane.f32.xlu0 %v2536
    %v2538 = vpop.xlane.xlu0 %2537
    %v2539 = vrcp.pop %v2538
    %v2540 = vmul.f32 %v2535, %v2539
    %v2542 = vsel %vm157, %v2540, 0
    %2544 = vmatprep.subr.mxu0 0.0
    %2545 = vmatpush1.msra.mxu0 %v1293
    %2546 = vmatprep.subr.mxu0 0.0
    %2547 = vmatpush1.msra.mxu0 %v1294
    %2548 = vmatprep.subr.mxu0 0.0
    %2549 = vmatpush1.msra.mxu0 %v1295
    %2550 = vmatprep.subr.mxu0 0.0
    %2551 = vmatpush1.msra.mxu0 %v1296
    %2552 = vmatprep.subr.mxu0 0.0
    %2553 = vmatpush1.msra.mxu0 %v1297
    %2554 = vmatprep.subr.mxu0 0.0
    %2555 = vmatpush1.msra.mxu0 %v1298
    %2556 = vmatprep.subr.mxu0 0.0
    %2557 = vmatpush1.msra.mxu0 %v1299
    %2558 = vmatprep.subr.mxu0 0.0
    %2559 = vmatpush1.msra.mxu0 %v1300
    %2560 = vmatprep.subr.mxu0 0.0
    %2561 = vmatpush1.msra.mxu0 0.0
    %2562 = vmatprep.subr.mxu0 0.0
    %2563 = vmatpush1.msra.mxu0 0.0
    %2564 = vmatprep.subr.mxu0 0.0
    %2565 = vmatpush1.msra.mxu0 0.0
    %2566 = vmatprep.subr.mxu0 0.0
    %2567 = vmatpush1.msra.mxu0 0.0
    %2568 = vmatprep.subr.mxu0 0.0
    %2569 = vmatpush1.msra.mxu0 0.0
    %2570 = vmatprep.subr.mxu0 0.0
    %2571 = vmatpush1.msra.mxu0 0.0
    %2572 = vmatprep.subr.mxu0 0.0
    %2573 = vmatpush1.msra.mxu0 0.0
    %2574 = vmatprep.subr.mxu0 0.0
    %2575 = vmatpush1.msra.mxu0 0.0
    %2576 = vmatprep.subr.mxu0 0.0
    %2577 = vmatpush1.msra.mxu0 0.0
    %2578 = vmatprep.subr.mxu0 0.0
    %2579 = vmatpush1.msra.mxu0 0.0
    %2580 = vmatprep.subr.mxu0 0.0
    %2581 = vmatpush1.msra.mxu0 0.0
    %2582 = vmatprep.subr.mxu0 0.0
    %2583 = vmatpush1.msra.mxu0 0.0
    %2584 = vmatprep.subr.mxu0 0.0
    %2585 = vmatpush1.msra.mxu0 0.0
    %2586 = vmatprep.subr.mxu0 0.0
    %2587 = vmatpush1.msra.mxu0 0.0
    %2588 = vmatprep.subr.mxu0 0.0
    %2589 = vmatpush1.msra.mxu0 0.0
    %2590 = vmatprep.subr.mxu0 0.0
    %2591 = vmatpush1.msra.mxu0 0.0
    %2592 = vmatprep.subr.mxu0 0.0
    %2593 = vmatpush1.msra.mxu0 0.0
    %2594 = vmatprep.subr.mxu0 0.0
    %2595 = vmatpush1.msra.mxu0 0.0
    %2596 = vmatprep.subr.mxu0 0.0
    %2597 = vmatpush1.msra.mxu0 0.0
    %2598 = vmatprep.subr.mxu0 0.0
    %2599 = vmatpush1.msra.mxu0 0.0
    %2600 = vmatprep.subr.mxu0 0.0
    %2601 = vmatpush1.msra.mxu0 0.0
    %2602 = vmatprep.subr.mxu0 0.0
    %2603 = vmatpush1.msra.mxu0 0.0
    %2604 = vmatprep.subr.mxu0 0.0
    %2605 = vmatpush1.msra.mxu0 0.0
    %2606 = vmatprep.subr.mxu0 0.0
    %2607 = vmatpush1.msra.mxu0 0.0
    %2608 = vmatprep.mubr.f32.mxu0 0.0
    %2609 = vmatmul.mubr.f32.gmra.mrb[0].mxu0 %v2542
    %v2610 = vpop.f32.mrb[0].mxu0
    %v2611 = vadd.f32 0.0, %v2610
    %v2612 = vpop.f32.mrb[0].mxu0
    %2613 = vdwg.mxu0
    %v2614 = vsel %vm157, %v2611, %v2284
    %v2615 = vld [vmem:[%s10] sm:$0xff]
    %v2616 = vld [vmem:[%s10 + $0x8] sm:$0xff]
    %v2617 = vld [vmem:[%s10 + $0x10] sm:$0xff]
    %v2618 = vld [vmem:[%s10 + $0x18] sm:$0xff]
    %v2619 = vld [vmem:[%s10 + $0x20] sm:$0xff]
    %v2620 = vld [vmem:[%s10 + $0x28] sm:$0xff]
    %v2621 = vld [vmem:[%s10 + $0x30] sm:$0xff]
    %v2622 = vld [vmem:[%s10 + $0x38] sm:$0xff]
    %v2623 = vld [vmem:[%s10 + $0x40] sm:$0xff]
    %v2624 = vld [vmem:[%s10 + $0x48] sm:$0xff]
    %v2625 = vld [vmem:[%s10 + $0x50] sm:$0xff]
    %v2626 = vld [vmem:[%s10 + $0x58] sm:$0xff]
    %v2627 = vld [vmem:[%s10 + $0x60] sm:$0xff]
    %v2628 = vld [vmem:[%s10 + $0x68] sm:$0xff]
    %v2629 = vld [vmem:[%s10 + $0x70] sm:$0xff]
    %v2630 = vld [vmem:[%s10 + $0x78] sm:$0xff]
    %2631 = vmatprep.subr.mxu0 0.0
    %2632 = vmatpush1.msra.mxu0 %v2615
    %2633 = vmatprep.subr.mxu0 0.0
    %2634 = vmatpush1.msra.mxu0 %v2616
    %2635 = vmatprep.subr.mxu0 0.0
    %2636 = vmatpush1.msra.mxu0 %v2617
    %2637 = vmatprep.subr.mxu0 0.0
    %2638 = vmatpush1.msra.mxu0 %v2618
    %2639 = vmatprep.subr.mxu0 0.0
    %2640 = vmatpush1.msra.mxu0 %v2619
    %2641 = vmatprep.subr.mxu0 0.0
    %2642 = vmatpush1.msra.mxu0 %v2620
    %2643 = vmatprep.subr.mxu0 0.0
    %2644 = vmatpush1.msra.mxu0 %v2621
    %2645 = vmatprep.subr.mxu0 0.0
    %2646 = vmatpush1.msra.mxu0 %v2622
    %2647 = vmatprep.subr.mxu0 0.0
    %2648 = vmatpush1.msra.mxu0 %v2623
    %2649 = vmatprep.subr.mxu0 0.0
    %2650 = vmatpush1.msra.mxu0 %v2624
    %2651 = vmatprep.subr.mxu0 0.0
    %2652 = vmatpush1.msra.mxu0 %v2625
    %2653 = vmatprep.subr.mxu0 0.0
    %2654 = vmatpush1.msra.mxu0 %v2626
    %2655 = vmatprep.subr.mxu0 0.0
    %2656 = vmatpush1.msra.mxu0 %v2627
    %2657 = vmatprep.subr.mxu0 0.0
    %2658 = vmatpush1.msra.mxu0 %v2628
    %2659 = vmatprep.subr.mxu0 0.0
    %2660 = vmatpush1.msra.mxu0 %v2629
    %2661 = vmatprep.subr.mxu0 0.0
    %2662 = vmatpush1.msra.mxu0 %v2630
    %2663 = vmatprep.subr.mxu0 0.0
    %2664 = vmatpush1.msra.mxu0 0.0
    %2665 = vmatprep.subr.mxu0 0.0
    %2666 = vmatpush1.msra.mxu0 0.0
    %2667 = vmatprep.subr.mxu0 0.0
    %2668 = vmatpush1.msra.mxu0 0.0
    %2669 = vmatprep.subr.mxu0 0.0
    %2670 = vmatpush1.msra.mxu0 0.0
    %2671 = vmatprep.subr.mxu0 0.0
    %2672 = vmatpush1.msra.mxu0 0.0
    %2673 = vmatprep.subr.mxu0 0.0
    %2674 = vmatpush1.msra.mxu0 0.0
    %2675 = vmatprep.subr.mxu0 0.0
    %2676 = vmatpush1.msra.mxu0 0.0
    %2677 = vmatprep.subr.mxu0 0.0
    %2678 = vmatpush1.msra.mxu0 0.0
    %2679 = vmatprep.subr.mxu0 0.0
    %2680 = vmatpush1.msra.mxu0 0.0
    %2681 = vmatprep.subr.mxu0 0.0
    %2682 = vmatpush1.msra.mxu0 0.0
    %2683 = vmatprep.subr.mxu0 0.0
    %2684 = vmatpush1.msra.mxu0 0.0
    %2685 = vmatprep.subr.mxu0 0.0
    %2686 = vmatpush1.msra.mxu0 0.0
    %2687 = vmatprep.subr.mxu0 0.0
    %2688 = vmatpush1.msra.mxu0 0.0
    %2689 = vmatprep.subr.mxu0 0.0
    %2690 = vmatpush1.msra.mxu0 0.0
    %2691 = vmatprep.subr.mxu0 0.0
    %2692 = vmatpush1.msra.mxu0 0.0
    %2693 = vmatprep.subr.mxu0 0.0
    %2694 = vmatpush1.msra.mxu0 0.0
    %2695 = vmatprep.mubr.f32.mxu0 0.0
    %2696 = vmatmul.mubr.f32.gmra.mrb[0].mxu0 %v2614
    %v2697 = vpop.f32.mrb[0].mxu0
    %v2698 = vadd.f32 0.0, %v2697
    %v2699 = vpop.f32.mrb[0].mxu0
    %2700 = vdwg.mxu0
    %v2701 = vtanh.pop %v2698
    %2702 = vst.msk [vmem:[#allocation10] sm:$0xff] %vm157, %v2701
    // Predicated region
    $region70: #{tpu_custom_call.1} parent=1 // pred_check
      _
    $region71: #{tpu_custom_call.1} parent=1 // pred_check_branch
      %2704 = sbr.rel (0) target = $region73
    $region72: #{tpu_custom_call.1} parent=1 // pred_region
      %s2706 = ssub.s32 128, 128
      %2707 = vsyncadd [#allocation6], %s2706
      %s2709 = sshll.u32 [#allocation10], 4
      %s2710 = int_to_ptr.vmem [resolvable:$true] %s2709
      %2712 = dma.vmem_to_hbm [thread:$0]  %s2710, 128, %s14, [#allocation6]
    $region73: #{tpu_custom_call.1} parent=1 // pred_fallthru
      _
    // Predicated region
    $region74: #{tpu_custom_call.1} parent=1 // pred_check
      _
    $region75: #{tpu_custom_call.1} parent=1 // pred_check_branch
      %2714 = sbr.rel (0) target = $region77
    $region76: #{tpu_custom_call.1} parent=1 // pred_region
      %2715 = dma.done [#allocation6], 128
    $region77: #{tpu_custom_call.1} parent=1 // pred_fallthru
      _
    %2716 = vsyncpa [#allocation5], 1
    %2717 = vsyncpa [#allocation8], 1
    %2718 = vsyncpa [#allocation6], 1

</llo_original>
